<compile_context>
chip_gen: v7x
topology: tpu7x:2x2x1
jax: 0.10.0
libtpu: 0.0.40
codegen_flags: <defaults>
</compile_context>

<pallas_src>
import functools

import jax
import jax.numpy as jnp
from jax import lax
from jax.experimental import pallas as pl
from jax.experimental.pallas import tpu as pltpu


def lstm_ae_kernel(
    # inputs
    x_ref,                                   # (T*B, D)  bf16, time-major rows
    ewih0, ewhh0, eb0,                       # encoder layer 0 (bf16, bf16, f32)
    ew1, eb1,                                # encoder layer 1 fused [Wih1;Whh1]
    dwih0, dwhh0, db0,                       # decoder layer 0
    dw1, db1,                                # decoder layer 1 fused
    wout, bout,                              # output linear (H, D) bf16, (1, D) f32
    # outputs
    out_ref,                                 # (T*B, D)  f32
    # scratch
    xg_scr,                                  # (T*B, 4H) f32 encoder L0 input gates
    hdec_scr,                                # (T*B, H)  f32 decoder top hiddens
    *, T, B, H,
):
    f32 = jnp.float32
    bf16 = jnp.bfloat16

    # ---- Hoist loop-invariant weight reads / bias broadcasts -----------------
    ewhh0_v = ewhh0[...]
    ew1_v = ew1[...]
    dwhh0_v = dwhh0[...]
    dw1_v = dw1[...]
    eb1_b = jnp.broadcast_to(eb1[...], (B, 4 * H))
    db1_b = jnp.broadcast_to(db1[...], (B, 4 * H))

    # ---- Encoder layer-0 input projection: one big bf16 matmul, off the
    #      serial path (accumulate in f32).
    xg_scr[...] = (jnp.dot(x_ref[...], ewih0[...], preferred_element_type=f32)
                   + eb0[...])

    def cell(gates, c_prev):
        # Full-width nonlinearities on the packed (B, 4H) gates: 2 EUP passes
        # instead of 4, sigmoid expressed as a single tanh. Gate order (i,f,g,o).
        s = 0.5 * jnp.tanh(0.5 * gates) + 0.5          # sigmoid, full width
        tg = jnp.tanh(gates)                           # tanh, full width
        i = s[:, 0 * H:1 * H]
        f = s[:, 1 * H:2 * H]
        g = tg[:, 2 * H:3 * H]
        o = s[:, 3 * H:4 * H]
        c = f * c_prev + i * g                         # f32 state math
        h = o * jnp.tanh(c)
        return h, c

    zeros = jnp.zeros((B, H), f32)

    # Adaptive unroll: keep the 4 (B, H) f32 carries well inside the 256 KiB
    # vreg file so unrolling doesn't flip the recurrence into spill-bound.
    carry_bytes = 4 * B * H * 4
    if T <= 32 and carry_bytes <= 32 * 1024:
        unroll = True
    elif carry_bytes <= 64 * 1024:
        unroll = 4
    else:
        unroll = 2

    # ---- Encoder recurrence: 2 matmuls / step (L0 recurrent + fused L1) ------
    def enc_body(t, carry):
        h0, c0, h1, c1 = carry
        row = pl.multiple_of(t * B, B)
        g0 = (xg_scr[pl.ds(row, B), :]
              + jnp.dot(h0.astype(bf16), ewhh0_v, preferred_element_type=f32))
        h0, c0 = cell(g0, c0)
        h01 = jnp.concatenate([h0, h1], axis=1).astype(bf16)      # (B, 2H)
        g1 = jnp.dot(h01, ew1_v, preferred_element_type=f32) + eb1_b
        h1, c1 = cell(g1, c1)
        return h0, c0, h1, c1

    _, _, hn, _ = lax.fori_loop(0, T, enc_body, (zeros, zeros, zeros, zeros),
                                unroll=unroll)

    # ---- Decoder: input at every step is hn -> its projection is constant ----
    dg0 = (jnp.dot(hn.astype(bf16), dwih0[...], preferred_element_type=f32)
           + jnp.broadcast_to(db0[...], (B, 4 * H)))

    def dec_body(t, carry):
        h0, c0, h1, c1 = carry
        g0 = dg0 + jnp.dot(h0.astype(bf16), dwhh0_v, preferred_element_type=f32)
        h0, c0 = cell(g0, c0)
        h01 = jnp.concatenate([h0, h1], axis=1).astype(bf16)      # (B, 2H)
        g1 = jnp.dot(h01, dw1_v, preferred_element_type=f32) + db1_b
        h1, c1 = cell(g1, c1)
        row = pl.multiple_of(t * B, B)
        hdec_scr[pl.ds(row, B), :] = h1
        return h0, c0, h1, c1

    _ = lax.fori_loop(0, T, dec_body, (zeros, zeros, zeros, zeros),
                      unroll=unroll)

    # ---- Output Linear, batched over all timesteps, single bulk store --------
    out_ref[...] = (jnp.dot(hdec_scr[...].astype(bf16), wout[...],
                            preferred_element_type=f32)
                    + bout[...]).astype(out_ref.dtype)

    # TODO(synk): nn.LSTM inter-layer dropout (p=0.2) is training-only in
    # PyTorch; inference semantics (no dropout) are implemented here.
    # TODO(synk): for very long sequences (xg_scr = T*B*4H*4 bytes), chunk T
    # with a two-pass (encoder/decoder) time grid or manual double-buffered DMA
    # instead of keeping the full-sequence gate scratch VMEM-resident.


def init_params(key, input_dim, hidden_dim):
    """Deterministic PyTorch-style init: U(-1/sqrt(H), 1/sqrt(H)).

    Weights are stored pre-transposed so the kernel computes x @ W directly.
    b_ih and b_hh are folded into a single bias per layer (they always add).
    """
    D, H = input_dim, hidden_dim
    scale = 1.0 / jnp.sqrt(jnp.float32(H))

    def u(k, shape):
        return jax.random.uniform(k, shape, jnp.float32, -scale, scale)

    keys = iter(jax.random.split(key, 64))

    def lstm_layer(in_dim):
        wih = u(next(keys), (in_dim, 4 * H))      # = W_ih^T
        whh = u(next(keys), (H, 4 * H))           # = W_hh^T
        b = u(next(keys), (1, 4 * H)) + u(next(keys), (1, 4 * H))  # b_ih + b_hh
        return wih, whh, b

    params = []
    params += list(lstm_layer(D))   # encoder layer 0
    params += list(lstm_layer(H))   # encoder layer 1
    params += list(lstm_layer(H))   # decoder layer 0
    params += list(lstm_layer(H))   # decoder layer 1
    params.append(u(next(keys), (H, D)))   # output weight (transposed)
    params.append(u(next(keys), (1, D)))   # output bias
    return params


@functools.partial(jax.jit, static_argnames=("hidden_dim",))
def lstm_autoencoder(x, params, *, hidden_dim):
    """x: (B, T, D) batch-first (PyTorch convention). Returns (B, T, D)."""
    B, T, D = x.shape
    H = hidden_dim
    f32, bf16 = jnp.float32, jnp.bfloat16

    (ewih0, ewhh0, eb0,
     ewih1, ewhh1, eb1,
     dwih0, dwhh0, db0,
     dwih1, dwhh1, db1,
     wout, bout) = params

    # Fuse layer-1 input/recurrent weights along the contraction axis and cast
    # all MXU operands to bf16; biases stay f32 (f32 accumulation in kernel).
    ew1 = jnp.concatenate([ewih1, ewhh1], axis=0).astype(bf16)   # (2H, 4H)
    dw1 = jnp.concatenate([dwih1, dwhh1], axis=0).astype(bf16)   # (2H, 4H)
    kparams = (
        ewih0.astype(bf16), ewhh0.astype(bf16), eb0.astype(f32),
        ew1, eb1.astype(f32),
        dwih0.astype(bf16), dwhh0.astype(bf16), db0.astype(f32),
        dw1, db1.astype(f32),
        wout.astype(bf16), bout.astype(f32),
    )

    # Pad batch to 8 sublanes; chunk large batches (<=128 MXU rows per chunk)
    # over a "parallel" grid axis so v7x's two TensorCores split the work.
    Bp = ((B + 7) // 8) * 8
    if Bp > 128:
        Bc = 128
        Bp = ((Bp + Bc - 1) // Bc) * Bc
    else:
        Bc = Bp
    nb = Bp // Bc

    x_tm = jnp.transpose(x, (1, 0, 2)).astype(bf16)              # (T, B, D)
    x_tm = jnp.pad(x_tm, ((0, 0), (0, Bp - B), (0, 0)))          # (T, Bp, D)
    # (nb, T*Bc, D): each batch chunk is a contiguous time-major slab of rows
    x_blk = (x_tm.reshape(T, nb, Bc, D)
             .transpose(1, 0, 2, 3)
             .reshape(nb, T * Bc, D))

    kernel = functools.partial(lstm_ae_kernel, T=T, B=Bc, H=H)

    def wspec(a):
        # Full-array VMEM block with constant index map: stays resident.
        return pl.BlockSpec(a.shape, lambda b: (0,) * a.ndim)

    # Explicit scoped-VMEM limit from the per-chunk footprint (+ headroom),
    # clamped inside v7x's 64 MiB physical VMEM.
    per_step = (2 * T * Bc * D * 2       # x block (bf16), double-buffered
                + 2 * T * Bc * D * 4     # out block (f32), double-buffered
                + T * Bc * 4 * H * 4     # encoder gate scratch (f32)
                + T * Bc * H * 4)        # decoder hidden scratch (f32)
    weight_bytes = sum(int(p.size) * p.dtype.itemsize for p in kparams)
    vmem_bytes = int(1.5 * (per_step + weight_bytes)) + (2 << 20)
    vmem_bytes = max(4 << 20, min(vmem_bytes, 48 << 20))

    out_blk = pl.pallas_call(
        kernel,
        out_shape=jax.ShapeDtypeStruct((nb, T * Bc, D), jnp.float32),
        grid=(nb,),
        in_specs=[pl.BlockSpec((None, T * Bc, D), lambda b: (b, 0, 0))]
                 + [wspec(p) for p in kparams],
        out_specs=pl.BlockSpec((None, T * Bc, D), lambda b: (b, 0, 0)),
        scratch_shapes=[
            pltpu.VMEM((T * Bc, 4 * H), jnp.float32),   # encoder input gates
            pltpu.VMEM((T * Bc, H), jnp.float32),       # decoder top hiddens
        ],
        compiler_params=pltpu.CompilerParams(
            dimension_semantics=("parallel",),
            vmem_limit_bytes=vmem_bytes),
    )(x_blk, *kparams)

    out = (out_blk.reshape(nb, T, Bc, D)
           .transpose(1, 0, 2, 3)
           .reshape(T, Bp, D)[:, :B, :])                         # drop batch pad
    return jnp.transpose(out, (1, 0, 2))                         # (B, T, D)


if __name__ == "__main__":
    # Small shapes consistent with the module's forward: x: [batch, seq, input_dim]
    batch, seq_len, input_dim, hidden_dim = 2, 8, 4, 32

    key = jax.random.PRNGKey(0)
    k_x, k_p = jax.random.split(key)
    x = jax.random.normal(k_x, (batch, seq_len, input_dim), jnp.float32)
    params = init_params(k_p, input_dim, hidden_dim)

    out = lstm_autoencoder(x, params, hidden_dim=hidden_dim)
    out = jax.block_until_ready(out)

    assert out.shape == (batch, seq_len, input_dim), out.shape
    assert out.dtype == jnp.float32
    assert bool(jnp.all(jnp.isfinite(out)))
    print("KERNEL_OK")
</pallas_src>

<mosaic_0001>
module attributes {stable_mosaic.version = 11 : i64} {
  func.func @lstm_ae_kernel(%arg0: i32, %arg1: memref<1x64x4xbf16, #tpu.memory_space<vmem>>, %arg2: memref<4x128xbf16, #tpu.memory_space<vmem>>, %arg3: memref<32x128xbf16, #tpu.memory_space<vmem>>, %arg4: memref<1x128xf32, #tpu.memory_space<vmem>>, %arg5: memref<64x128xbf16, #tpu.memory_space<vmem>>, %arg6: memref<1x128xf32, #tpu.memory_space<vmem>>, %arg7: memref<32x128xbf16, #tpu.memory_space<vmem>>, %arg8: memref<32x128xbf16, #tpu.memory_space<vmem>>, %arg9: memref<1x128xf32, #tpu.memory_space<vmem>>, %arg10: memref<64x128xbf16, #tpu.memory_space<vmem>>, %arg11: memref<1x128xf32, #tpu.memory_space<vmem>>, %arg12: memref<32x4xbf16, #tpu.memory_space<vmem>>, %arg13: memref<1x4xf32, #tpu.memory_space<vmem>>, %arg14: memref<1x64x4xf32, #tpu.memory_space<vmem>>, %arg15: memref<64x128xf32, #tpu.memory_space<vmem>>, %arg16: memref<64x32xf32, #tpu.memory_space<vmem>>) attributes {dimension_semantics = [#tpu.dimension_semantics<parallel>], iteration_bounds = array<i64: 1>, scalar_prefetch = 0 : i64, scratch_operands = 2 : i64, tpu.core_type = #tpu.core_type<tc>, window_params = [{transform_indices = @transform_0, window_bounds = array<i64: 1, 64, 4>}, {pipeline_mode = #tpu.pipeline_mode<synchronous>, transform_indices = @transform_1, window_bounds = array<i64: 4, 128>}, {pipeline_mode = #tpu.pipeline_mode<synchronous>, transform_indices = @transform_2, window_bounds = array<i64: 32, 128>}, {pipeline_mode = #tpu.pipeline_mode<synchronous>, transform_indices = @transform_3, window_bounds = array<i64: 1, 128>}, {pipeline_mode = #tpu.pipeline_mode<synchronous>, transform_indices = @transform_4, window_bounds = array<i64: 64, 128>}, {pipeline_mode = #tpu.pipeline_mode<synchronous>, transform_indices = @transform_5, window_bounds = array<i64: 1, 128>}, {pipeline_mode = #tpu.pipeline_mode<synchronous>, transform_indices = @transform_6, window_bounds = array<i64: 32, 128>}, {pipeline_mode = #tpu.pipeline_mode<synchronous>, transform_indices = @transform_7, window_bounds = array<i64: 32, 128>}, {pipeline_mode = #tpu.pipeline_mode<synchronous>, transform_indices = @transform_8, window_bounds = array<i64: 1, 128>}, {pipeline_mode = #tpu.pipeline_mode<synchronous>, transform_indices = @transform_9, window_bounds = array<i64: 64, 128>}, {pipeline_mode = #tpu.pipeline_mode<synchronous>, transform_indices = @transform_10, window_bounds = array<i64: 1, 128>}, {pipeline_mode = #tpu.pipeline_mode<synchronous>, transform_indices = @transform_11, window_bounds = array<i64: 32, 4>}, {pipeline_mode = #tpu.pipeline_mode<synchronous>, transform_indices = @transform_12, window_bounds = array<i64: 1, 4>}, {transform_indices = @transform_13, window_bounds = array<i64: 1, 64, 4>}]} {
    %c0 = arith.constant 0 : index
    %c0_0 = arith.constant 0 : index
    %0 = vector.load %arg3[%c0, %c0_0] : memref<32x128xbf16, #tpu.memory_space<vmem>>, vector<32x128xbf16>
    %c0_1 = arith.constant 0 : index
    %c0_2 = arith.constant 0 : index
    %1 = vector.load %arg5[%c0_1, %c0_2] : memref<64x128xbf16, #tpu.memory_space<vmem>>, vector<64x128xbf16>
    %c0_3 = arith.constant 0 : index
    %c0_4 = arith.constant 0 : index
    %2 = vector.load %arg8[%c0_3, %c0_4] : memref<32x128xbf16, #tpu.memory_space<vmem>>, vector<32x128xbf16>
    %c0_5 = arith.constant 0 : index
    %c0_6 = arith.constant 0 : index
    %3 = vector.load %arg10[%c0_5, %c0_6] : memref<64x128xbf16, #tpu.memory_space<vmem>>, vector<64x128xbf16>
    %c0_7 = arith.constant 0 : index
    %c0_8 = arith.constant 0 : index
    %4 = vector.load %arg6[%c0_7, %c0_8] : memref<1x128xf32, #tpu.memory_space<vmem>>, vector<1x128xf32>
    %5 = vector.shape_cast %4 : vector<1x128xf32> to vector<1x128xf32>
    %6 = vector.broadcast %5 : vector<1x128xf32> to vector<8x128xf32>
    %c0_9 = arith.constant 0 : index
    %c0_10 = arith.constant 0 : index
    %7 = vector.load %arg11[%c0_9, %c0_10] : memref<1x128xf32, #tpu.memory_space<vmem>>, vector<1x128xf32>
    %8 = vector.shape_cast %7 : vector<1x128xf32> to vector<1x128xf32>
    %9 = vector.broadcast %8 : vector<1x128xf32> to vector<8x128xf32>
    %c0_11 = arith.constant 0 : index
    %c0_12 = arith.constant 0 : index
    %c0_13 = arith.constant 0 : index
    %10 = vector.load %arg1[%c0_11, %c0_12, %c0_13] : memref<1x64x4xbf16, #tpu.memory_space<vmem>>, vector<1x64x4xbf16>
    %11 = vector.shape_cast %10 : vector<1x64x4xbf16> to vector<64x4xbf16>
    %c0_14 = arith.constant 0 : index
    %c0_15 = arith.constant 0 : index
    %12 = vector.load %arg2[%c0_14, %c0_15] : memref<4x128xbf16, #tpu.memory_space<vmem>>, vector<4x128xbf16>
    %cst = arith.constant dense<0.000000e+00> : vector<64x128xf32>
    %13 = tpu.matmul %11, %12, %cst {dimension_numbers = #tpu.dot_dimension_numbers<[1], [0], [0], [1], [0, 0, 1, 1], [], []>} : vector<64x4xbf16>, vector<4x128xbf16>, vector<64x128xf32> -> vector<64x128xf32>
    %c0_16 = arith.constant 0 : index
    %c0_17 = arith.constant 0 : index
    %14 = vector.load %arg4[%c0_16, %c0_17] : memref<1x128xf32, #tpu.memory_space<vmem>>, vector<1x128xf32>
    %15 = vector.broadcast %14 : vector<1x128xf32> to vector<64x128xf32>
    %16 = arith.addf %13, %15 : vector<64x128xf32>
    %c0_18 = arith.constant 0 : index
    %c0_19 = arith.constant 0 : index
    %17 = vector.load %arg15[%c0_18, %c0_19] : memref<64x128xf32, #tpu.memory_space<vmem>>, vector<64x128xf32>
    tpu.vector_store %arg15[%c0_18, %c0_19], %16 {strides = array<i32>} : memref<64x128xf32, #tpu.memory_space<vmem>>, vector<64x128xf32>,
    %cst_20 = arith.constant 0.000000e+00 : f32
    %18 = vector.broadcast %cst_20 : f32 to vector<8x32xf32>
    %c0_i32 = arith.constant 0 : i32
    %c8_i32 = arith.constant 8 : i32
    %19 = arith.muli %c0_i32, %c8_i32 : i32
    %20 = tpu.assume_multiple %19, 8 : i32
    %21 = arith.index_cast %20 : i32 to index
    %c0_21 = arith.constant 0 : index
    %22 = vector.load %arg15[%21, %c0_21] : memref<64x128xf32, #tpu.memory_space<vmem>>, vector<8x128xf32>
    %23 = arith.truncf %18 : vector<8x32xf32> to vector<8x32xbf16>
    %cst_22 = arith.constant dense<0.000000e+00> : vector<8x128xf32>
    %24 = tpu.matmul %23, %0, %cst_22 {dimension_numbers = #tpu.dot_dimension_numbers<[1], [0], [0], [1], [0, 0, 1, 1], [], []>} : vector<8x32xbf16>, vector<32x128xbf16>, vector<8x128xf32> -> vector<8x128xf32>
    %25 = arith.addf %22, %24 : vector<8x128xf32>
    %cst_23 = arith.constant 5.000000e-01 : f32
    %26 = vector.broadcast %cst_23 : f32 to vector<8x128xf32>
    %27 = arith.mulf %26, %25 : vector<8x128xf32>
    %28 = math.tanh %27 : vector<8x128xf32>
    %cst_24 = arith.constant 5.000000e-01 : f32
    %29 = vector.broadcast %cst_24 : f32 to vector<8x128xf32>
    %30 = arith.mulf %29, %28 : vector<8x128xf32>
    %cst_25 = arith.constant 5.000000e-01 : f32
    %31 = vector.broadcast %cst_25 : f32 to vector<8x128xf32>
    %32 = arith.addf %30, %31 : vector<8x128xf32>
    %33 = math.tanh %25 : vector<8x128xf32>
    %34 = vector.extract_strided_slice %32 {offsets = [0, 0], sizes = [8, 32], strides = [1, 1]} : vector<8x128xf32> to vector<8x32xf32>
    %35 = vector.extract_strided_slice %32 {offsets = [0, 32], sizes = [8, 32], strides = [1, 1]} : vector<8x128xf32> to vector<8x32xf32>
    %36 = vector.extract_strided_slice %33 {offsets = [0, 64], sizes = [8, 32], strides = [1, 1]} : vector<8x128xf32> to vector<8x32xf32>
    %37 = vector.extract_strided_slice %32 {offsets = [0, 96], sizes = [8, 32], strides = [1, 1]} : vector<8x128xf32> to vector<8x32xf32>
    %38 = arith.mulf %35, %18 : vector<8x32xf32>
    %39 = arith.mulf %34, %36 : vector<8x32xf32>
    %40 = arith.addf %38, %39 : vector<8x32xf32>
    %41 = math.tanh %40 : vector<8x32xf32>
    %42 = arith.mulf %37, %41 : vector<8x32xf32>
    %43 = tpu.concatenate %42, %18 in 1 : vector<8x32xf32>, vector<8x32xf32> -> vector<8x64xf32>
    %44 = arith.truncf %43 : vector<8x64xf32> to vector<8x64xbf16>
    %cst_26 = arith.constant dense<0.000000e+00> : vector<8x128xf32>
    %45 = tpu.matmul %44, %1, %cst_26 {dimension_numbers = #tpu.dot_dimension_numbers<[1], [0], [0], [1], [0, 0, 1, 1], [], []>} : vector<8x64xbf16>, vector<64x128xbf16>, vector<8x128xf32> -> vector<8x128xf32>
    %46 = arith.addf %45, %6 : vector<8x128xf32>
    %cst_27 = arith.constant 5.000000e-01 : f32
    %47 = vector.broadcast %cst_27 : f32 to vector<8x128xf32>
    %48 = arith.mulf %47, %46 : vector<8x128xf32>
    %49 = math.tanh %48 : vector<8x128xf32>
    %cst_28 = arith.constant 5.000000e-01 : f32
    %50 = vector.broadcast %cst_28 : f32 to vector<8x128xf32>
    %51 = arith.mulf %50, %49 : vector<8x128xf32>
    %cst_29 = arith.constant 5.000000e-01 : f32
    %52 = vector.broadcast %cst_29 : f32 to vector<8x128xf32>
    %53 = arith.addf %51, %52 : vector<8x128xf32>
    %54 = math.tanh %46 : vector<8x128xf32>
    %55 = vector.extract_strided_slice %53 {offsets = [0, 0], sizes = [8, 32], strides = [1, 1]} : vector<8x128xf32> to vector<8x32xf32>
    %56 = vector.extract_strided_slice %53 {offsets = [0, 32], sizes = [8, 32], strides = [1, 1]} : vector<8x128xf32> to vector<8x32xf32>
    %57 = vector.extract_strided_slice %54 {offsets = [0, 64], sizes = [8, 32], strides = [1, 1]} : vector<8x128xf32> to vector<8x32xf32>
    %58 = vector.extract_strided_slice %53 {offsets = [0, 96], sizes = [8, 32], strides = [1, 1]} : vector<8x128xf32> to vector<8x32xf32>
    %59 = arith.mulf %56, %18 : vector<8x32xf32>
    %60 = arith.mulf %55, %57 : vector<8x32xf32>
    %61 = arith.addf %59, %60 : vector<8x32xf32>
    %62 = math.tanh %61 : vector<8x32xf32>
    %63 = arith.mulf %58, %62 : vector<8x32xf32>
    %c1_i32 = arith.constant 1 : i32
    %c8_i32_30 = arith.constant 8 : i32
    %64 = arith.muli %c1_i32, %c8_i32_30 : i32
    %65 = tpu.assume_multiple %64, 8 : i32
    %66 = arith.index_cast %65 : i32 to index
    %c0_31 = arith.constant 0 : index
    %67 = vector.load %arg15[%66, %c0_31] : memref<64x128xf32, #tpu.memory_space<vmem>>, vector<8x128xf32>
    %68 = arith.truncf %42 : vector<8x32xf32> to vector<8x32xbf16>
    %cst_32 = arith.constant dense<0.000000e+00> : vector<8x128xf32>
    %69 = tpu.matmul %68, %0, %cst_32 {dimension_numbers = #tpu.dot_dimension_numbers<[1], [0], [0], [1], [0, 0, 1, 1], [], []>} : vector<8x32xbf16>, vector<32x128xbf16>, vector<8x128xf32> -> vector<8x128xf32>
    %70 = arith.addf %67, %69 : vector<8x128xf32>
    %cst_33 = arith.constant 5.000000e-01 : f32
    %71 = vector.broadcast %cst_33 : f32 to vector<8x128xf32>
    %72 = arith.mulf %71, %70 : vector<8x128xf32>
    %73 = math.tanh %72 : vector<8x128xf32>
    %cst_34 = arith.constant 5.000000e-01 : f32
    %74 = vector.broadcast %cst_34 : f32 to vector<8x128xf32>
    %75 = arith.mulf %74, %73 : vector<8x128xf32>
    %cst_35 = arith.constant 5.000000e-01 : f32
    %76 = vector.broadcast %cst_35 : f32 to vector<8x128xf32>
    %77 = arith.addf %75, %76 : vector<8x128xf32>
    %78 = math.tanh %70 : vector<8x128xf32>
    %79 = vector.extract_strided_slice %77 {offsets = [0, 0], sizes = [8, 32], strides = [1, 1]} : vector<8x128xf32> to vector<8x32xf32>
    %80 = vector.extract_strided_slice %77 {offsets = [0, 32], sizes = [8, 32], strides = [1, 1]} : vector<8x128xf32> to vector<8x32xf32>
    %81 = vector.extract_strided_slice %78 {offsets = [0, 64], sizes = [8, 32], strides = [1, 1]} : vector<8x128xf32> to vector<8x32xf32>
    %82 = vector.extract_strided_slice %77 {offsets = [0, 96], sizes = [8, 32], strides = [1, 1]} : vector<8x128xf32> to vector<8x32xf32>
    %83 = arith.mulf %80, %40 : vector<8x32xf32>
    %84 = arith.mulf %79, %81 : vector<8x32xf32>
    %85 = arith.addf %83, %84 : vector<8x32xf32>
    %86 = math.tanh %85 : vector<8x32xf32>
    %87 = arith.mulf %82, %86 : vector<8x32xf32>
    %88 = tpu.concatenate %87, %63 in 1 : vector<8x32xf32>, vector<8x32xf32> -> vector<8x64xf32>
    %89 = arith.truncf %88 : vector<8x64xf32> to vector<8x64xbf16>
    %cst_36 = arith.constant dense<0.000000e+00> : vector<8x128xf32>
    %90 = tpu.matmul %89, %1, %cst_36 {dimension_numbers = #tpu.dot_dimension_numbers<[1], [0], [0], [1], [0, 0, 1, 1], [], []>} : vector<8x64xbf16>, vector<64x128xbf16>, vector<8x128xf32> -> vector<8x128xf32>
    %91 = arith.addf %90, %6 : vector<8x128xf32>
    %cst_37 = arith.constant 5.000000e-01 : f32
    %92 = vector.broadcast %cst_37 : f32 to vector<8x128xf32>
    %93 = arith.mulf %92, %91 : vector<8x128xf32>
    %94 = math.tanh %93 : vector<8x128xf32>
    %cst_38 = arith.constant 5.000000e-01 : f32
    %95 = vector.broadcast %cst_38 : f32 to vector<8x128xf32>
    %96 = arith.mulf %95, %94 : vector<8x128xf32>
    %cst_39 = arith.constant 5.000000e-01 : f32
    %97 = vector.broadcast %cst_39 : f32 to vector<8x128xf32>
    %98 = arith.addf %96, %97 : vector<8x128xf32>
    %99 = math.tanh %91 : vector<8x128xf32>
    %100 = vector.extract_strided_slice %98 {offsets = [0, 0], sizes = [8, 32], strides = [1, 1]} : vector<8x128xf32> to vector<8x32xf32>
    %101 = vector.extract_strided_slice %98 {offsets = [0, 32], sizes = [8, 32], strides = [1, 1]} : vector<8x128xf32> to vector<8x32xf32>
    %102 = vector.extract_strided_slice %99 {offsets = [0, 64], sizes = [8, 32], strides = [1, 1]} : vector<8x128xf32> to vector<8x32xf32>
    %103 = vector.extract_strided_slice %98 {offsets = [0, 96], sizes = [8, 32], strides = [1, 1]} : vector<8x128xf32> to vector<8x32xf32>
    %104 = arith.mulf %101, %61 : vector<8x32xf32>
    %105 = arith.mulf %100, %102 : vector<8x32xf32>
    %106 = arith.addf %104, %105 : vector<8x32xf32>
    %107 = math.tanh %106 : vector<8x32xf32>
    %108 = arith.mulf %103, %107 : vector<8x32xf32>
    %c2_i32 = arith.constant 2 : i32
    %c8_i32_40 = arith.constant 8 : i32
    %109 = arith.muli %c2_i32, %c8_i32_40 : i32
    %110 = tpu.assume_multiple %109, 8 : i32
    %111 = arith.index_cast %110 : i32 to index
    %c0_41 = arith.constant 0 : index
    %112 = vector.load %arg15[%111, %c0_41] : memref<64x128xf32, #tpu.memory_space<vmem>>, vector<8x128xf32>
    %113 = arith.truncf %87 : vector<8x32xf32> to vector<8x32xbf16>
    %cst_42 = arith.constant dense<0.000000e+00> : vector<8x128xf32>
    %114 = tpu.matmul %113, %0, %cst_42 {dimension_numbers = #tpu.dot_dimension_numbers<[1], [0], [0], [1], [0, 0, 1, 1], [], []>} : vector<8x32xbf16>, vector<32x128xbf16>, vector<8x128xf32> -> vector<8x128xf32>
    %115 = arith.addf %112, %114 : vector<8x128xf32>
    %cst_43 = arith.constant 5.000000e-01 : f32
    %116 = vector.broadcast %cst_43 : f32 to vector<8x128xf32>
    %117 = arith.mulf %116, %115 : vector<8x128xf32>
    %118 = math.tanh %117 : vector<8x128xf32>
    %cst_44 = arith.constant 5.000000e-01 : f32
    %119 = vector.broadcast %cst_44 : f32 to vector<8x128xf32>
    %120 = arith.mulf %119, %118 : vector<8x128xf32>
    %cst_45 = arith.constant 5.000000e-01 : f32
    %121 = vector.broadcast %cst_45 : f32 to vector<8x128xf32>
    %122 = arith.addf %120, %121 : vector<8x128xf32>
    %123 = math.tanh %115 : vector<8x128xf32>
    %124 = vector.extract_strided_slice %122 {offsets = [0, 0], sizes = [8, 32], strides = [1, 1]} : vector<8x128xf32> to vector<8x32xf32>
    %125 = vector.extract_strided_slice %122 {offsets = [0, 32], sizes = [8, 32], strides = [1, 1]} : vector<8x128xf32> to vector<8x32xf32>
    %126 = vector.extract_strided_slice %123 {offsets = [0, 64], sizes = [8, 32], strides = [1, 1]} : vector<8x128xf32> to vector<8x32xf32>
    %127 = vector.extract_strided_slice %122 {offsets = [0, 96], sizes = [8, 32], strides = [1, 1]} : vector<8x128xf32> to vector<8x32xf32>
    %128 = arith.mulf %125, %85 : vector<8x32xf32>
    %129 = arith.mulf %124, %126 : vector<8x32xf32>
    %130 = arith.addf %128, %129 : vector<8x32xf32>
    %131 = math.tanh %130 : vector<8x32xf32>
    %132 = arith.mulf %127, %131 : vector<8x32xf32>
    %133 = tpu.concatenate %132, %108 in 1 : vector<8x32xf32>, vector<8x32xf32> -> vector<8x64xf32>
    %134 = arith.truncf %133 : vector<8x64xf32> to vector<8x64xbf16>
    %cst_46 = arith.constant dense<0.000000e+00> : vector<8x128xf32>
    %135 = tpu.matmul %134, %1, %cst_46 {dimension_numbers = #tpu.dot_dimension_numbers<[1], [0], [0], [1], [0, 0, 1, 1], [], []>} : vector<8x64xbf16>, vector<64x128xbf16>, vector<8x128xf32> -> vector<8x128xf32>
    %136 = arith.addf %135, %6 : vector<8x128xf32>
    %cst_47 = arith.constant 5.000000e-01 : f32
    %137 = vector.broadcast %cst_47 : f32 to vector<8x128xf32>
    %138 = arith.mulf %137, %136 : vector<8x128xf32>
    %139 = math.tanh %138 : vector<8x128xf32>
    %cst_48 = arith.constant 5.000000e-01 : f32
    %140 = vector.broadcast %cst_48 : f32 to vector<8x128xf32>
    %141 = arith.mulf %140, %139 : vector<8x128xf32>
    %cst_49 = arith.constant 5.000000e-01 : f32
    %142 = vector.broadcast %cst_49 : f32 to vector<8x128xf32>
    %143 = arith.addf %141, %142 : vector<8x128xf32>
    %144 = math.tanh %136 : vector<8x128xf32>
    %145 = vector.extract_strided_slice %143 {offsets = [0, 0], sizes = [8, 32], strides = [1, 1]} : vector<8x128xf32> to vector<8x32xf32>
    %146 = vector.extract_strided_slice %143 {offsets = [0, 32], sizes = [8, 32], strides = [1, 1]} : vector<8x128xf32> to vector<8x32xf32>
    %147 = vector.extract_strided_slice %144 {offsets = [0, 64], sizes = [8, 32], strides = [1, 1]} : vector<8x128xf32> to vector<8x32xf32>
    %148 = vector.extract_strided_slice %143 {offsets = [0, 96], sizes = [8, 32], strides = [1, 1]} : vector<8x128xf32> to vector<8x32xf32>
    %149 = arith.mulf %146, %106 : vector<8x32xf32>
    %150 = arith.mulf %145, %147 : vector<8x32xf32>
    %151 = arith.addf %149, %150 : vector<8x32xf32>
    %152 = math.tanh %151 : vector<8x32xf32>
    %153 = arith.mulf %148, %152 : vector<8x32xf32>
    %c3_i32 = arith.constant 3 : i32
    %c8_i32_50 = arith.constant 8 : i32
    %154 = arith.muli %c3_i32, %c8_i32_50 : i32
    %155 = tpu.assume_multiple %154, 8 : i32
    %156 = arith.index_cast %155 : i32 to index
    %c0_51 = arith.constant 0 : index
    %157 = vector.load %arg15[%156, %c0_51] : memref<64x128xf32, #tpu.memory_space<vmem>>, vector<8x128xf32>
    %158 = arith.truncf %132 : vector<8x32xf32> to vector<8x32xbf16>
    %cst_52 = arith.constant dense<0.000000e+00> : vector<8x128xf32>
    %159 = tpu.matmul %158, %0, %cst_52 {dimension_numbers = #tpu.dot_dimension_numbers<[1], [0], [0], [1], [0, 0, 1, 1], [], []>} : vector<8x32xbf16>, vector<32x128xbf16>, vector<8x128xf32> -> vector<8x128xf32>
    %160 = arith.addf %157, %159 : vector<8x128xf32>
    %cst_53 = arith.constant 5.000000e-01 : f32
    %161 = vector.broadcast %cst_53 : f32 to vector<8x128xf32>
    %162 = arith.mulf %161, %160 : vector<8x128xf32>
    %163 = math.tanh %162 : vector<8x128xf32>
    %cst_54 = arith.constant 5.000000e-01 : f32
    %164 = vector.broadcast %cst_54 : f32 to vector<8x128xf32>
    %165 = arith.mulf %164, %163 : vector<8x128xf32>
    %cst_55 = arith.constant 5.000000e-01 : f32
    %166 = vector.broadcast %cst_55 : f32 to vector<8x128xf32>
    %167 = arith.addf %165, %166 : vector<8x128xf32>
    %168 = math.tanh %160 : vector<8x128xf32>
    %169 = vector.extract_strided_slice %167 {offsets = [0, 0], sizes = [8, 32], strides = [1, 1]} : vector<8x128xf32> to vector<8x32xf32>
    %170 = vector.extract_strided_slice %167 {offsets = [0, 32], sizes = [8, 32], strides = [1, 1]} : vector<8x128xf32> to vector<8x32xf32>
    %171 = vector.extract_strided_slice %168 {offsets = [0, 64], sizes = [8, 32], strides = [1, 1]} : vector<8x128xf32> to vector<8x32xf32>
    %172 = vector.extract_strided_slice %167 {offsets = [0, 96], sizes = [8, 32], strides = [1, 1]} : vector<8x128xf32> to vector<8x32xf32>
    %173 = arith.mulf %170, %130 : vector<8x32xf32>
    %174 = arith.mulf %169, %171 : vector<8x32xf32>
    %175 = arith.addf %173, %174 : vector<8x32xf32>
    %176 = math.tanh %175 : vector<8x32xf32>
    %177 = arith.mulf %172, %176 : vector<8x32xf32>
    %178 = tpu.concatenate %177, %153 in 1 : vector<8x32xf32>, vector<8x32xf32> -> vector<8x64xf32>
    %179 = arith.truncf %178 : vector<8x64xf32> to vector<8x64xbf16>
    %cst_56 = arith.constant dense<0.000000e+00> : vector<8x128xf32>
    %180 = tpu.matmul %179, %1, %cst_56 {dimension_numbers = #tpu.dot_dimension_numbers<[1], [0], [0], [1], [0, 0, 1, 1], [], []>} : vector<8x64xbf16>, vector<64x128xbf16>, vector<8x128xf32> -> vector<8x128xf32>
    %181 = arith.addf %180, %6 : vector<8x128xf32>
    %cst_57 = arith.constant 5.000000e-01 : f32
    %182 = vector.broadcast %cst_57 : f32 to vector<8x128xf32>
    %183 = arith.mulf %182, %181 : vector<8x128xf32>
    %184 = math.tanh %183 : vector<8x128xf32>
    %cst_58 = arith.constant 5.000000e-01 : f32
    %185 = vector.broadcast %cst_58 : f32 to vector<8x128xf32>
    %186 = arith.mulf %185, %184 : vector<8x128xf32>
    %cst_59 = arith.constant 5.000000e-01 : f32
    %187 = vector.broadcast %cst_59 : f32 to vector<8x128xf32>
    %188 = arith.addf %186, %187 : vector<8x128xf32>
    %189 = math.tanh %181 : vector<8x128xf32>
    %190 = vector.extract_strided_slice %188 {offsets = [0, 0], sizes = [8, 32], strides = [1, 1]} : vector<8x128xf32> to vector<8x32xf32>
    %191 = vector.extract_strided_slice %188 {offsets = [0, 32], sizes = [8, 32], strides = [1, 1]} : vector<8x128xf32> to vector<8x32xf32>
    %192 = vector.extract_strided_slice %189 {offsets = [0, 64], sizes = [8, 32], strides = [1, 1]} : vector<8x128xf32> to vector<8x32xf32>
    %193 = vector.extract_strided_slice %188 {offsets = [0, 96], sizes = [8, 32], strides = [1, 1]} : vector<8x128xf32> to vector<8x32xf32>
    %194 = arith.mulf %191, %151 : vector<8x32xf32>
    %195 = arith.mulf %190, %192 : vector<8x32xf32>
    %196 = arith.addf %194, %195 : vector<8x32xf32>
    %197 = math.tanh %196 : vector<8x32xf32>
    %198 = arith.mulf %193, %197 : vector<8x32xf32>
    %c4_i32 = arith.constant 4 : i32
    %c8_i32_60 = arith.constant 8 : i32
    %199 = arith.muli %c4_i32, %c8_i32_60 : i32
    %200 = tpu.assume_multiple %199, 8 : i32
    %201 = arith.index_cast %200 : i32 to index
    %c0_61 = arith.constant 0 : index
    %202 = vector.load %arg15[%201, %c0_61] : memref<64x128xf32, #tpu.memory_space<vmem>>, vector<8x128xf32>
    %203 = arith.truncf %177 : vector<8x32xf32> to vector<8x32xbf16>
    %cst_62 = arith.constant dense<0.000000e+00> : vector<8x128xf32>
    %204 = tpu.matmul %203, %0, %cst_62 {dimension_numbers = #tpu.dot_dimension_numbers<[1], [0], [0], [1], [0, 0, 1, 1], [], []>} : vector<8x32xbf16>, vector<32x128xbf16>, vector<8x128xf32> -> vector<8x128xf32>
    %205 = arith.addf %202, %204 : vector<8x128xf32>
    %cst_63 = arith.constant 5.000000e-01 : f32
    %206 = vector.broadcast %cst_63 : f32 to vector<8x128xf32>
    %207 = arith.mulf %206, %205 : vector<8x128xf32>
    %208 = math.tanh %207 : vector<8x128xf32>
    %cst_64 = arith.constant 5.000000e-01 : f32
    %209 = vector.broadcast %cst_64 : f32 to vector<8x128xf32>
    %210 = arith.mulf %209, %208 : vector<8x128xf32>
    %cst_65 = arith.constant 5.000000e-01 : f32
    %211 = vector.broadcast %cst_65 : f32 to vector<8x128xf32>
    %212 = arith.addf %210, %211 : vector<8x128xf32>
    %213 = math.tanh %205 : vector<8x128xf32>
    %214 = vector.extract_strided_slice %212 {offsets = [0, 0], sizes = [8, 32], strides = [1, 1]} : vector<8x128xf32> to vector<8x32xf32>
    %215 = vector.extract_strided_slice %212 {offsets = [0, 32], sizes = [8, 32], strides = [1, 1]} : vector<8x128xf32> to vector<8x32xf32>
    %216 = vector.extract_strided_slice %213 {offsets = [0, 64], sizes = [8, 32], strides = [1, 1]} : vector<8x128xf32> to vector<8x32xf32>
    %217 = vector.extract_strided_slice %212 {offsets = [0, 96], sizes = [8, 32], strides = [1, 1]} : vector<8x128xf32> to vector<8x32xf32>
    %218 = arith.mulf %215, %175 : vector<8x32xf32>
    %219 = arith.mulf %214, %216 : vector<8x32xf32>
    %220 = arith.addf %218, %219 : vector<8x32xf32>
    %221 = math.tanh %220 : vector<8x32xf32>
    %222 = arith.mulf %217, %221 : vector<8x32xf32>
    %223 = tpu.concatenate %222, %198 in 1 : vector<8x32xf32>, vector<8x32xf32> -> vector<8x64xf32>
    %224 = arith.truncf %223 : vector<8x64xf32> to vector<8x64xbf16>
    %cst_66 = arith.constant dense<0.000000e+00> : vector<8x128xf32>
    %225 = tpu.matmul %224, %1, %cst_66 {dimension_numbers = #tpu.dot_dimension_numbers<[1], [0], [0], [1], [0, 0, 1, 1], [], []>} : vector<8x64xbf16>, vector<64x128xbf16>, vector<8x128xf32> -> vector<8x128xf32>
    %226 = arith.addf %225, %6 : vector<8x128xf32>
    %cst_67 = arith.constant 5.000000e-01 : f32
    %227 = vector.broadcast %cst_67 : f32 to vector<8x128xf32>
    %228 = arith.mulf %227, %226 : vector<8x128xf32>
    %229 = math.tanh %228 : vector<8x128xf32>
    %cst_68 = arith.constant 5.000000e-01 : f32
    %230 = vector.broadcast %cst_68 : f32 to vector<8x128xf32>
    %231 = arith.mulf %230, %229 : vector<8x128xf32>
    %cst_69 = arith.constant 5.000000e-01 : f32
    %232 = vector.broadcast %cst_69 : f32 to vector<8x128xf32>
    %233 = arith.addf %231, %232 : vector<8x128xf32>
    %234 = math.tanh %226 : vector<8x128xf32>
    %235 = vector.extract_strided_slice %233 {offsets = [0, 0], sizes = [8, 32], strides = [1, 1]} : vector<8x128xf32> to vector<8x32xf32>
    %236 = vector.extract_strided_slice %233 {offsets = [0, 32], sizes = [8, 32], strides = [1, 1]} : vector<8x128xf32> to vector<8x32xf32>
    %237 = vector.extract_strided_slice %234 {offsets = [0, 64], sizes = [8, 32], strides = [1, 1]} : vector<8x128xf32> to vector<8x32xf32>
    %238 = vector.extract_strided_slice %233 {offsets = [0, 96], sizes = [8, 32], strides = [1, 1]} : vector<8x128xf32> to vector<8x32xf32>
    %239 = arith.mulf %236, %196 : vector<8x32xf32>
    %240 = arith.mulf %235, %237 : vector<8x32xf32>
    %241 = arith.addf %239, %240 : vector<8x32xf32>
    %242 = math.tanh %241 : vector<8x32xf32>
    %243 = arith.mulf %238, %242 : vector<8x32xf32>
    %c5_i32 = arith.constant 5 : i32
    %c8_i32_70 = arith.constant 8 : i32
    %244 = arith.muli %c5_i32, %c8_i32_70 : i32
    %245 = tpu.assume_multiple %244, 8 : i32
    %246 = arith.index_cast %245 : i32 to index
    %c0_71 = arith.constant 0 : index
    %247 = vector.load %arg15[%246, %c0_71] : memref<64x128xf32, #tpu.memory_space<vmem>>, vector<8x128xf32>
    %248 = arith.truncf %222 : vector<8x32xf32> to vector<8x32xbf16>
    %cst_72 = arith.constant dense<0.000000e+00> : vector<8x128xf32>
    %249 = tpu.matmul %248, %0, %cst_72 {dimension_numbers = #tpu.dot_dimension_numbers<[1], [0], [0], [1], [0, 0, 1, 1], [], []>} : vector<8x32xbf16>, vector<32x128xbf16>, vector<8x128xf32> -> vector<8x128xf32>
    %250 = arith.addf %247, %249 : vector<8x128xf32>
    %cst_73 = arith.constant 5.000000e-01 : f32
    %251 = vector.broadcast %cst_73 : f32 to vector<8x128xf32>
    %252 = arith.mulf %251, %250 : vector<8x128xf32>
    %253 = math.tanh %252 : vector<8x128xf32>
    %cst_74 = arith.constant 5.000000e-01 : f32
    %254 = vector.broadcast %cst_74 : f32 to vector<8x128xf32>
    %255 = arith.mulf %254, %253 : vector<8x128xf32>
    %cst_75 = arith.constant 5.000000e-01 : f32
    %256 = vector.broadcast %cst_75 : f32 to vector<8x128xf32>
    %257 = arith.addf %255, %256 : vector<8x128xf32>
    %258 = math.tanh %250 : vector<8x128xf32>
    %259 = vector.extract_strided_slice %257 {offsets = [0, 0], sizes = [8, 32], strides = [1, 1]} : vector<8x128xf32> to vector<8x32xf32>
    %260 = vector.extract_strided_slice %257 {offsets = [0, 32], sizes = [8, 32], strides = [1, 1]} : vector<8x128xf32> to vector<8x32xf32>
    %261 = vector.extract_strided_slice %258 {offsets = [0, 64], sizes = [8, 32], strides = [1, 1]} : vector<8x128xf32> to vector<8x32xf32>
    %262 = vector.extract_strided_slice %257 {offsets = [0, 96], sizes = [8, 32], strides = [1, 1]} : vector<8x128xf32> to vector<8x32xf32>
    %263 = arith.mulf %260, %220 : vector<8x32xf32>
    %264 = arith.mulf %259, %261 : vector<8x32xf32>
    %265 = arith.addf %263, %264 : vector<8x32xf32>
    %266 = math.tanh %265 : vector<8x32xf32>
    %267 = arith.mulf %262, %266 : vector<8x32xf32>
    %268 = tpu.concatenate %267, %243 in 1 : vector<8x32xf32>, vector<8x32xf32> -> vector<8x64xf32>
    %269 = arith.truncf %268 : vector<8x64xf32> to vector<8x64xbf16>
    %cst_76 = arith.constant dense<0.000000e+00> : vector<8x128xf32>
    %270 = tpu.matmul %269, %1, %cst_76 {dimension_numbers = #tpu.dot_dimension_numbers<[1], [0], [0], [1], [0, 0, 1, 1], [], []>} : vector<8x64xbf16>, vector<64x128xbf16>, vector<8x128xf32> -> vector<8x128xf32>
    %271 = arith.addf %270, %6 : vector<8x128xf32>
    %cst_77 = arith.constant 5.000000e-01 : f32
    %272 = vector.broadcast %cst_77 : f32 to vector<8x128xf32>
    %273 = arith.mulf %272, %271 : vector<8x128xf32>
    %274 = math.tanh %273 : vector<8x128xf32>
    %cst_78 = arith.constant 5.000000e-01 : f32
    %275 = vector.broadcast %cst_78 : f32 to vector<8x128xf32>
    %276 = arith.mulf %275, %274 : vector<8x128xf32>
    %cst_79 = arith.constant 5.000000e-01 : f32
    %277 = vector.broadcast %cst_79 : f32 to vector<8x128xf32>
    %278 = arith.addf %276, %277 : vector<8x128xf32>
    %279 = math.tanh %271 : vector<8x128xf32>
    %280 = vector.extract_strided_slice %278 {offsets = [0, 0], sizes = [8, 32], strides = [1, 1]} : vector<8x128xf32> to vector<8x32xf32>
    %281 = vector.extract_strided_slice %278 {offsets = [0, 32], sizes = [8, 32], strides = [1, 1]} : vector<8x128xf32> to vector<8x32xf32>
    %282 = vector.extract_strided_slice %279 {offsets = [0, 64], sizes = [8, 32], strides = [1, 1]} : vector<8x128xf32> to vector<8x32xf32>
    %283 = vector.extract_strided_slice %278 {offsets = [0, 96], sizes = [8, 32], strides = [1, 1]} : vector<8x128xf32> to vector<8x32xf32>
    %284 = arith.mulf %281, %241 : vector<8x32xf32>
    %285 = arith.mulf %280, %282 : vector<8x32xf32>
    %286 = arith.addf %284, %285 : vector<8x32xf32>
    %287 = math.tanh %286 : vector<8x32xf32>
    %288 = arith.mulf %283, %287 : vector<8x32xf32>
    %c6_i32 = arith.constant 6 : i32
    %c8_i32_80 = arith.constant 8 : i32
    %289 = arith.muli %c6_i32, %c8_i32_80 : i32
    %290 = tpu.assume_multiple %289, 8 : i32
    %291 = arith.index_cast %290 : i32 to index
    %c0_81 = arith.constant 0 : index
    %292 = vector.load %arg15[%291, %c0_81] : memref<64x128xf32, #tpu.memory_space<vmem>>, vector<8x128xf32>
    %293 = arith.truncf %267 : vector<8x32xf32> to vector<8x32xbf16>
    %cst_82 = arith.constant dense<0.000000e+00> : vector<8x128xf32>
    %294 = tpu.matmul %293, %0, %cst_82 {dimension_numbers = #tpu.dot_dimension_numbers<[1], [0], [0], [1], [0, 0, 1, 1], [], []>} : vector<8x32xbf16>, vector<32x128xbf16>, vector<8x128xf32> -> vector<8x128xf32>
    %295 = arith.addf %292, %294 : vector<8x128xf32>
    %cst_83 = arith.constant 5.000000e-01 : f32
    %296 = vector.broadcast %cst_83 : f32 to vector<8x128xf32>
    %297 = arith.mulf %296, %295 : vector<8x128xf32>
    %298 = math.tanh %297 : vector<8x128xf32>
    %cst_84 = arith.constant 5.000000e-01 : f32
    %299 = vector.broadcast %cst_84 : f32 to vector<8x128xf32>
    %300 = arith.mulf %299, %298 : vector<8x128xf32>
    %cst_85 = arith.constant 5.000000e-01 : f32
    %301 = vector.broadcast %cst_85 : f32 to vector<8x128xf32>
    %302 = arith.addf %300, %301 : vector<8x128xf32>
    %303 = math.tanh %295 : vector<8x128xf32>
    %304 = vector.extract_strided_slice %302 {offsets = [0, 0], sizes = [8, 32], strides = [1, 1]} : vector<8x128xf32> to vector<8x32xf32>
    %305 = vector.extract_strided_slice %302 {offsets = [0, 32], sizes = [8, 32], strides = [1, 1]} : vector<8x128xf32> to vector<8x32xf32>
    %306 = vector.extract_strided_slice %303 {offsets = [0, 64], sizes = [8, 32], strides = [1, 1]} : vector<8x128xf32> to vector<8x32xf32>
    %307 = vector.extract_strided_slice %302 {offsets = [0, 96], sizes = [8, 32], strides = [1, 1]} : vector<8x128xf32> to vector<8x32xf32>
    %308 = arith.mulf %305, %265 : vector<8x32xf32>
    %309 = arith.mulf %304, %306 : vector<8x32xf32>
    %310 = arith.addf %308, %309 : vector<8x32xf32>
    %311 = math.tanh %310 : vector<8x32xf32>
    %312 = arith.mulf %307, %311 : vector<8x32xf32>
    %313 = tpu.concatenate %312, %288 in 1 : vector<8x32xf32>, vector<8x32xf32> -> vector<8x64xf32>
    %314 = arith.truncf %313 : vector<8x64xf32> to vector<8x64xbf16>
    %cst_86 = arith.constant dense<0.000000e+00> : vector<8x128xf32>
    %315 = tpu.matmul %314, %1, %cst_86 {dimension_numbers = #tpu.dot_dimension_numbers<[1], [0], [0], [1], [0, 0, 1, 1], [], []>} : vector<8x64xbf16>, vector<64x128xbf16>, vector<8x128xf32> -> vector<8x128xf32>
    %316 = arith.addf %315, %6 : vector<8x128xf32>
    %cst_87 = arith.constant 5.000000e-01 : f32
    %317 = vector.broadcast %cst_87 : f32 to vector<8x128xf32>
    %318 = arith.mulf %317, %316 : vector<8x128xf32>
    %319 = math.tanh %318 : vector<8x128xf32>
    %cst_88 = arith.constant 5.000000e-01 : f32
    %320 = vector.broadcast %cst_88 : f32 to vector<8x128xf32>
    %321 = arith.mulf %320, %319 : vector<8x128xf32>
    %cst_89 = arith.constant 5.000000e-01 : f32
    %322 = vector.broadcast %cst_89 : f32 to vector<8x128xf32>
    %323 = arith.addf %321, %322 : vector<8x128xf32>
    %324 = math.tanh %316 : vector<8x128xf32>
    %325 = vector.extract_strided_slice %323 {offsets = [0, 0], sizes = [8, 32], strides = [1, 1]} : vector<8x128xf32> to vector<8x32xf32>
    %326 = vector.extract_strided_slice %323 {offsets = [0, 32], sizes = [8, 32], strides = [1, 1]} : vector<8x128xf32> to vector<8x32xf32>
    %327 = vector.extract_strided_slice %324 {offsets = [0, 64], sizes = [8, 32], strides = [1, 1]} : vector<8x128xf32> to vector<8x32xf32>
    %328 = vector.extract_strided_slice %323 {offsets = [0, 96], sizes = [8, 32], strides = [1, 1]} : vector<8x128xf32> to vector<8x32xf32>
    %329 = arith.mulf %326, %286 : vector<8x32xf32>
    %330 = arith.mulf %325, %327 : vector<8x32xf32>
    %331 = arith.addf %329, %330 : vector<8x32xf32>
    %332 = math.tanh %331 : vector<8x32xf32>
    %333 = arith.mulf %328, %332 : vector<8x32xf32>
    %c7_i32 = arith.constant 7 : i32
    %c8_i32_90 = arith.constant 8 : i32
    %334 = arith.muli %c7_i32, %c8_i32_90 : i32
    %335 = tpu.assume_multiple %334, 8 : i32
    %336 = arith.index_cast %335 : i32 to index
    %c0_91 = arith.constant 0 : index
    %337 = vector.load %arg15[%336, %c0_91] : memref<64x128xf32, #tpu.memory_space<vmem>>, vector<8x128xf32>
    %338 = arith.truncf %312 : vector<8x32xf32> to vector<8x32xbf16>
    %cst_92 = arith.constant dense<0.000000e+00> : vector<8x128xf32>
    %339 = tpu.matmul %338, %0, %cst_92 {dimension_numbers = #tpu.dot_dimension_numbers<[1], [0], [0], [1], [0, 0, 1, 1], [], []>} : vector<8x32xbf16>, vector<32x128xbf16>, vector<8x128xf32> -> vector<8x128xf32>
    %340 = arith.addf %337, %339 : vector<8x128xf32>
    %cst_93 = arith.constant 5.000000e-01 : f32
    %341 = vector.broadcast %cst_93 : f32 to vector<8x128xf32>
    %342 = arith.mulf %341, %340 : vector<8x128xf32>
    %343 = math.tanh %342 : vector<8x128xf32>
    %cst_94 = arith.constant 5.000000e-01 : f32
    %344 = vector.broadcast %cst_94 : f32 to vector<8x128xf32>
    %345 = arith.mulf %344, %343 : vector<8x128xf32>
    %cst_95 = arith.constant 5.000000e-01 : f32
    %346 = vector.broadcast %cst_95 : f32 to vector<8x128xf32>
    %347 = arith.addf %345, %346 : vector<8x128xf32>
    %348 = math.tanh %340 : vector<8x128xf32>
    %349 = vector.extract_strided_slice %347 {offsets = [0, 0], sizes = [8, 32], strides = [1, 1]} : vector<8x128xf32> to vector<8x32xf32>
    %350 = vector.extract_strided_slice %347 {offsets = [0, 32], sizes = [8, 32], strides = [1, 1]} : vector<8x128xf32> to vector<8x32xf32>
    %351 = vector.extract_strided_slice %348 {offsets = [0, 64], sizes = [8, 32], strides = [1, 1]} : vector<8x128xf32> to vector<8x32xf32>
    %352 = vector.extract_strided_slice %347 {offsets = [0, 96], sizes = [8, 32], strides = [1, 1]} : vector<8x128xf32> to vector<8x32xf32>
    %353 = arith.mulf %350, %310 : vector<8x32xf32>
    %354 = arith.mulf %349, %351 : vector<8x32xf32>
    %355 = arith.addf %353, %354 : vector<8x32xf32>
    %356 = math.tanh %355 : vector<8x32xf32>
    %357 = arith.mulf %352, %356 : vector<8x32xf32>
    %358 = tpu.concatenate %357, %333 in 1 : vector<8x32xf32>, vector<8x32xf32> -> vector<8x64xf32>
    %359 = arith.truncf %358 : vector<8x64xf32> to vector<8x64xbf16>
    %cst_96 = arith.constant dense<0.000000e+00> : vector<8x128xf32>
    %360 = tpu.matmul %359, %1, %cst_96 {dimension_numbers = #tpu.dot_dimension_numbers<[1], [0], [0], [1], [0, 0, 1, 1], [], []>} : vector<8x64xbf16>, vector<64x128xbf16>, vector<8x128xf32> -> vector<8x128xf32>
    %361 = arith.addf %360, %6 : vector<8x128xf32>
    %cst_97 = arith.constant 5.000000e-01 : f32
    %362 = vector.broadcast %cst_97 : f32 to vector<8x128xf32>
    %363 = arith.mulf %362, %361 : vector<8x128xf32>
    %364 = math.tanh %363 : vector<8x128xf32>
    %cst_98 = arith.constant 5.000000e-01 : f32
    %365 = vector.broadcast %cst_98 : f32 to vector<8x128xf32>
    %366 = arith.mulf %365, %364 : vector<8x128xf32>
    %cst_99 = arith.constant 5.000000e-01 : f32
    %367 = vector.broadcast %cst_99 : f32 to vector<8x128xf32>
    %368 = arith.addf %366, %367 : vector<8x128xf32>
    %369 = math.tanh %361 : vector<8x128xf32>
    %370 = vector.extract_strided_slice %368 {offsets = [0, 0], sizes = [8, 32], strides = [1, 1]} : vector<8x128xf32> to vector<8x32xf32>
    %371 = vector.extract_strided_slice %368 {offsets = [0, 32], sizes = [8, 32], strides = [1, 1]} : vector<8x128xf32> to vector<8x32xf32>
    %372 = vector.extract_strided_slice %369 {offsets = [0, 64], sizes = [8, 32], strides = [1, 1]} : vector<8x128xf32> to vector<8x32xf32>
    %373 = vector.extract_strided_slice %368 {offsets = [0, 96], sizes = [8, 32], strides = [1, 1]} : vector<8x128xf32> to vector<8x32xf32>
    %374 = arith.mulf %371, %331 : vector<8x32xf32>
    %375 = arith.mulf %370, %372 : vector<8x32xf32>
    %376 = arith.addf %374, %375 : vector<8x32xf32>
    %377 = math.tanh %376 : vector<8x32xf32>
    %378 = arith.mulf %373, %377 : vector<8x32xf32>
    %c8_i32_100 = arith.constant 8 : i32
    %379 = arith.truncf %378 : vector<8x32xf32> to vector<8x32xbf16>
    %c0_101 = arith.constant 0 : index
    %c0_102 = arith.constant 0 : index
    %380 = vector.load %arg7[%c0_101, %c0_102] : memref<32x128xbf16, #tpu.memory_space<vmem>>, vector<32x128xbf16>
    %cst_103 = arith.constant dense<0.000000e+00> : vector<8x128xf32>
    %381 = tpu.matmul %379, %380, %cst_103 {dimension_numbers = #tpu.dot_dimension_numbers<[1], [0], [0], [1], [0, 0, 1, 1], [], []>} : vector<8x32xbf16>, vector<32x128xbf16>, vector<8x128xf32> -> vector<8x128xf32>
    %c0_104 = arith.constant 0 : index
    %c0_105 = arith.constant 0 : index
    %382 = vector.load %arg9[%c0_104, %c0_105] : memref<1x128xf32, #tpu.memory_space<vmem>>, vector<1x128xf32>
    %383 = vector.shape_cast %382 : vector<1x128xf32> to vector<1x128xf32>
    %384 = vector.broadcast %383 : vector<1x128xf32> to vector<8x128xf32>
    %385 = arith.addf %381, %384 : vector<8x128xf32>
    %c0_i32_106 = arith.constant 0 : i32
    %386 = arith.truncf %18 : vector<8x32xf32> to vector<8x32xbf16>
    %cst_107 = arith.constant dense<0.000000e+00> : vector<8x128xf32>
    %387 = tpu.matmul %386, %2, %cst_107 {dimension_numbers = #tpu.dot_dimension_numbers<[1], [0], [0], [1], [0, 0, 1, 1], [], []>} : vector<8x32xbf16>, vector<32x128xbf16>, vector<8x128xf32> -> vector<8x128xf32>
    %388 = arith.addf %385, %387 : vector<8x128xf32>
    %cst_108 = arith.constant 5.000000e-01 : f32
    %389 = vector.broadcast %cst_108 : f32 to vector<8x128xf32>
    %390 = arith.mulf %389, %388 : vector<8x128xf32>
    %391 = math.tanh %390 : vector<8x128xf32>
    %cst_109 = arith.constant 5.000000e-01 : f32
    %392 = vector.broadcast %cst_109 : f32 to vector<8x128xf32>
    %393 = arith.mulf %392, %391 : vector<8x128xf32>
    %cst_110 = arith.constant 5.000000e-01 : f32
    %394 = vector.broadcast %cst_110 : f32 to vector<8x128xf32>
    %395 = arith.addf %393, %394 : vector<8x128xf32>
    %396 = math.tanh %388 : vector<8x128xf32>
    %397 = vector.extract_strided_slice %395 {offsets = [0, 0], sizes = [8, 32], strides = [1, 1]} : vector<8x128xf32> to vector<8x32xf32>
    %398 = vector.extract_strided_slice %395 {offsets = [0, 32], sizes = [8, 32], strides = [1, 1]} : vector<8x128xf32> to vector<8x32xf32>
    %399 = vector.extract_strided_slice %396 {offsets = [0, 64], sizes = [8, 32], strides = [1, 1]} : vector<8x128xf32> to vector<8x32xf32>
    %400 = vector.extract_strided_slice %395 {offsets = [0, 96], sizes = [8, 32], strides = [1, 1]} : vector<8x128xf32> to vector<8x32xf32>
    %401 = arith.mulf %398, %18 : vector<8x32xf32>
    %402 = arith.mulf %397, %399 : vector<8x32xf32>
    %403 = arith.addf %401, %402 : vector<8x32xf32>
    %404 = math.tanh %403 : vector<8x32xf32>
    %405 = arith.mulf %400, %404 : vector<8x32xf32>
    %406 = tpu.concatenate %405, %18 in 1 : vector<8x32xf32>, vector<8x32xf32> -> vector<8x64xf32>
    %407 = arith.truncf %406 : vector<8x64xf32> to vector<8x64xbf16>
    %cst_111 = arith.constant dense<0.000000e+00> : vector<8x128xf32>
    %408 = tpu.matmul %407, %3, %cst_111 {dimension_numbers = #tpu.dot_dimension_numbers<[1], [0], [0], [1], [0, 0, 1, 1], [], []>} : vector<8x64xbf16>, vector<64x128xbf16>, vector<8x128xf32> -> vector<8x128xf32>
    %409 = arith.addf %408, %9 : vector<8x128xf32>
    %cst_112 = arith.constant 5.000000e-01 : f32
    %410 = vector.broadcast %cst_112 : f32 to vector<8x128xf32>
    %411 = arith.mulf %410, %409 : vector<8x128xf32>
    %412 = math.tanh %411 : vector<8x128xf32>
    %cst_113 = arith.constant 5.000000e-01 : f32
    %413 = vector.broadcast %cst_113 : f32 to vector<8x128xf32>
    %414 = arith.mulf %413, %412 : vector<8x128xf32>
    %cst_114 = arith.constant 5.000000e-01 : f32
    %415 = vector.broadcast %cst_114 : f32 to vector<8x128xf32>
    %416 = arith.addf %414, %415 : vector<8x128xf32>
    %417 = math.tanh %409 : vector<8x128xf32>
    %418 = vector.extract_strided_slice %416 {offsets = [0, 0], sizes = [8, 32], strides = [1, 1]} : vector<8x128xf32> to vector<8x32xf32>
    %419 = vector.extract_strided_slice %416 {offsets = [0, 32], sizes = [8, 32], strides = [1, 1]} : vector<8x128xf32> to vector<8x32xf32>
    %420 = vector.extract_strided_slice %417 {offsets = [0, 64], sizes = [8, 32], strides = [1, 1]} : vector<8x128xf32> to vector<8x32xf32>
    %421 = vector.extract_strided_slice %416 {offsets = [0, 96], sizes = [8, 32], strides = [1, 1]} : vector<8x128xf32> to vector<8x32xf32>
    %422 = arith.mulf %419, %18 : vector<8x32xf32>
    %423 = arith.mulf %418, %420 : vector<8x32xf32>
    %424 = arith.addf %422, %423 : vector<8x32xf32>
    %425 = math.tanh %424 : vector<8x32xf32>
    %426 = arith.mulf %421, %425 : vector<8x32xf32>
    %c8_i32_115 = arith.constant 8 : i32
    %427 = arith.muli %c0_i32_106, %c8_i32_115 : i32
    %428 = tpu.assume_multiple %427, 8 : i32
    %429 = arith.index_cast %428 : i32 to index
    %c0_116 = arith.constant 0 : index
    %430 = vector.load %arg16[%429, %c0_116] : memref<64x32xf32, #tpu.memory_space<vmem>>, vector<8x32xf32>
    tpu.vector_store %arg16[%429, %c0_116], %426 {strides = array<i32>} : memref<64x32xf32, #tpu.memory_space<vmem>>, vector<8x32xf32>,
    %c1_i32_117 = arith.constant 1 : i32
    %431 = arith.truncf %405 : vector<8x32xf32> to vector<8x32xbf16>
    %cst_118 = arith.constant dense<0.000000e+00> : vector<8x128xf32>
    %432 = tpu.matmul %431, %2, %cst_118 {dimension_numbers = #tpu.dot_dimension_numbers<[1], [0], [0], [1], [0, 0, 1, 1], [], []>} : vector<8x32xbf16>, vector<32x128xbf16>, vector<8x128xf32> -> vector<8x128xf32>
    %433 = arith.addf %385, %432 : vector<8x128xf32>
    %cst_119 = arith.constant 5.000000e-01 : f32
    %434 = vector.broadcast %cst_119 : f32 to vector<8x128xf32>
    %435 = arith.mulf %434, %433 : vector<8x128xf32>
    %436 = math.tanh %435 : vector<8x128xf32>
    %cst_120 = arith.constant 5.000000e-01 : f32
    %437 = vector.broadcast %cst_120 : f32 to vector<8x128xf32>
    %438 = arith.mulf %437, %436 : vector<8x128xf32>
    %cst_121 = arith.constant 5.000000e-01 : f32
    %439 = vector.broadcast %cst_121 : f32 to vector<8x128xf32>
    %440 = arith.addf %438, %439 : vector<8x128xf32>
    %441 = math.tanh %433 : vector<8x128xf32>
    %442 = vector.extract_strided_slice %440 {offsets = [0, 0], sizes = [8, 32], strides = [1, 1]} : vector<8x128xf32> to vector<8x32xf32>
    %443 = vector.extract_strided_slice %440 {offsets = [0, 32], sizes = [8, 32], strides = [1, 1]} : vector<8x128xf32> to vector<8x32xf32>
    %444 = vector.extract_strided_slice %441 {offsets = [0, 64], sizes = [8, 32], strides = [1, 1]} : vector<8x128xf32> to vector<8x32xf32>
    %445 = vector.extract_strided_slice %440 {offsets = [0, 96], sizes = [8, 32], strides = [1, 1]} : vector<8x128xf32> to vector<8x32xf32>
    %446 = arith.mulf %443, %403 : vector<8x32xf32>
    %447 = arith.mulf %442, %444 : vector<8x32xf32>
    %448 = arith.addf %446, %447 : vector<8x32xf32>
    %449 = math.tanh %448 : vector<8x32xf32>
    %450 = arith.mulf %445, %449 : vector<8x32xf32>
    %451 = tpu.concatenate %450, %426 in 1 : vector<8x32xf32>, vector<8x32xf32> -> vector<8x64xf32>
    %452 = arith.truncf %451 : vector<8x64xf32> to vector<8x64xbf16>
    %cst_122 = arith.constant dense<0.000000e+00> : vector<8x128xf32>
    %453 = tpu.matmul %452, %3, %cst_122 {dimension_numbers = #tpu.dot_dimension_numbers<[1], [0], [0], [1], [0, 0, 1, 1], [], []>} : vector<8x64xbf16>, vector<64x128xbf16>, vector<8x128xf32> -> vector<8x128xf32>
    %454 = arith.addf %453, %9 : vector<8x128xf32>
    %cst_123 = arith.constant 5.000000e-01 : f32
    %455 = vector.broadcast %cst_123 : f32 to vector<8x128xf32>
    %456 = arith.mulf %455, %454 : vector<8x128xf32>
    %457 = math.tanh %456 : vector<8x128xf32>
    %cst_124 = arith.constant 5.000000e-01 : f32
    %458 = vector.broadcast %cst_124 : f32 to vector<8x128xf32>
    %459 = arith.mulf %458, %457 : vector<8x128xf32>
    %cst_125 = arith.constant 5.000000e-01 : f32
    %460 = vector.broadcast %cst_125 : f32 to vector<8x128xf32>
    %461 = arith.addf %459, %460 : vector<8x128xf32>
    %462 = math.tanh %454 : vector<8x128xf32>
    %463 = vector.extract_strided_slice %461 {offsets = [0, 0], sizes = [8, 32], strides = [1, 1]} : vector<8x128xf32> to vector<8x32xf32>
    %464 = vector.extract_strided_slice %461 {offsets = [0, 32], sizes = [8, 32], strides = [1, 1]} : vector<8x128xf32> to vector<8x32xf32>
    %465 = vector.extract_strided_slice %462 {offsets = [0, 64], sizes = [8, 32], strides = [1, 1]} : vector<8x128xf32> to vector<8x32xf32>
    %466 = vector.extract_strided_slice %461 {offsets = [0, 96], sizes = [8, 32], strides = [1, 1]} : vector<8x128xf32> to vector<8x32xf32>
    %467 = arith.mulf %464, %424 : vector<8x32xf32>
    %468 = arith.mulf %463, %465 : vector<8x32xf32>
    %469 = arith.addf %467, %468 : vector<8x32xf32>
    %470 = math.tanh %469 : vector<8x32xf32>
    %471 = arith.mulf %466, %470 : vector<8x32xf32>
    %c8_i32_126 = arith.constant 8 : i32
    %472 = arith.muli %c1_i32_117, %c8_i32_126 : i32
    %473 = tpu.assume_multiple %472, 8 : i32
    %474 = arith.index_cast %473 : i32 to index
    %c0_127 = arith.constant 0 : index
    %475 = vector.load %arg16[%474, %c0_127] : memref<64x32xf32, #tpu.memory_space<vmem>>, vector<8x32xf32>
    tpu.vector_store %arg16[%474, %c0_127], %471 {strides = array<i32>} : memref<64x32xf32, #tpu.memory_space<vmem>>, vector<8x32xf32>,
    %c2_i32_128 = arith.constant 2 : i32
    %476 = arith.truncf %450 : vector<8x32xf32> to vector<8x32xbf16>
    %cst_129 = arith.constant dense<0.000000e+00> : vector<8x128xf32>
    %477 = tpu.matmul %476, %2, %cst_129 {dimension_numbers = #tpu.dot_dimension_numbers<[1], [0], [0], [1], [0, 0, 1, 1], [], []>} : vector<8x32xbf16>, vector<32x128xbf16>, vector<8x128xf32> -> vector<8x128xf32>
    %478 = arith.addf %385, %477 : vector<8x128xf32>
    %cst_130 = arith.constant 5.000000e-01 : f32
    %479 = vector.broadcast %cst_130 : f32 to vector<8x128xf32>
    %480 = arith.mulf %479, %478 : vector<8x128xf32>
    %481 = math.tanh %480 : vector<8x128xf32>
    %cst_131 = arith.constant 5.000000e-01 : f32
    %482 = vector.broadcast %cst_131 : f32 to vector<8x128xf32>
    %483 = arith.mulf %482, %481 : vector<8x128xf32>
    %cst_132 = arith.constant 5.000000e-01 : f32
    %484 = vector.broadcast %cst_132 : f32 to vector<8x128xf32>
    %485 = arith.addf %483, %484 : vector<8x128xf32>
    %486 = math.tanh %478 : vector<8x128xf32>
    %487 = vector.extract_strided_slice %485 {offsets = [0, 0], sizes = [8, 32], strides = [1, 1]} : vector<8x128xf32> to vector<8x32xf32>
    %488 = vector.extract_strided_slice %485 {offsets = [0, 32], sizes = [8, 32], strides = [1, 1]} : vector<8x128xf32> to vector<8x32xf32>
    %489 = vector.extract_strided_slice %486 {offsets = [0, 64], sizes = [8, 32], strides = [1, 1]} : vector<8x128xf32> to vector<8x32xf32>
    %490 = vector.extract_strided_slice %485 {offsets = [0, 96], sizes = [8, 32], strides = [1, 1]} : vector<8x128xf32> to vector<8x32xf32>
    %491 = arith.mulf %488, %448 : vector<8x32xf32>
    %492 = arith.mulf %487, %489 : vector<8x32xf32>
    %493 = arith.addf %491, %492 : vector<8x32xf32>
    %494 = math.tanh %493 : vector<8x32xf32>
    %495 = arith.mulf %490, %494 : vector<8x32xf32>
    %496 = tpu.concatenate %495, %471 in 1 : vector<8x32xf32>, vector<8x32xf32> -> vector<8x64xf32>
    %497 = arith.truncf %496 : vector<8x64xf32> to vector<8x64xbf16>
    %cst_133 = arith.constant dense<0.000000e+00> : vector<8x128xf32>
    %498 = tpu.matmul %497, %3, %cst_133 {dimension_numbers = #tpu.dot_dimension_numbers<[1], [0], [0], [1], [0, 0, 1, 1], [], []>} : vector<8x64xbf16>, vector<64x128xbf16>, vector<8x128xf32> -> vector<8x128xf32>
    %499 = arith.addf %498, %9 : vector<8x128xf32>
    %cst_134 = arith.constant 5.000000e-01 : f32
    %500 = vector.broadcast %cst_134 : f32 to vector<8x128xf32>
    %501 = arith.mulf %500, %499 : vector<8x128xf32>
    %502 = math.tanh %501 : vector<8x128xf32>
    %cst_135 = arith.constant 5.000000e-01 : f32
    %503 = vector.broadcast %cst_135 : f32 to vector<8x128xf32>
    %504 = arith.mulf %503, %502 : vector<8x128xf32>
    %cst_136 = arith.constant 5.000000e-01 : f32
    %505 = vector.broadcast %cst_136 : f32 to vector<8x128xf32>
    %506 = arith.addf %504, %505 : vector<8x128xf32>
    %507 = math.tanh %499 : vector<8x128xf32>
    %508 = vector.extract_strided_slice %506 {offsets = [0, 0], sizes = [8, 32], strides = [1, 1]} : vector<8x128xf32> to vector<8x32xf32>
    %509 = vector.extract_strided_slice %506 {offsets = [0, 32], sizes = [8, 32], strides = [1, 1]} : vector<8x128xf32> to vector<8x32xf32>
    %510 = vector.extract_strided_slice %507 {offsets = [0, 64], sizes = [8, 32], strides = [1, 1]} : vector<8x128xf32> to vector<8x32xf32>
    %511 = vector.extract_strided_slice %506 {offsets = [0, 96], sizes = [8, 32], strides = [1, 1]} : vector<8x128xf32> to vector<8x32xf32>
    %512 = arith.mulf %509, %469 : vector<8x32xf32>
    %513 = arith.mulf %508, %510 : vector<8x32xf32>
    %514 = arith.addf %512, %513 : vector<8x32xf32>
    %515 = math.tanh %514 : vector<8x32xf32>
    %516 = arith.mulf %511, %515 : vector<8x32xf32>
    %c8_i32_137 = arith.constant 8 : i32
    %517 = arith.muli %c2_i32_128, %c8_i32_137 : i32
    %518 = tpu.assume_multiple %517, 8 : i32
    %519 = arith.index_cast %518 : i32 to index
    %c0_138 = arith.constant 0 : index
    %520 = vector.load %arg16[%519, %c0_138] : memref<64x32xf32, #tpu.memory_space<vmem>>, vector<8x32xf32>
    tpu.vector_store %arg16[%519, %c0_138], %516 {strides = array<i32>} : memref<64x32xf32, #tpu.memory_space<vmem>>, vector<8x32xf32>,
    %c3_i32_139 = arith.constant 3 : i32
    %521 = arith.truncf %495 : vector<8x32xf32> to vector<8x32xbf16>
    %cst_140 = arith.constant dense<0.000000e+00> : vector<8x128xf32>
    %522 = tpu.matmul %521, %2, %cst_140 {dimension_numbers = #tpu.dot_dimension_numbers<[1], [0], [0], [1], [0, 0, 1, 1], [], []>} : vector<8x32xbf16>, vector<32x128xbf16>, vector<8x128xf32> -> vector<8x128xf32>
    %523 = arith.addf %385, %522 : vector<8x128xf32>
    %cst_141 = arith.constant 5.000000e-01 : f32
    %524 = vector.broadcast %cst_141 : f32 to vector<8x128xf32>
    %525 = arith.mulf %524, %523 : vector<8x128xf32>
    %526 = math.tanh %525 : vector<8x128xf32>
    %cst_142 = arith.constant 5.000000e-01 : f32
    %527 = vector.broadcast %cst_142 : f32 to vector<8x128xf32>
    %528 = arith.mulf %527, %526 : vector<8x128xf32>
    %cst_143 = arith.constant 5.000000e-01 : f32
    %529 = vector.broadcast %cst_143 : f32 to vector<8x128xf32>
    %530 = arith.addf %528, %529 : vector<8x128xf32>
    %531 = math.tanh %523 : vector<8x128xf32>
    %532 = vector.extract_strided_slice %530 {offsets = [0, 0], sizes = [8, 32], strides = [1, 1]} : vector<8x128xf32> to vector<8x32xf32>
    %533 = vector.extract_strided_slice %530 {offsets = [0, 32], sizes = [8, 32], strides = [1, 1]} : vector<8x128xf32> to vector<8x32xf32>
    %534 = vector.extract_strided_slice %531 {offsets = [0, 64], sizes = [8, 32], strides = [1, 1]} : vector<8x128xf32> to vector<8x32xf32>
    %535 = vector.extract_strided_slice %530 {offsets = [0, 96], sizes = [8, 32], strides = [1, 1]} : vector<8x128xf32> to vector<8x32xf32>
    %536 = arith.mulf %533, %493 : vector<8x32xf32>
    %537 = arith.mulf %532, %534 : vector<8x32xf32>
    %538 = arith.addf %536, %537 : vector<8x32xf32>
    %539 = math.tanh %538 : vector<8x32xf32>
    %540 = arith.mulf %535, %539 : vector<8x32xf32>
    %541 = tpu.concatenate %540, %516 in 1 : vector<8x32xf32>, vector<8x32xf32> -> vector<8x64xf32>
    %542 = arith.truncf %541 : vector<8x64xf32> to vector<8x64xbf16>
    %cst_144 = arith.constant dense<0.000000e+00> : vector<8x128xf32>
    %543 = tpu.matmul %542, %3, %cst_144 {dimension_numbers = #tpu.dot_dimension_numbers<[1], [0], [0], [1], [0, 0, 1, 1], [], []>} : vector<8x64xbf16>, vector<64x128xbf16>, vector<8x128xf32> -> vector<8x128xf32>
    %544 = arith.addf %543, %9 : vector<8x128xf32>
    %cst_145 = arith.constant 5.000000e-01 : f32
    %545 = vector.broadcast %cst_145 : f32 to vector<8x128xf32>
    %546 = arith.mulf %545, %544 : vector<8x128xf32>
    %547 = math.tanh %546 : vector<8x128xf32>
    %cst_146 = arith.constant 5.000000e-01 : f32
    %548 = vector.broadcast %cst_146 : f32 to vector<8x128xf32>
    %549 = arith.mulf %548, %547 : vector<8x128xf32>
    %cst_147 = arith.constant 5.000000e-01 : f32
    %550 = vector.broadcast %cst_147 : f32 to vector<8x128xf32>
    %551 = arith.addf %549, %550 : vector<8x128xf32>
    %552 = math.tanh %544 : vector<8x128xf32>
    %553 = vector.extract_strided_slice %551 {offsets = [0, 0], sizes = [8, 32], strides = [1, 1]} : vector<8x128xf32> to vector<8x32xf32>
    %554 = vector.extract_strided_slice %551 {offsets = [0, 32], sizes = [8, 32], strides = [1, 1]} : vector<8x128xf32> to vector<8x32xf32>
    %555 = vector.extract_strided_slice %552 {offsets = [0, 64], sizes = [8, 32], strides = [1, 1]} : vector<8x128xf32> to vector<8x32xf32>
    %556 = vector.extract_strided_slice %551 {offsets = [0, 96], sizes = [8, 32], strides = [1, 1]} : vector<8x128xf32> to vector<8x32xf32>
    %557 = arith.mulf %554, %514 : vector<8x32xf32>
    %558 = arith.mulf %553, %555 : vector<8x32xf32>
    %559 = arith.addf %557, %558 : vector<8x32xf32>
    %560 = math.tanh %559 : vector<8x32xf32>
    %561 = arith.mulf %556, %560 : vector<8x32xf32>
    %c8_i32_148 = arith.constant 8 : i32
    %562 = arith.muli %c3_i32_139, %c8_i32_148 : i32
    %563 = tpu.assume_multiple %562, 8 : i32
    %564 = arith.index_cast %563 : i32 to index
    %c0_149 = arith.constant 0 : index
    %565 = vector.load %arg16[%564, %c0_149] : memref<64x32xf32, #tpu.memory_space<vmem>>, vector<8x32xf32>
    tpu.vector_store %arg16[%564, %c0_149], %561 {strides = array<i32>} : memref<64x32xf32, #tpu.memory_space<vmem>>, vector<8x32xf32>,
    %c4_i32_150 = arith.constant 4 : i32
    %566 = arith.truncf %540 : vector<8x32xf32> to vector<8x32xbf16>
    %cst_151 = arith.constant dense<0.000000e+00> : vector<8x128xf32>
    %567 = tpu.matmul %566, %2, %cst_151 {dimension_numbers = #tpu.dot_dimension_numbers<[1], [0], [0], [1], [0, 0, 1, 1], [], []>} : vector<8x32xbf16>, vector<32x128xbf16>, vector<8x128xf32> -> vector<8x128xf32>
    %568 = arith.addf %385, %567 : vector<8x128xf32>
    %cst_152 = arith.constant 5.000000e-01 : f32
    %569 = vector.broadcast %cst_152 : f32 to vector<8x128xf32>
    %570 = arith.mulf %569, %568 : vector<8x128xf32>
    %571 = math.tanh %570 : vector<8x128xf32>
    %cst_153 = arith.constant 5.000000e-01 : f32
    %572 = vector.broadcast %cst_153 : f32 to vector<8x128xf32>
    %573 = arith.mulf %572, %571 : vector<8x128xf32>
    %cst_154 = arith.constant 5.000000e-01 : f32
    %574 = vector.broadcast %cst_154 : f32 to vector<8x128xf32>
    %575 = arith.addf %573, %574 : vector<8x128xf32>
    %576 = math.tanh %568 : vector<8x128xf32>
    %577 = vector.extract_strided_slice %575 {offsets = [0, 0], sizes = [8, 32], strides = [1, 1]} : vector<8x128xf32> to vector<8x32xf32>
    %578 = vector.extract_strided_slice %575 {offsets = [0, 32], sizes = [8, 32], strides = [1, 1]} : vector<8x128xf32> to vector<8x32xf32>
    %579 = vector.extract_strided_slice %576 {offsets = [0, 64], sizes = [8, 32], strides = [1, 1]} : vector<8x128xf32> to vector<8x32xf32>
    %580 = vector.extract_strided_slice %575 {offsets = [0, 96], sizes = [8, 32], strides = [1, 1]} : vector<8x128xf32> to vector<8x32xf32>
    %581 = arith.mulf %578, %538 : vector<8x32xf32>
    %582 = arith.mulf %577, %579 : vector<8x32xf32>
    %583 = arith.addf %581, %582 : vector<8x32xf32>
    %584 = math.tanh %583 : vector<8x32xf32>
    %585 = arith.mulf %580, %584 : vector<8x32xf32>
    %586 = tpu.concatenate %585, %561 in 1 : vector<8x32xf32>, vector<8x32xf32> -> vector<8x64xf32>
    %587 = arith.truncf %586 : vector<8x64xf32> to vector<8x64xbf16>
    %cst_155 = arith.constant dense<0.000000e+00> : vector<8x128xf32>
    %588 = tpu.matmul %587, %3, %cst_155 {dimension_numbers = #tpu.dot_dimension_numbers<[1], [0], [0], [1], [0, 0, 1, 1], [], []>} : vector<8x64xbf16>, vector<64x128xbf16>, vector<8x128xf32> -> vector<8x128xf32>
    %589 = arith.addf %588, %9 : vector<8x128xf32>
    %cst_156 = arith.constant 5.000000e-01 : f32
    %590 = vector.broadcast %cst_156 : f32 to vector<8x128xf32>
    %591 = arith.mulf %590, %589 : vector<8x128xf32>
    %592 = math.tanh %591 : vector<8x128xf32>
    %cst_157 = arith.constant 5.000000e-01 : f32
    %593 = vector.broadcast %cst_157 : f32 to vector<8x128xf32>
    %594 = arith.mulf %593, %592 : vector<8x128xf32>
    %cst_158 = arith.constant 5.000000e-01 : f32
    %595 = vector.broadcast %cst_158 : f32 to vector<8x128xf32>
    %596 = arith.addf %594, %595 : vector<8x128xf32>
    %597 = math.tanh %589 : vector<8x128xf32>
    %598 = vector.extract_strided_slice %596 {offsets = [0, 0], sizes = [8, 32], strides = [1, 1]} : vector<8x128xf32> to vector<8x32xf32>
    %599 = vector.extract_strided_slice %596 {offsets = [0, 32], sizes = [8, 32], strides = [1, 1]} : vector<8x128xf32> to vector<8x32xf32>
    %600 = vector.extract_strided_slice %597 {offsets = [0, 64], sizes = [8, 32], strides = [1, 1]} : vector<8x128xf32> to vector<8x32xf32>
    %601 = vector.extract_strided_slice %596 {offsets = [0, 96], sizes = [8, 32], strides = [1, 1]} : vector<8x128xf32> to vector<8x32xf32>
    %602 = arith.mulf %599, %559 : vector<8x32xf32>
    %603 = arith.mulf %598, %600 : vector<8x32xf32>
    %604 = arith.addf %602, %603 : vector<8x32xf32>
    %605 = math.tanh %604 : vector<8x32xf32>
    %606 = arith.mulf %601, %605 : vector<8x32xf32>
    %c8_i32_159 = arith.constant 8 : i32
    %607 = arith.muli %c4_i32_150, %c8_i32_159 : i32
    %608 = tpu.assume_multiple %607, 8 : i32
    %609 = arith.index_cast %608 : i32 to index
    %c0_160 = arith.constant 0 : index
    %610 = vector.load %arg16[%609, %c0_160] : memref<64x32xf32, #tpu.memory_space<vmem>>, vector<8x32xf32>
    tpu.vector_store %arg16[%609, %c0_160], %606 {strides = array<i32>} : memref<64x32xf32, #tpu.memory_space<vmem>>, vector<8x32xf32>,
    %c5_i32_161 = arith.constant 5 : i32
    %611 = arith.truncf %585 : vector<8x32xf32> to vector<8x32xbf16>
    %cst_162 = arith.constant dense<0.000000e+00> : vector<8x128xf32>
    %612 = tpu.matmul %611, %2, %cst_162 {dimension_numbers = #tpu.dot_dimension_numbers<[1], [0], [0], [1], [0, 0, 1, 1], [], []>} : vector<8x32xbf16>, vector<32x128xbf16>, vector<8x128xf32> -> vector<8x128xf32>
    %613 = arith.addf %385, %612 : vector<8x128xf32>
    %cst_163 = arith.constant 5.000000e-01 : f32
    %614 = vector.broadcast %cst_163 : f32 to vector<8x128xf32>
    %615 = arith.mulf %614, %613 : vector<8x128xf32>
    %616 = math.tanh %615 : vector<8x128xf32>
    %cst_164 = arith.constant 5.000000e-01 : f32
    %617 = vector.broadcast %cst_164 : f32 to vector<8x128xf32>
    %618 = arith.mulf %617, %616 : vector<8x128xf32>
    %cst_165 = arith.constant 5.000000e-01 : f32
    %619 = vector.broadcast %cst_165 : f32 to vector<8x128xf32>
    %620 = arith.addf %618, %619 : vector<8x128xf32>
    %621 = math.tanh %613 : vector<8x128xf32>
    %622 = vector.extract_strided_slice %620 {offsets = [0, 0], sizes = [8, 32], strides = [1, 1]} : vector<8x128xf32> to vector<8x32xf32>
    %623 = vector.extract_strided_slice %620 {offsets = [0, 32], sizes = [8, 32], strides = [1, 1]} : vector<8x128xf32> to vector<8x32xf32>
    %624 = vector.extract_strided_slice %621 {offsets = [0, 64], sizes = [8, 32], strides = [1, 1]} : vector<8x128xf32> to vector<8x32xf32>
    %625 = vector.extract_strided_slice %620 {offsets = [0, 96], sizes = [8, 32], strides = [1, 1]} : vector<8x128xf32> to vector<8x32xf32>
    %626 = arith.mulf %623, %583 : vector<8x32xf32>
    %627 = arith.mulf %622, %624 : vector<8x32xf32>
    %628 = arith.addf %626, %627 : vector<8x32xf32>
    %629 = math.tanh %628 : vector<8x32xf32>
    %630 = arith.mulf %625, %629 : vector<8x32xf32>
    %631 = tpu.concatenate %630, %606 in 1 : vector<8x32xf32>, vector<8x32xf32> -> vector<8x64xf32>
    %632 = arith.truncf %631 : vector<8x64xf32> to vector<8x64xbf16>
    %cst_166 = arith.constant dense<0.000000e+00> : vector<8x128xf32>
    %633 = tpu.matmul %632, %3, %cst_166 {dimension_numbers = #tpu.dot_dimension_numbers<[1], [0], [0], [1], [0, 0, 1, 1], [], []>} : vector<8x64xbf16>, vector<64x128xbf16>, vector<8x128xf32> -> vector<8x128xf32>
    %634 = arith.addf %633, %9 : vector<8x128xf32>
    %cst_167 = arith.constant 5.000000e-01 : f32
    %635 = vector.broadcast %cst_167 : f32 to vector<8x128xf32>
    %636 = arith.mulf %635, %634 : vector<8x128xf32>
    %637 = math.tanh %636 : vector<8x128xf32>
    %cst_168 = arith.constant 5.000000e-01 : f32
    %638 = vector.broadcast %cst_168 : f32 to vector<8x128xf32>
    %639 = arith.mulf %638, %637 : vector<8x128xf32>
    %cst_169 = arith.constant 5.000000e-01 : f32
    %640 = vector.broadcast %cst_169 : f32 to vector<8x128xf32>
    %641 = arith.addf %639, %640 : vector<8x128xf32>
    %642 = math.tanh %634 : vector<8x128xf32>
    %643 = vector.extract_strided_slice %641 {offsets = [0, 0], sizes = [8, 32], strides = [1, 1]} : vector<8x128xf32> to vector<8x32xf32>
    %644 = vector.extract_strided_slice %641 {offsets = [0, 32], sizes = [8, 32], strides = [1, 1]} : vector<8x128xf32> to vector<8x32xf32>
    %645 = vector.extract_strided_slice %642 {offsets = [0, 64], sizes = [8, 32], strides = [1, 1]} : vector<8x128xf32> to vector<8x32xf32>
    %646 = vector.extract_strided_slice %641 {offsets = [0, 96], sizes = [8, 32], strides = [1, 1]} : vector<8x128xf32> to vector<8x32xf32>
    %647 = arith.mulf %644, %604 : vector<8x32xf32>
    %648 = arith.mulf %643, %645 : vector<8x32xf32>
    %649 = arith.addf %647, %648 : vector<8x32xf32>
    %650 = math.tanh %649 : vector<8x32xf32>
    %651 = arith.mulf %646, %650 : vector<8x32xf32>
    %c8_i32_170 = arith.constant 8 : i32
    %652 = arith.muli %c5_i32_161, %c8_i32_170 : i32
    %653 = tpu.assume_multiple %652, 8 : i32
    %654 = arith.index_cast %653 : i32 to index
    %c0_171 = arith.constant 0 : index
    %655 = vector.load %arg16[%654, %c0_171] : memref<64x32xf32, #tpu.memory_space<vmem>>, vector<8x32xf32>
    tpu.vector_store %arg16[%654, %c0_171], %651 {strides = array<i32>} : memref<64x32xf32, #tpu.memory_space<vmem>>, vector<8x32xf32>,
    %c6_i32_172 = arith.constant 6 : i32
    %656 = arith.truncf %630 : vector<8x32xf32> to vector<8x32xbf16>
    %cst_173 = arith.constant dense<0.000000e+00> : vector<8x128xf32>
    %657 = tpu.matmul %656, %2, %cst_173 {dimension_numbers = #tpu.dot_dimension_numbers<[1], [0], [0], [1], [0, 0, 1, 1], [], []>} : vector<8x32xbf16>, vector<32x128xbf16>, vector<8x128xf32> -> vector<8x128xf32>
    %658 = arith.addf %385, %657 : vector<8x128xf32>
    %cst_174 = arith.constant 5.000000e-01 : f32
    %659 = vector.broadcast %cst_174 : f32 to vector<8x128xf32>
    %660 = arith.mulf %659, %658 : vector<8x128xf32>
    %661 = math.tanh %660 : vector<8x128xf32>
    %cst_175 = arith.constant 5.000000e-01 : f32
    %662 = vector.broadcast %cst_175 : f32 to vector<8x128xf32>
    %663 = arith.mulf %662, %661 : vector<8x128xf32>
    %cst_176 = arith.constant 5.000000e-01 : f32
    %664 = vector.broadcast %cst_176 : f32 to vector<8x128xf32>
    %665 = arith.addf %663, %664 : vector<8x128xf32>
    %666 = math.tanh %658 : vector<8x128xf32>
    %667 = vector.extract_strided_slice %665 {offsets = [0, 0], sizes = [8, 32], strides = [1, 1]} : vector<8x128xf32> to vector<8x32xf32>
    %668 = vector.extract_strided_slice %665 {offsets = [0, 32], sizes = [8, 32], strides = [1, 1]} : vector<8x128xf32> to vector<8x32xf32>
    %669 = vector.extract_strided_slice %666 {offsets = [0, 64], sizes = [8, 32], strides = [1, 1]} : vector<8x128xf32> to vector<8x32xf32>
    %670 = vector.extract_strided_slice %665 {offsets = [0, 96], sizes = [8, 32], strides = [1, 1]} : vector<8x128xf32> to vector<8x32xf32>
    %671 = arith.mulf %668, %628 : vector<8x32xf32>
    %672 = arith.mulf %667, %669 : vector<8x32xf32>
    %673 = arith.addf %671, %672 : vector<8x32xf32>
    %674 = math.tanh %673 : vector<8x32xf32>
    %675 = arith.mulf %670, %674 : vector<8x32xf32>
    %676 = tpu.concatenate %675, %651 in 1 : vector<8x32xf32>, vector<8x32xf32> -> vector<8x64xf32>
    %677 = arith.truncf %676 : vector<8x64xf32> to vector<8x64xbf16>
    %cst_177 = arith.constant dense<0.000000e+00> : vector<8x128xf32>
    %678 = tpu.matmul %677, %3, %cst_177 {dimension_numbers = #tpu.dot_dimension_numbers<[1], [0], [0], [1], [0, 0, 1, 1], [], []>} : vector<8x64xbf16>, vector<64x128xbf16>, vector<8x128xf32> -> vector<8x128xf32>
    %679 = arith.addf %678, %9 : vector<8x128xf32>
    %cst_178 = arith.constant 5.000000e-01 : f32
    %680 = vector.broadcast %cst_178 : f32 to vector<8x128xf32>
    %681 = arith.mulf %680, %679 : vector<8x128xf32>
    %682 = math.tanh %681 : vector<8x128xf32>
    %cst_179 = arith.constant 5.000000e-01 : f32
    %683 = vector.broadcast %cst_179 : f32 to vector<8x128xf32>
    %684 = arith.mulf %683, %682 : vector<8x128xf32>
    %cst_180 = arith.constant 5.000000e-01 : f32
    %685 = vector.broadcast %cst_180 : f32 to vector<8x128xf32>
    %686 = arith.addf %684, %685 : vector<8x128xf32>
    %687 = math.tanh %679 : vector<8x128xf32>
    %688 = vector.extract_strided_slice %686 {offsets = [0, 0], sizes = [8, 32], strides = [1, 1]} : vector<8x128xf32> to vector<8x32xf32>
    %689 = vector.extract_strided_slice %686 {offsets = [0, 32], sizes = [8, 32], strides = [1, 1]} : vector<8x128xf32> to vector<8x32xf32>
    %690 = vector.extract_strided_slice %687 {offsets = [0, 64], sizes = [8, 32], strides = [1, 1]} : vector<8x128xf32> to vector<8x32xf32>
    %691 = vector.extract_strided_slice %686 {offsets = [0, 96], sizes = [8, 32], strides = [1, 1]} : vector<8x128xf32> to vector<8x32xf32>
    %692 = arith.mulf %689, %649 : vector<8x32xf32>
    %693 = arith.mulf %688, %690 : vector<8x32xf32>
    %694 = arith.addf %692, %693 : vector<8x32xf32>
    %695 = math.tanh %694 : vector<8x32xf32>
    %696 = arith.mulf %691, %695 : vector<8x32xf32>
    %c8_i32_181 = arith.constant 8 : i32
    %697 = arith.muli %c6_i32_172, %c8_i32_181 : i32
    %698 = tpu.assume_multiple %697, 8 : i32
    %699 = arith.index_cast %698 : i32 to index
    %c0_182 = arith.constant 0 : index
    %700 = vector.load %arg16[%699, %c0_182] : memref<64x32xf32, #tpu.memory_space<vmem>>, vector<8x32xf32>
    tpu.vector_store %arg16[%699, %c0_182], %696 {strides = array<i32>} : memref<64x32xf32, #tpu.memory_space<vmem>>, vector<8x32xf32>,
    %c7_i32_183 = arith.constant 7 : i32
    %701 = arith.truncf %675 : vector<8x32xf32> to vector<8x32xbf16>
    %cst_184 = arith.constant dense<0.000000e+00> : vector<8x128xf32>
    %702 = tpu.matmul %701, %2, %cst_184 {dimension_numbers = #tpu.dot_dimension_numbers<[1], [0], [0], [1], [0, 0, 1, 1], [], []>} : vector<8x32xbf16>, vector<32x128xbf16>, vector<8x128xf32> -> vector<8x128xf32>
    %703 = arith.addf %385, %702 : vector<8x128xf32>
    %cst_185 = arith.constant 5.000000e-01 : f32
    %704 = vector.broadcast %cst_185 : f32 to vector<8x128xf32>
    %705 = arith.mulf %704, %703 : vector<8x128xf32>
    %706 = math.tanh %705 : vector<8x128xf32>
    %cst_186 = arith.constant 5.000000e-01 : f32
    %707 = vector.broadcast %cst_186 : f32 to vector<8x128xf32>
    %708 = arith.mulf %707, %706 : vector<8x128xf32>
    %cst_187 = arith.constant 5.000000e-01 : f32
    %709 = vector.broadcast %cst_187 : f32 to vector<8x128xf32>
    %710 = arith.addf %708, %709 : vector<8x128xf32>
    %711 = math.tanh %703 : vector<8x128xf32>
    %712 = vector.extract_strided_slice %710 {offsets = [0, 0], sizes = [8, 32], strides = [1, 1]} : vector<8x128xf32> to vector<8x32xf32>
    %713 = vector.extract_strided_slice %710 {offsets = [0, 32], sizes = [8, 32], strides = [1, 1]} : vector<8x128xf32> to vector<8x32xf32>
    %714 = vector.extract_strided_slice %711 {offsets = [0, 64], sizes = [8, 32], strides = [1, 1]} : vector<8x128xf32> to vector<8x32xf32>
    %715 = vector.extract_strided_slice %710 {offsets = [0, 96], sizes = [8, 32], strides = [1, 1]} : vector<8x128xf32> to vector<8x32xf32>
    %716 = arith.mulf %713, %673 : vector<8x32xf32>
    %717 = arith.mulf %712, %714 : vector<8x32xf32>
    %718 = arith.addf %716, %717 : vector<8x32xf32>
    %719 = math.tanh %718 : vector<8x32xf32>
    %720 = arith.mulf %715, %719 : vector<8x32xf32>
    %721 = tpu.concatenate %720, %696 in 1 : vector<8x32xf32>, vector<8x32xf32> -> vector<8x64xf32>
    %722 = arith.truncf %721 : vector<8x64xf32> to vector<8x64xbf16>
    %cst_188 = arith.constant dense<0.000000e+00> : vector<8x128xf32>
    %723 = tpu.matmul %722, %3, %cst_188 {dimension_numbers = #tpu.dot_dimension_numbers<[1], [0], [0], [1], [0, 0, 1, 1], [], []>} : vector<8x64xbf16>, vector<64x128xbf16>, vector<8x128xf32> -> vector<8x128xf32>
    %724 = arith.addf %723, %9 : vector<8x128xf32>
    %cst_189 = arith.constant 5.000000e-01 : f32
    %725 = vector.broadcast %cst_189 : f32 to vector<8x128xf32>
    %726 = arith.mulf %725, %724 : vector<8x128xf32>
    %727 = math.tanh %726 : vector<8x128xf32>
    %cst_190 = arith.constant 5.000000e-01 : f32
    %728 = vector.broadcast %cst_190 : f32 to vector<8x128xf32>
    %729 = arith.mulf %728, %727 : vector<8x128xf32>
    %cst_191 = arith.constant 5.000000e-01 : f32
    %730 = vector.broadcast %cst_191 : f32 to vector<8x128xf32>
    %731 = arith.addf %729, %730 : vector<8x128xf32>
    %732 = math.tanh %724 : vector<8x128xf32>
    %733 = vector.extract_strided_slice %731 {offsets = [0, 0], sizes = [8, 32], strides = [1, 1]} : vector<8x128xf32> to vector<8x32xf32>
    %734 = vector.extract_strided_slice %731 {offsets = [0, 32], sizes = [8, 32], strides = [1, 1]} : vector<8x128xf32> to vector<8x32xf32>
    %735 = vector.extract_strided_slice %732 {offsets = [0, 64], sizes = [8, 32], strides = [1, 1]} : vector<8x128xf32> to vector<8x32xf32>
    %736 = vector.extract_strided_slice %731 {offsets = [0, 96], sizes = [8, 32], strides = [1, 1]} : vector<8x128xf32> to vector<8x32xf32>
    %737 = arith.mulf %734, %694 : vector<8x32xf32>
    %738 = arith.mulf %733, %735 : vector<8x32xf32>
    %739 = arith.addf %737, %738 : vector<8x32xf32>
    %740 = math.tanh %739 : vector<8x32xf32>
    %741 = arith.mulf %736, %740 : vector<8x32xf32>
    %c8_i32_192 = arith.constant 8 : i32
    %742 = arith.muli %c7_i32_183, %c8_i32_192 : i32
    %743 = tpu.assume_multiple %742, 8 : i32
    %744 = arith.index_cast %743 : i32 to index
    %c0_193 = arith.constant 0 : index
    %745 = vector.load %arg16[%744, %c0_193] : memref<64x32xf32, #tpu.memory_space<vmem>>, vector<8x32xf32>
    tpu.vector_store %arg16[%744, %c0_193], %741 {strides = array<i32>} : memref<64x32xf32, #tpu.memory_space<vmem>>, vector<8x32xf32>,
    %c8_i32_194 = arith.constant 8 : i32
    %c0_195 = arith.constant 0 : index
    %c0_196 = arith.constant 0 : index
    %746 = vector.load %arg16[%c0_195, %c0_196] : memref<64x32xf32, #tpu.memory_space<vmem>>, vector<64x32xf32>
    %747 = arith.truncf %746 : vector<64x32xf32> to vector<64x32xbf16>
    %c0_197 = arith.constant 0 : index
    %c0_198 = arith.constant 0 : index
    %748 = vector.load %arg12[%c0_197, %c0_198] : memref<32x4xbf16, #tpu.memory_space<vmem>>, vector<32x4xbf16>
    %cst_199 = arith.constant dense<0.000000e+00> : vector<64x4xf32>
    %749 = tpu.matmul %747, %748, %cst_199 {dimension_numbers = #tpu.dot_dimension_numbers<[1], [0], [0], [1], [0, 0, 1, 1], [], []>} : vector<64x32xbf16>, vector<32x4xbf16>, vector<64x4xf32> -> vector<64x4xf32>
    %c0_200 = arith.constant 0 : index
    %c0_201 = arith.constant 0 : index
    %750 = vector.load %arg13[%c0_200, %c0_201] : memref<1x4xf32, #tpu.memory_space<vmem>>, vector<1x4xf32>
    %751 = vector.broadcast %750 : vector<1x4xf32> to vector<64x4xf32>
    %752 = arith.addf %749, %751 : vector<64x4xf32>
    %c0_202 = arith.constant 0 : index
    %c0_203 = arith.constant 0 : index
    %c0_204 = arith.constant 0 : index
    %753 = vector.load %arg14[%c0_202, %c0_203, %c0_204] : memref<1x64x4xf32, #tpu.memory_space<vmem>>, vector<1x64x4xf32>
    %754 = vector.shape_cast %753 : vector<1x64x4xf32> to vector<64x4xf32>
    %755 = vector.shape_cast %752 : vector<64x4xf32> to vector<1x64x4xf32>
    tpu.vector_store %arg14[%c0_202, %c0_203, %c0_204], %755 {strides = array<i32>} : memref<1x64x4xf32, #tpu.memory_space<vmem>>, vector<1x64x4xf32>,
    return
  }
  func.func @transform_0(%arg0: i32) -> (i32, i32, i32) {
    %c0_i32 = arith.constant 0 : i32
    %c0_i32_0 = arith.constant 0 : i32
    %c0_i32_1 = arith.constant 0 : i32
    return %arg0, %c0_i32, %c0_i32_0 : i32, i32, i32
  }
  func.func @transform_1(%arg0: i32) -> (i32, i32) {
    %c0_i32 = arith.constant 0 : i32
    %c0_i32_0 = arith.constant 0 : i32
    %c0_i32_1 = arith.constant 0 : i32
    return %c0_i32, %c0_i32_0 : i32, i32
  }
  func.func @transform_2(%arg0: i32) -> (i32, i32) {
    %c0_i32 = arith.constant 0 : i32
    %c0_i32_0 = arith.constant 0 : i32
    %c0_i32_1 = arith.constant 0 : i32
    return %c0_i32, %c0_i32_0 : i32, i32
  }
  func.func @transform_3(%arg0: i32) -> (i32, i32) {
    %c0_i32 = arith.constant 0 : i32
    %c0_i32_0 = arith.constant 0 : i32
    %c0_i32_1 = arith.constant 0 : i32
    return %c0_i32, %c0_i32_0 : i32, i32
  }
  func.func @transform_4(%arg0: i32) -> (i32, i32) {
    %c0_i32 = arith.constant 0 : i32
    %c0_i32_0 = arith.constant 0 : i32
    %c0_i32_1 = arith.constant 0 : i32
    return %c0_i32, %c0_i32_0 : i32, i32
  }
  func.func @transform_5(%arg0: i32) -> (i32, i32) {
    %c0_i32 = arith.constant 0 : i32
    %c0_i32_0 = arith.constant 0 : i32
    %c0_i32_1 = arith.constant 0 : i32
    return %c0_i32, %c0_i32_0 : i32, i32
  }
  func.func @transform_6(%arg0: i32) -> (i32, i32) {
    %c0_i32 = arith.constant 0 : i32
    %c0_i32_0 = arith.constant 0 : i32
    %c0_i32_1 = arith.constant 0 : i32
    return %c0_i32, %c0_i32_0 : i32, i32
  }
  func.func @transform_7(%arg0: i32) -> (i32, i32) {
    %c0_i32 = arith.constant 0 : i32
    %c0_i32_0 = arith.constant 0 : i32
    %c0_i32_1 = arith.constant 0 : i32
    return %c0_i32, %c0_i32_0 : i32, i32
  }
  func.func @transform_8(%arg0: i32) -> (i32, i32) {
    %c0_i32 = arith.constant 0 : i32
    %c0_i32_0 = arith.constant 0 : i32
    %c0_i32_1 = arith.constant 0 : i32
    return %c0_i32, %c0_i32_0 : i32, i32
  }
  func.func @transform_9(%arg0: i32) -> (i32, i32) {
    %c0_i32 = arith.constant 0 : i32
    %c0_i32_0 = arith.constant 0 : i32
    %c0_i32_1 = arith.constant 0 : i32
    return %c0_i32, %c0_i32_0 : i32, i32
  }
  func.func @transform_10(%arg0: i32) -> (i32, i32) {
    %c0_i32 = arith.constant 0 : i32
    %c0_i32_0 = arith.constant 0 : i32
    %c0_i32_1 = arith.constant 0 : i32
    return %c0_i32, %c0_i32_0 : i32, i32
  }
  func.func @transform_11(%arg0: i32) -> (i32, i32) {
    %c0_i32 = arith.constant 0 : i32
    %c0_i32_0 = arith.constant 0 : i32
    %c0_i32_1 = arith.constant 0 : i32
    return %c0_i32, %c0_i32_0 : i32, i32
  }
  func.func @transform_12(%arg0: i32) -> (i32, i32) {
    %c0_i32 = arith.constant 0 : i32
    %c0_i32_0 = arith.constant 0 : i32
    %c0_i32_1 = arith.constant 0 : i32
    return %c0_i32, %c0_i32_0 : i32, i32
  }
  func.func @transform_13(%arg0: i32) -> (i32, i32, i32) {
    %c0_i32 = arith.constant 0 : i32
    %c0_i32_0 = arith.constant 0 : i32
    %c0_i32_1 = arith.constant 0 : i32
    return %arg0, %c0_i32, %c0_i32_0 : i32, i32, i32
  }
}

</mosaic_0001>

<llo_original>
// kernel: lstm_autoencoder.1
$region0: #{lstm_autoencoder.1}
  #allocation0 [shape = 'u32[]', space=smem, size = 0x4, offset = 0x4, fixed_abs, tag = 'smem constant byte address 0x4 - core index']
  #allocation1 [shape = 'u32[144,128]{1,0:T(1,128)}', space=vmem, size = 0x12000, scoped, tag = 'internal scratch']
  #allocation2 [shape = 'f32[64,128]{1,0:T(8,128)}', space=vmem, size = 0x8000, scoped, tag = 'scratch operand']
  #allocation3 [shape = 'f32[64,32]{1,0:T(8,128)}', space=vmem, size = 0x8000, scoped, tag = 'scratch operand']
  %s0 = inlined_call_operand.vmem [shape: bf16[1,64,4], index: 0, kind: input, shape index: {}]
  %s1 = inlined_call_operand.vmem [shape: bf16[4,128], index: 1, kind: input, shape index: {}]
  %s2 = inlined_call_operand.vmem [shape: bf16[32,128], index: 2, kind: input, shape index: {}]
  %s3 = inlined_call_operand.vmem [shape: f32[1,128], index: 3, kind: input, shape index: {}]
  %s4 = inlined_call_operand.vmem [shape: bf16[64,128], index: 4, kind: input, shape index: {}]
  %s5 = inlined_call_operand.vmem [shape: f32[1,128], index: 5, kind: input, shape index: {}]
  %s6 = inlined_call_operand.vmem [shape: bf16[32,128], index: 6, kind: input, shape index: {}]
  %s7 = inlined_call_operand.vmem [shape: bf16[32,128], index: 7, kind: input, shape index: {}]
  %s8 = inlined_call_operand.vmem [shape: f32[1,128], index: 8, kind: input, shape index: {}]
  %s9 = inlined_call_operand.vmem [shape: bf16[64,128], index: 9, kind: input, shape index: {}]
  %s10 = inlined_call_operand.vmem [shape: f32[1,128], index: 10, kind: input, shape index: {}]
  %s11 = inlined_call_operand.vmem [shape: bf16[32,4], index: 11, kind: input, shape index: {}]
  %s12 = inlined_call_operand.vmem [shape: f32[1,4], index: 12, kind: input, shape index: {}]
  %s13 = inlined_call_operand.vmem [shape: f32[1,64,4], index: 13, kind: output, shape index: {}]
  %s14 = sld [smem:[#allocation0]]
  $region62: #{lstm_autoencoder.1} parent=0
    _
  %s16 = ssub.s32 1, %s14
  %s17 = scalar_select 0, %s16, %s14
  // Predicated region
  $region2: #{lstm_autoencoder.1} parent=0 // pred_check
    _
  $region3: #{lstm_autoencoder.1} parent=0 // pred_check_branch
    %19 = sbr.rel (0) target = $region5
  $region4: #{lstm_autoencoder.1} parent=0 // pred_region
    _
  $region5: #{lstm_autoencoder.1} parent=0 // pred_fallthru
    _
  // Predicated region
  $region6: #{lstm_autoencoder.1} parent=0 // pred_check
    _
  $region7: #{lstm_autoencoder.1} parent=0 // pred_check_branch
    %21 = sbr.rel (0) target = $region9
  $region8: #{lstm_autoencoder.1} parent=0 // pred_region
    _
  $region9: #{lstm_autoencoder.1} parent=0 // pred_fallthru
    _
  // Predicated region
  $region10: #{lstm_autoencoder.1} parent=0 // pred_check
    _
  $region11: #{lstm_autoencoder.1} parent=0 // pred_check_branch
    %23 = sbr.rel (0) target = $region13
  $region12: #{lstm_autoencoder.1} parent=0 // pred_region
    _
  $region13: #{lstm_autoencoder.1} parent=0 // pred_fallthru
    _
  // Predicated region
  $region14: #{lstm_autoencoder.1} parent=0 // pred_check
    _
  $region15: #{lstm_autoencoder.1} parent=0 // pred_check_branch
    %25 = sbr.rel (0) target = $region17
  $region16: #{lstm_autoencoder.1} parent=0 // pred_region
    _
  $region17: #{lstm_autoencoder.1} parent=0 // pred_fallthru
    _
  // Predicated region
  $region18: #{lstm_autoencoder.1} parent=0 // pred_check
    _
  $region19: #{lstm_autoencoder.1} parent=0 // pred_check_branch
    %27 = sbr.rel (0) target = $region21
  $region20: #{lstm_autoencoder.1} parent=0 // pred_region
    _
  $region21: #{lstm_autoencoder.1} parent=0 // pred_fallthru
    _
  // Predicated region
  $region22: #{lstm_autoencoder.1} parent=0 // pred_check
    _
  $region23: #{lstm_autoencoder.1} parent=0 // pred_check_branch
    %29 = sbr.rel (0) target = $region25
  $region24: #{lstm_autoencoder.1} parent=0 // pred_region
    _
  $region25: #{lstm_autoencoder.1} parent=0 // pred_fallthru
    _
  // Predicated region
  $region26: #{lstm_autoencoder.1} parent=0 // pred_check
    _
  $region27: #{lstm_autoencoder.1} parent=0 // pred_check_branch
    %31 = sbr.rel (0) target = $region29
  $region28: #{lstm_autoencoder.1} parent=0 // pred_region
    _
  $region29: #{lstm_autoencoder.1} parent=0 // pred_fallthru
    _
  // Predicated region
  $region30: #{lstm_autoencoder.1} parent=0 // pred_check
    _
  $region31: #{lstm_autoencoder.1} parent=0 // pred_check_branch
    %33 = sbr.rel (0) target = $region33
  $region32: #{lstm_autoencoder.1} parent=0 // pred_region
    _
  $region33: #{lstm_autoencoder.1} parent=0 // pred_fallthru
    _
  // Predicated region
  $region34: #{lstm_autoencoder.1} parent=0 // pred_check
    _
  $region35: #{lstm_autoencoder.1} parent=0 // pred_check_branch
    %35 = sbr.rel (0) target = $region37
  $region36: #{lstm_autoencoder.1} parent=0 // pred_region
    _
  $region37: #{lstm_autoencoder.1} parent=0 // pred_fallthru
    _
  // Predicated region
  $region38: #{lstm_autoencoder.1} parent=0 // pred_check
    _
  $region39: #{lstm_autoencoder.1} parent=0 // pred_check_branch
    %37 = sbr.rel (0) target = $region41
  $region40: #{lstm_autoencoder.1} parent=0 // pred_region
    _
  $region41: #{lstm_autoencoder.1} parent=0 // pred_fallthru
    _
  // Predicated region
  $region42: #{lstm_autoencoder.1} parent=0 // pred_check
    _
  $region43: #{lstm_autoencoder.1} parent=0 // pred_check_branch
    %39 = sbr.rel (0) target = $region45
  $region44: #{lstm_autoencoder.1} parent=0 // pred_region
    _
  $region45: #{lstm_autoencoder.1} parent=0 // pred_fallthru
    _
  // Predicated region
  $region46: #{lstm_autoencoder.1} parent=0 // pred_check
    _
  $region47: #{lstm_autoencoder.1} parent=0 // pred_check_branch
    %41 = sbr.rel (0) target = $region49
  $region48: #{lstm_autoencoder.1} parent=0 // pred_region
    _
  $region49: #{lstm_autoencoder.1} parent=0 // pred_fallthru
    _
  // Predicated region
  $region50: #{lstm_autoencoder.1} parent=0 // pred_check
    _
  $region51: #{lstm_autoencoder.1} parent=0 // pred_check_branch
    %43 = sbr.rel (0) target = $region53
  $region52: #{lstm_autoencoder.1} parent=0 // pred_region
    _
  $region53: #{lstm_autoencoder.1} parent=0 // pred_fallthru
    _
  %v45 = vld [vmem:[%s2] sm:$0xf]
  %v46 = vld [vmem:[%s2 + $0x4] sm:$0xf]
  %v47 = vld [vmem:[%s2 + $0x8] sm:$0xf]
  %v48 = vld [vmem:[%s2 + $0xc] sm:$0xf]
  %v49 = vld [vmem:[%s4] sm:$0xf]
  %v50 = vld [vmem:[%s4 + $0x4] sm:$0xf]
  %v51 = vld [vmem:[%s4 + $0x8] sm:$0xf]
  %v52 = vld [vmem:[%s4 + $0xc] sm:$0xf]
  %v53 = vld [vmem:[%s4 + $0x10] sm:$0xf]
  %v54 = vld [vmem:[%s4 + $0x14] sm:$0xf]
  %v55 = vld [vmem:[%s4 + $0x18] sm:$0xf]
  %v56 = vld [vmem:[%s4 + $0x1c] sm:$0xf]
  %v57 = vld [vmem:[%s7] sm:$0xf]
  %v58 = vld [vmem:[%s7 + $0x4] sm:$0xf]
  %v59 = vld [vmem:[%s7 + $0x8] sm:$0xf]
  %v60 = vld [vmem:[%s7 + $0xc] sm:$0xf]
  %v61 = vld [vmem:[%s9] sm:$0xf]
  %v62 = vld [vmem:[%s9 + $0x4] sm:$0xf]
  %v63 = vld [vmem:[%s9 + $0x8] sm:$0xf]
  %v64 = vld [vmem:[%s9 + $0xc] sm:$0xf]
  %v65 = vld [vmem:[%s9 + $0x10] sm:$0xf]
  %v66 = vld [vmem:[%s9 + $0x14] sm:$0xf]
  %v67 = vld [vmem:[%s9 + $0x18] sm:$0xf]
  %v68 = vld [vmem:[%s9 + $0x1c] sm:$0xf]
  %v69 = vld [vmem:[%s5] sm:$0x1]
  %v71 = vlaneseq
  %v72 = vshrl.u32 %v71, 7
  %v73 = vsub.s32 0, %v72
  %v74 = vrot.slane %v69, %v73
  %v76 = vld [vmem:[%s10] sm:$0x1]
  %v78 = vlaneseq
  %v79 = vshrl.u32 %v78, 7
  %v80 = vsub.s32 0, %v79
  %v81 = vrot.slane %v76, %v80
  %v83 = vld [vmem:[%s0] sm:$0xf]
  %v84 = vld [vmem:[%s0 + $0x4] sm:$0xf]
  %v85 = vld [vmem:[%s0 + $0x8] sm:$0xf]
  %v86 = vld [vmem:[%s0 + $0xc] sm:$0xf]
  %v87 = vld [vmem:[%s0 + $0x10] sm:$0xf]
  %v88 = vld [vmem:[%s0 + $0x14] sm:$0xf]
  %v89 = vld [vmem:[%s0 + $0x18] sm:$0xf]
  %v90 = vld [vmem:[%s0 + $0x1c] sm:$0xf]
  %v91 = vld [vmem:[%s1] sm:$0x3]
  %v92 = vld [vmem:[%s3] sm:$0x1]
  %v94 = vlaneseq
  %v95 = vshrl.u32 %v94, 7
  %v96 = vsub.s32 0, %v95
  %v97 = vrot.slane %v92, %v96
  %v107 = vunpack.c.l.b16 %v83
  %v108 = vunpack.c.l.b16 %v84
  %v109 = vunpack.c.l.b16 %v85
  %v110 = vunpack.c.l.b16 %v86
  %v111 = vunpack.c.l.b16 %v87
  %v112 = vunpack.c.l.b16 %v88
  %v113 = vunpack.c.l.b16 %v89
  %v114 = vunpack.c.l.b16 %v90
  %v115 = vpack.c.b16 %v108, %v107
  %v116 = vpack.c.b16 %v110, %v109
  %v117 = vpack.c.b16 %v112, %v111
  %v118 = vpack.c.b16 %v114, %v113
  %vm119 = vcmask 31744
  %v121 = vsel %vm119, %v115, 0
  %v124 = vsel %vm119, %v116, 0
  %v127 = vsel %vm119, %v117, 0
  %v130 = vsel %vm119, %v118, 0
  %vm132 = vcmask 1041408
  %v134 = vsel %vm132, %v91, 0
  %136 = vmatprep.subr.bf16.mxu0 0
  %137 = vmatpush1.bf16.msra.mxu0 %v134
  %138 = vmatprep.subr.bf16.mxu0 0
  %139 = vmatpush1.bf16.msra.mxu0 0
  %140 = vmatprep.subr.bf16.mxu0 0
  %141 = vmatpush1.bf16.msra.mxu0 0
  %142 = vmatprep.subr.bf16.mxu0 0
  %143 = vmatpush1.bf16.msra.mxu0 0
  %144 = vmatprep.subr.bf16.mxu0 0
  %145 = vmatpush1.bf16.msra.mxu0 0
  %146 = vmatprep.subr.bf16.mxu0 0
  %147 = vmatpush1.bf16.msra.mxu0 0
  %148 = vmatprep.subr.bf16.mxu0 0
  %149 = vmatpush1.bf16.msra.mxu0 0
  %150 = vmatprep.subr.bf16.mxu0 0
  %151 = vmatpush1.bf16.msra.mxu0 0
  %152 = vmatprep.subr.bf16.mxu0 0
  %153 = vmatpush1.bf16.msra.mxu0 0
  %154 = vmatprep.subr.bf16.mxu0 0
  %155 = vmatpush1.bf16.msra.mxu0 0
  %156 = vmatprep.subr.bf16.mxu0 0
  %157 = vmatpush1.bf16.msra.mxu0 0
  %158 = vmatprep.subr.bf16.mxu0 0
  %159 = vmatpush1.bf16.msra.mxu0 0
  %160 = vmatprep.subr.bf16.mxu0 0
  %161 = vmatpush1.bf16.msra.mxu0 0
  %162 = vmatprep.subr.bf16.mxu0 0
  %163 = vmatpush1.bf16.msra.mxu0 0
  %164 = vmatprep.subr.bf16.mxu0 0
  %165 = vmatpush1.bf16.msra.mxu0 0
  %166 = vmatprep.subr.bf16.mxu0 0
  %167 = vmatpush1.bf16.msra.mxu0 0
  %168 = vmatprep.mubr.bf16.mxu0 0
  %169 = vmatmul.mubr.bf16.gmra.mrb[0].mxu0 %v121
  %v170 = vpop.f32.mrb[0].mxu0
  %v171 = vadd.f32 %v97, %v170
  %v172 = vpop.f32.mrb[0].mxu0
  %v173 = vpop.f32.mrb[0].mxu0
  %v174 = vadd.f32 %v97, %v173
  %v175 = vpop.f32.mrb[0].mxu0
  %176 = vmatprep.mubr.bf16.mxu0 0
  %177 = vmatmul.mubr.bf16.gmra.mrb[0].mxu0 %v124
  %v178 = vpop.f32.mrb[0].mxu0
  %v179 = vadd.f32 %v97, %v178
  %v180 = vpop.f32.mrb[0].mxu0
  %v181 = vpop.f32.mrb[0].mxu0
  %v182 = vadd.f32 %v97, %v181
  %v183 = vpop.f32.mrb[0].mxu0
  %184 = vmatprep.mubr.bf16.mxu0 0
  %185 = vmatmul.mubr.bf16.gmra.mrb[0].mxu0 %v127
  %v186 = vpop.f32.mrb[0].mxu0
  %v187 = vadd.f32 %v97, %v186
  %v188 = vpop.f32.mrb[0].mxu0
  %v189 = vpop.f32.mrb[0].mxu0
  %v190 = vadd.f32 %v97, %v189
  %v191 = vpop.f32.mrb[0].mxu0
  %192 = vmatprep.mubr.bf16.mxu0 0
  %193 = vmatmul.mubr.bf16.gmra.mrb[0].mxu0 %v130
  %v194 = vpop.f32.mrb[0].mxu0
  %v195 = vadd.f32 %v97, %v194
  %v196 = vpop.f32.mrb[0].mxu0
  %v197 = vpop.f32.mrb[0].mxu0
  %v198 = vadd.f32 %v97, %v197
  %v199 = vpop.f32.mrb[0].mxu0
  %200 = vdwg.mxu0
  %201 = vst [vmem:[#allocation2] sm:$0xff] %v171
  %202 = vst [vmem:[#allocation2 + $0x8] sm:$0xff] %v174
  %203 = vst [vmem:[#allocation2 + $0x10] sm:$0xff] %v179
  %204 = vst [vmem:[#allocation2 + $0x18] sm:$0xff] %v182
  %205 = vst [vmem:[#allocation2 + $0x20] sm:$0xff] %v187
  %206 = vst [vmem:[#allocation2 + $0x28] sm:$0xff] %v190
  %207 = vst [vmem:[#allocation2 + $0x30] sm:$0xff] %v195
  %208 = vst [vmem:[#allocation2 + $0x38] sm:$0xff] %v198
  %v209 = vld [vmem:[#allocation2] sm:$0xff]
  %v214 = vunpack.c.l.b16 %v45
  %v215 = vunpack.c.l.b16 %v46
  %v216 = vunpack.c.l.b16 %v47
  %v217 = vunpack.c.l.b16 %v48
  %v218 = vpack.c.b16 %v215, %v214
  %v219 = vpack.c.b16 %v217, %v216
  %vm222 = vcmask 261120
  %v224 = vsel %vm222, 0, 0
  %226 = vmatprep.subr.bf16.mxu0 0
  %227 = vmatpush1.bf16.msra.mxu0 %v218
  %228 = vmatprep.subr.bf16.mxu0 0
  %229 = vmatpush1.bf16.msra.mxu0 %v219
  %230 = vmatprep.subr.bf16.mxu0 0
  %231 = vmatpush1.bf16.msra.mxu0 0
  %232 = vmatprep.subr.bf16.mxu0 0
  %233 = vmatpush1.bf16.msra.mxu0 0
  %234 = vmatprep.subr.bf16.mxu0 0
  %235 = vmatpush1.bf16.msra.mxu0 0
  %236 = vmatprep.subr.bf16.mxu0 0
  %237 = vmatpush1.bf16.msra.mxu0 0
  %238 = vmatprep.subr.bf16.mxu0 0
  %239 = vmatpush1.bf16.msra.mxu0 0
  %240 = vmatprep.subr.bf16.mxu0 0
  %241 = vmatpush1.bf16.msra.mxu0 0
  %242 = vmatprep.subr.bf16.mxu0 0
  %243 = vmatpush1.bf16.msra.mxu0 0
  %244 = vmatprep.subr.bf16.mxu0 0
  %245 = vmatpush1.bf16.msra.mxu0 0
  %246 = vmatprep.subr.bf16.mxu0 0
  %247 = vmatpush1.bf16.msra.mxu0 0
  %248 = vmatprep.subr.bf16.mxu0 0
  %249 = vmatpush1.bf16.msra.mxu0 0
  %250 = vmatprep.subr.bf16.mxu0 0
  %251 = vmatpush1.bf16.msra.mxu0 0
  %252 = vmatprep.subr.bf16.mxu0 0
  %253 = vmatpush1.bf16.msra.mxu0 0
  %254 = vmatprep.subr.bf16.mxu0 0
  %255 = vmatpush1.bf16.msra.mxu0 0
  %256 = vmatprep.subr.bf16.mxu0 0
  %257 = vmatpush1.bf16.msra.mxu0 0
  %258 = vmatprep.mubr.bf16.mxu0 0
  %259 = vmatmul.mubr.bf16.gmra.mrb[0].mxu0 %v224
  %v260 = vpop.f32.mrb[0].mxu0
  %v261 = vadd.f32 0.0, %v260
  %v262 = vpop.f32.mrb[0].mxu0
  %v263 = vpop.f32.mrb[0].mxu0
  %v264 = vpop.f32.mrb[0].mxu0
  %265 = vdwg.mxu0
  %v266 = vadd.f32 %v209, %v261
  %v267 = vmul.f32 %v266, 0.5
  %v268 = vtanh.pop %v267
  %v269 = vmul.f32 %v268, 0.5
  %v270 = vadd.f32 %v269, 0.5
  %v271 = vtanh.pop %v266
  %v272 = vmul.f32 %v270, 0.0
  %274 = vrot.lane.b32.xlu0 %v271, 64
  %v275 = vpop.permute.xlu0 %274
  %v277 = vmul.f32 %v270, %v275
  %279 = vrot.lane.b32.xlu0 %v277, 32
  %v280 = vpop.permute.xlu0 %279
  %v282 = vadd.f32 %v272, %v280
  %v283 = vtanh.pop %v282
  %285 = vrot.lane.b32.xlu0 %v283, 64
  %v286 = vpop.permute.xlu0 %285
  %v288 = vmul.f32 %v270, %v286
  %290 = vrot.lane.b32.xlu0 %v288, 32
  %v291 = vpop.permute.xlu0 %290
  %v293 = vsel %vm222, %v291, 0.0
  %v294 = vpack.c.bf16 %v293, %v293
  %v303 = vunpack.c.l.b16 %v49
  %v304 = vunpack.c.l.b16 %v50
  %v305 = vunpack.c.l.b16 %v51
  %v306 = vunpack.c.l.b16 %v52
  %v307 = vunpack.c.l.b16 %v53
  %v308 = vunpack.c.l.b16 %v54
  %v309 = vunpack.c.l.b16 %v55
  %v310 = vunpack.c.l.b16 %v56
  %v311 = vpack.c.b16 %v304, %v303
  %v312 = vpack.c.b16 %v306, %v305
  %v313 = vpack.c.b16 %v308, %v307
  %v314 = vpack.c.b16 %v310, %v309
  %vm319 = vcmask 523264
  %v321 = vsel %vm319, %v294, 0
  %323 = vmatprep.subr.bf16.mxu0 0
  %324 = vmatpush1.bf16.msra.mxu0 %v311
  %325 = vmatprep.subr.bf16.mxu0 0
  %326 = vmatpush1.bf16.msra.mxu0 %v312
  %327 = vmatprep.subr.bf16.mxu0 0
  %328 = vmatpush1.bf16.msra.mxu0 %v313
  %329 = vmatprep.subr.bf16.mxu0 0
  %330 = vmatpush1.bf16.msra.mxu0 %v314
  %331 = vmatprep.subr.bf16.mxu0 0
  %332 = vmatpush1.bf16.msra.mxu0 0
  %333 = vmatprep.subr.bf16.mxu0 0
  %334 = vmatpush1.bf16.msra.mxu0 0
  %335 = vmatprep.subr.bf16.mxu0 0
  %336 = vmatpush1.bf16.msra.mxu0 0
  %337 = vmatprep.subr.bf16.mxu0 0
  %338 = vmatpush1.bf16.msra.mxu0 0
  %339 = vmatprep.subr.bf16.mxu0 0
  %340 = vmatpush1.bf16.msra.mxu0 0
  %341 = vmatprep.subr.bf16.mxu0 0
  %342 = vmatpush1.bf16.msra.mxu0 0
  %343 = vmatprep.subr.bf16.mxu0 0
  %344 = vmatpush1.bf16.msra.mxu0 0
  %345 = vmatprep.subr.bf16.mxu0 0
  %346 = vmatpush1.bf16.msra.mxu0 0
  %347 = vmatprep.subr.bf16.mxu0 0
  %348 = vmatpush1.bf16.msra.mxu0 0
  %349 = vmatprep.subr.bf16.mxu0 0
  %350 = vmatpush1.bf16.msra.mxu0 0
  %351 = vmatprep.subr.bf16.mxu0 0
  %352 = vmatpush1.bf16.msra.mxu0 0
  %353 = vmatprep.subr.bf16.mxu0 0
  %354 = vmatpush1.bf16.msra.mxu0 0
  %355 = vmatprep.mubr.bf16.mxu0 0
  %356 = vmatmul.mubr.bf16.gmra.mrb[0].mxu0 %v321
  %v357 = vpop.f32.mrb[0].mxu0
  %v358 = vadd.f32 %v74, %v357
  %v359 = vpop.f32.mrb[0].mxu0
  %v360 = vpop.f32.mrb[0].mxu0
  %v361 = vpop.f32.mrb[0].mxu0
  %362 = vdwg.mxu0
  %v363 = vmul.f32 %v358, 0.5
  %v364 = vtanh.pop %v363
  %v365 = vmul.f32 %v364, 0.5
  %v366 = vadd.f32 %v365, 0.5
  %v367 = vtanh.pop %v358
  %v368 = vmul.f32 %v366, 0.0
  %370 = vrot.lane.b32.xlu0 %v367, 64
  %v371 = vpop.permute.xlu0 %370
  %v373 = vmul.f32 %v366, %v371
  %375 = vrot.lane.b32.xlu0 %v373, 32
  %v376 = vpop.permute.xlu0 %375
  %v378 = vadd.f32 %v368, %v376
  %v379 = vtanh.pop %v378
  %381 = vrot.lane.b32.xlu0 %v379, 64
  %v382 = vpop.permute.xlu0 %381
  %v384 = vmul.f32 %v366, %v382
  %s385 = scalar_lea.vmem [#allocation2], 8
  %v386 = vld [vmem:[%s385] sm:$0xff]
  %v387 = vpack.c.bf16 %v288, %v288
  %389 = vrot.lane.b32.xlu0 %v387, 32
  %v390 = vpop.permute.xlu0 %389
  %v392 = vsel %vm222, %v390, 0
  %394 = vmatprep.subr.bf16.mxu0 0
  %395 = vmatpush1.bf16.msra.mxu0 %v218
  %396 = vmatprep.subr.bf16.mxu0 0
  %397 = vmatpush1.bf16.msra.mxu0 %v219
  %398 = vmatprep.subr.bf16.mxu0 0
  %399 = vmatpush1.bf16.msra.mxu0 0
  %400 = vmatprep.subr.bf16.mxu0 0
  %401 = vmatpush1.bf16.msra.mxu0 0
  %402 = vmatprep.subr.bf16.mxu0 0
  %403 = vmatpush1.bf16.msra.mxu0 0
  %404 = vmatprep.subr.bf16.mxu0 0
  %405 = vmatpush1.bf16.msra.mxu0 0
  %406 = vmatprep.subr.bf16.mxu0 0
  %407 = vmatpush1.bf16.msra.mxu0 0
  %408 = vmatprep.subr.bf16.mxu0 0
  %409 = vmatpush1.bf16.msra.mxu0 0
  %410 = vmatprep.subr.bf16.mxu0 0
  %411 = vmatpush1.bf16.msra.mxu0 0
  %412 = vmatprep.subr.bf16.mxu0 0
  %413 = vmatpush1.bf16.msra.mxu0 0
  %414 = vmatprep.subr.bf16.mxu0 0
  %415 = vmatpush1.bf16.msra.mxu0 0
  %416 = vmatprep.subr.bf16.mxu0 0
  %417 = vmatpush1.bf16.msra.mxu0 0
  %418 = vmatprep.subr.bf16.mxu0 0
  %419 = vmatpush1.bf16.msra.mxu0 0
  %420 = vmatprep.subr.bf16.mxu0 0
  %421 = vmatpush1.bf16.msra.mxu0 0
  %422 = vmatprep.subr.bf16.mxu0 0
  %423 = vmatpush1.bf16.msra.mxu0 0
  %424 = vmatprep.subr.bf16.mxu0 0
  %425 = vmatpush1.bf16.msra.mxu0 0
  %426 = vmatprep.mubr.bf16.mxu0 0
  %427 = vmatmul.mubr.bf16.gmra.mrb[0].mxu0 %v392
  %v428 = vpop.f32.mrb[0].mxu0
  %v429 = vadd.f32 0.0, %v428
  %v430 = vpop.f32.mrb[0].mxu0
  %v431 = vpop.f32.mrb[0].mxu0
  %v432 = vpop.f32.mrb[0].mxu0
  %433 = vdwg.mxu0
  %v434 = vadd.f32 %v386, %v429
  %v435 = vmul.f32 %v434, 0.5
  %v436 = vtanh.pop %v435
  %v437 = vmul.f32 %v436, 0.5
  %v438 = vadd.f32 %v437, 0.5
  %v439 = vtanh.pop %v434
  %v440 = vmul.f32 %v438, %v282
  %442 = vrot.lane.b32.xlu0 %v439, 64
  %v443 = vpop.permute.xlu0 %442
  %v445 = vmul.f32 %v438, %v443
  %447 = vrot.lane.b32.xlu0 %v445, 32
  %v448 = vpop.permute.xlu0 %447
  %v450 = vadd.f32 %v440, %v448
  %v451 = vtanh.pop %v450
  %453 = vrot.lane.b32.xlu0 %v451, 64
  %v454 = vpop.permute.xlu0 %453
  %v456 = vmul.f32 %v438, %v454
  %458 = vrot.lane.b32.xlu0 %v456, 32
  %v459 = vpop.permute.xlu0 %458
  %462 = vrot.lane.b32.xlu0 %v384, 64
  %v463 = vpop.permute.xlu0 %462
  %v465 = vsel %vm222, %v459, %v463
  %v466 = vpack.c.bf16 %v465, %v465
  %v468 = vsel %vm319, %v466, 0
  %470 = vmatprep.subr.bf16.mxu0 0
  %471 = vmatpush1.bf16.msra.mxu0 %v311
  %472 = vmatprep.subr.bf16.mxu0 0
  %473 = vmatpush1.bf16.msra.mxu0 %v312
  %474 = vmatprep.subr.bf16.mxu0 0
  %475 = vmatpush1.bf16.msra.mxu0 %v313
  %476 = vmatprep.subr.bf16.mxu0 0
  %477 = vmatpush1.bf16.msra.mxu0 %v314
  %478 = vmatprep.subr.bf16.mxu0 0
  %479 = vmatpush1.bf16.msra.mxu0 0
  %480 = vmatprep.subr.bf16.mxu0 0
  %481 = vmatpush1.bf16.msra.mxu0 0
  %482 = vmatprep.subr.bf16.mxu0 0
  %483 = vmatpush1.bf16.msra.mxu0 0
  %484 = vmatprep.subr.bf16.mxu0 0
  %485 = vmatpush1.bf16.msra.mxu0 0
  %486 = vmatprep.subr.bf16.mxu0 0
  %487 = vmatpush1.bf16.msra.mxu0 0
  %488 = vmatprep.subr.bf16.mxu0 0
  %489 = vmatpush1.bf16.msra.mxu0 0
  %490 = vmatprep.subr.bf16.mxu0 0
  %491 = vmatpush1.bf16.msra.mxu0 0
  %492 = vmatprep.subr.bf16.mxu0 0
  %493 = vmatpush1.bf16.msra.mxu0 0
  %494 = vmatprep.subr.bf16.mxu0 0
  %495 = vmatpush1.bf16.msra.mxu0 0
  %496 = vmatprep.subr.bf16.mxu0 0
  %497 = vmatpush1.bf16.msra.mxu0 0
  %498 = vmatprep.subr.bf16.mxu0 0
  %499 = vmatpush1.bf16.msra.mxu0 0
  %500 = vmatprep.subr.bf16.mxu0 0
  %501 = vmatpush1.bf16.msra.mxu0 0
  %502 = vmatprep.mubr.bf16.mxu0 0
  %503 = vmatmul.mubr.bf16.gmra.mrb[0].mxu0 %v468
  %v504 = vpop.f32.mrb[0].mxu0
  %v505 = vadd.f32 %v74, %v504
  %v506 = vpop.f32.mrb[0].mxu0
  %v507 = vpop.f32.mrb[0].mxu0
  %v508 = vpop.f32.mrb[0].mxu0
  %509 = vdwg.mxu0
  %v510 = vmul.f32 %v505, 0.5
  %v511 = vtanh.pop %v510
  %v512 = vmul.f32 %v511, 0.5
  %v513 = vadd.f32 %v512, 0.5
  %v514 = vtanh.pop %v505
  %v515 = vmul.f32 %v513, %v378
  %517 = vrot.lane.b32.xlu0 %v514, 64
  %v518 = vpop.permute.xlu0 %517
  %v520 = vmul.f32 %v513, %v518
  %522 = vrot.lane.b32.xlu0 %v520, 32
  %v523 = vpop.permute.xlu0 %522
  %v525 = vadd.f32 %v515, %v523
  %v526 = vtanh.pop %v525
  %528 = vrot.lane.b32.xlu0 %v526, 64
  %v529 = vpop.permute.xlu0 %528
  %v531 = vmul.f32 %v513, %v529
  %s532 = scalar_lea.vmem [#allocation2], 16
  %v533 = vld [vmem:[%s532] sm:$0xff]
  %v534 = vpack.c.bf16 %v456, %v456
  %536 = vrot.lane.b32.xlu0 %v534, 32
  %v537 = vpop.permute.xlu0 %536
  %v539 = vsel %vm222, %v537, 0
  %541 = vmatprep.subr.bf16.mxu0 0
  %542 = vmatpush1.bf16.msra.mxu0 %v218
  %543 = vmatprep.subr.bf16.mxu0 0
  %544 = vmatpush1.bf16.msra.mxu0 %v219
  %545 = vmatprep.subr.bf16.mxu0 0
  %546 = vmatpush1.bf16.msra.mxu0 0
  %547 = vmatprep.subr.bf16.mxu0 0
  %548 = vmatpush1.bf16.msra.mxu0 0
  %549 = vmatprep.subr.bf16.mxu0 0
  %550 = vmatpush1.bf16.msra.mxu0 0
  %551 = vmatprep.subr.bf16.mxu0 0
  %552 = vmatpush1.bf16.msra.mxu0 0
  %553 = vmatprep.subr.bf16.mxu0 0
  %554 = vmatpush1.bf16.msra.mxu0 0
  %555 = vmatprep.subr.bf16.mxu0 0
  %556 = vmatpush1.bf16.msra.mxu0 0
  %557 = vmatprep.subr.bf16.mxu0 0
  %558 = vmatpush1.bf16.msra.mxu0 0
  %559 = vmatprep.subr.bf16.mxu0 0
  %560 = vmatpush1.bf16.msra.mxu0 0
  %561 = vmatprep.subr.bf16.mxu0 0
  %562 = vmatpush1.bf16.msra.mxu0 0
  %563 = vmatprep.subr.bf16.mxu0 0
  %564 = vmatpush1.bf16.msra.mxu0 0
  %565 = vmatprep.subr.bf16.mxu0 0
  %566 = vmatpush1.bf16.msra.mxu0 0
  %567 = vmatprep.subr.bf16.mxu0 0
  %568 = vmatpush1.bf16.msra.mxu0 0
  %569 = vmatprep.subr.bf16.mxu0 0
  %570 = vmatpush1.bf16.msra.mxu0 0
  %571 = vmatprep.subr.bf16.mxu0 0
  %572 = vmatpush1.bf16.msra.mxu0 0
  %573 = vmatprep.mubr.bf16.mxu0 0
  %574 = vmatmul.mubr.bf16.gmra.mrb[0].mxu0 %v539
  %v575 = vpop.f32.mrb[0].mxu0
  %v576 = vadd.f32 0.0, %v575
  %v577 = vpop.f32.mrb[0].mxu0
  %v578 = vpop.f32.mrb[0].mxu0
  %v579 = vpop.f32.mrb[0].mxu0
  %580 = vdwg.mxu0
  %v581 = vadd.f32 %v533, %v576
  %v582 = vmul.f32 %v581, 0.5
  %v583 = vtanh.pop %v582
  %v584 = vmul.f32 %v583, 0.5
  %v585 = vadd.f32 %v584, 0.5
  %v586 = vtanh.pop %v581
  %v587 = vmul.f32 %v585, %v450
  %589 = vrot.lane.b32.xlu0 %v586, 64
  %v590 = vpop.permute.xlu0 %589
  %v592 = vmul.f32 %v585, %v590
  %594 = vrot.lane.b32.xlu0 %v592, 32
  %v595 = vpop.permute.xlu0 %594
  %v597 = vadd.f32 %v587, %v595
  %v598 = vtanh.pop %v597
  %600 = vrot.lane.b32.xlu0 %v598, 64
  %v601 = vpop.permute.xlu0 %600
  %v603 = vmul.f32 %v585, %v601
  %605 = vrot.lane.b32.xlu0 %v603, 32
  %v606 = vpop.permute.xlu0 %605
  %609 = vrot.lane.b32.xlu0 %v531, 64
  %v610 = vpop.permute.xlu0 %609
  %v612 = vsel %vm222, %v606, %v610
  %v613 = vpack.c.bf16 %v612, %v612
  %v615 = vsel %vm319, %v613, 0
  %617 = vmatprep.subr.bf16.mxu0 0
  %618 = vmatpush1.bf16.msra.mxu0 %v311
  %619 = vmatprep.subr.bf16.mxu0 0
  %620 = vmatpush1.bf16.msra.mxu0 %v312
  %621 = vmatprep.subr.bf16.mxu0 0
  %622 = vmatpush1.bf16.msra.mxu0 %v313
  %623 = vmatprep.subr.bf16.mxu0 0
  %624 = vmatpush1.bf16.msra.mxu0 %v314
  %625 = vmatprep.subr.bf16.mxu0 0
  %626 = vmatpush1.bf16.msra.mxu0 0
  %627 = vmatprep.subr.bf16.mxu0 0
  %628 = vmatpush1.bf16.msra.mxu0 0
  %629 = vmatprep.subr.bf16.mxu0 0
  %630 = vmatpush1.bf16.msra.mxu0 0
  %631 = vmatprep.subr.bf16.mxu0 0
  %632 = vmatpush1.bf16.msra.mxu0 0
  %633 = vmatprep.subr.bf16.mxu0 0
  %634 = vmatpush1.bf16.msra.mxu0 0
  %635 = vmatprep.subr.bf16.mxu0 0
  %636 = vmatpush1.bf16.msra.mxu0 0
  %637 = vmatprep.subr.bf16.mxu0 0
  %638 = vmatpush1.bf16.msra.mxu0 0
  %639 = vmatprep.subr.bf16.mxu0 0
  %640 = vmatpush1.bf16.msra.mxu0 0
  %641 = vmatprep.subr.bf16.mxu0 0
  %642 = vmatpush1.bf16.msra.mxu0 0
  %643 = vmatprep.subr.bf16.mxu0 0
  %644 = vmatpush1.bf16.msra.mxu0 0
  %645 = vmatprep.subr.bf16.mxu0 0
  %646 = vmatpush1.bf16.msra.mxu0 0
  %647 = vmatprep.subr.bf16.mxu0 0
  %648 = vmatpush1.bf16.msra.mxu0 0
  %649 = vmatprep.mubr.bf16.mxu0 0
  %650 = vmatmul.mubr.bf16.gmra.mrb[0].mxu0 %v615
  %v651 = vpop.f32.mrb[0].mxu0
  %v652 = vadd.f32 %v74, %v651
  %v653 = vpop.f32.mrb[0].mxu0
  %v654 = vpop.f32.mrb[0].mxu0
  %v655 = vpop.f32.mrb[0].mxu0
  %656 = vdwg.mxu0
  %v657 = vmul.f32 %v652, 0.5
  %v658 = vtanh.pop %v657
  %v659 = vmul.f32 %v658, 0.5
  %v660 = vadd.f32 %v659, 0.5
  %v661 = vtanh.pop %v652
  %v662 = vmul.f32 %v660, %v525
  %664 = vrot.lane.b32.xlu0 %v661, 64
  %v665 = vpop.permute.xlu0 %664
  %v667 = vmul.f32 %v660, %v665
  %669 = vrot.lane.b32.xlu0 %v667, 32
  %v670 = vpop.permute.xlu0 %669
  %v672 = vadd.f32 %v662, %v670
  %v673 = vtanh.pop %v672
  %675 = vrot.lane.b32.xlu0 %v673, 64
  %v676 = vpop.permute.xlu0 %675
  %v678 = vmul.f32 %v660, %v676
  %s679 = scalar_lea.vmem [#allocation2], 24
  %v680 = vld [vmem:[%s679] sm:$0xff]
  %v681 = vpack.c.bf16 %v603, %v603
  %683 = vrot.lane.b32.xlu0 %v681, 32
  %v684 = vpop.permute.xlu0 %683
  %v686 = vsel %vm222, %v684, 0
  %688 = vmatprep.subr.bf16.mxu0 0
  %689 = vmatpush1.bf16.msra.mxu0 %v218
  %690 = vmatprep.subr.bf16.mxu0 0
  %691 = vmatpush1.bf16.msra.mxu0 %v219
  %692 = vmatprep.subr.bf16.mxu0 0
  %693 = vmatpush1.bf16.msra.mxu0 0
  %694 = vmatprep.subr.bf16.mxu0 0
  %695 = vmatpush1.bf16.msra.mxu0 0
  %696 = vmatprep.subr.bf16.mxu0 0
  %697 = vmatpush1.bf16.msra.mxu0 0
  %698 = vmatprep.subr.bf16.mxu0 0
  %699 = vmatpush1.bf16.msra.mxu0 0
  %700 = vmatprep.subr.bf16.mxu0 0
  %701 = vmatpush1.bf16.msra.mxu0 0
  %702 = vmatprep.subr.bf16.mxu0 0
  %703 = vmatpush1.bf16.msra.mxu0 0
  %704 = vmatprep.subr.bf16.mxu0 0
  %705 = vmatpush1.bf16.msra.mxu0 0
  %706 = vmatprep.subr.bf16.mxu0 0
  %707 = vmatpush1.bf16.msra.mxu0 0
  %708 = vmatprep.subr.bf16.mxu0 0
  %709 = vmatpush1.bf16.msra.mxu0 0
  %710 = vmatprep.subr.bf16.mxu0 0
  %711 = vmatpush1.bf16.msra.mxu0 0
  %712 = vmatprep.subr.bf16.mxu0 0
  %713 = vmatpush1.bf16.msra.mxu0 0
  %714 = vmatprep.subr.bf16.mxu0 0
  %715 = vmatpush1.bf16.msra.mxu0 0
  %716 = vmatprep.subr.bf16.mxu0 0
  %717 = vmatpush1.bf16.msra.mxu0 0
  %718 = vmatprep.subr.bf16.mxu0 0
  %719 = vmatpush1.bf16.msra.mxu0 0
  %720 = vmatprep.mubr.bf16.mxu0 0
  %721 = vmatmul.mubr.bf16.gmra.mrb[0].mxu0 %v686
  %v722 = vpop.f32.mrb[0].mxu0
  %v723 = vadd.f32 0.0, %v722
  %v724 = vpop.f32.mrb[0].mxu0
  %v725 = vpop.f32.mrb[0].mxu0
  %v726 = vpop.f32.mrb[0].mxu0
  %727 = vdwg.mxu0
  %v728 = vadd.f32 %v680, %v723
  %v729 = vmul.f32 %v728, 0.5
  %v730 = vtanh.pop %v729
  %v731 = vmul.f32 %v730, 0.5
  %v732 = vadd.f32 %v731, 0.5
  %v733 = vtanh.pop %v728
  %v734 = vmul.f32 %v732, %v597
  %736 = vrot.lane.b32.xlu0 %v733, 64
  %v737 = vpop.permute.xlu0 %736
  %v739 = vmul.f32 %v732, %v737
  %741 = vrot.lane.b32.xlu0 %v739, 32
  %v742 = vpop.permute.xlu0 %741
  %v744 = vadd.f32 %v734, %v742
  %v745 = vtanh.pop %v744
  %747 = vrot.lane.b32.xlu0 %v745, 64
  %v748 = vpop.permute.xlu0 %747
  %v750 = vmul.f32 %v732, %v748
  %752 = vrot.lane.b32.xlu0 %v750, 32
  %v753 = vpop.permute.xlu0 %752
  %756 = vrot.lane.b32.xlu0 %v678, 64
  %v757 = vpop.permute.xlu0 %756
  %v759 = vsel %vm222, %v753, %v757
  %v760 = vpack.c.bf16 %v759, %v759
  %v762 = vsel %vm319, %v760, 0
  %764 = vmatprep.subr.bf16.mxu0 0
  %765 = vmatpush1.bf16.msra.mxu0 %v311
  %766 = vmatprep.subr.bf16.mxu0 0
  %767 = vmatpush1.bf16.msra.mxu0 %v312
  %768 = vmatprep.subr.bf16.mxu0 0
  %769 = vmatpush1.bf16.msra.mxu0 %v313
  %770 = vmatprep.subr.bf16.mxu0 0
  %771 = vmatpush1.bf16.msra.mxu0 %v314
  %772 = vmatprep.subr.bf16.mxu0 0
  %773 = vmatpush1.bf16.msra.mxu0 0
  %774 = vmatprep.subr.bf16.mxu0 0
  %775 = vmatpush1.bf16.msra.mxu0 0
  %776 = vmatprep.subr.bf16.mxu0 0
  %777 = vmatpush1.bf16.msra.mxu0 0
  %778 = vmatprep.subr.bf16.mxu0 0
  %779 = vmatpush1.bf16.msra.mxu0 0
  %780 = vmatprep.subr.bf16.mxu0 0
  %781 = vmatpush1.bf16.msra.mxu0 0
  %782 = vmatprep.subr.bf16.mxu0 0
  %783 = vmatpush1.bf16.msra.mxu0 0
  %784 = vmatprep.subr.bf16.mxu0 0
  %785 = vmatpush1.bf16.msra.mxu0 0
  %786 = vmatprep.subr.bf16.mxu0 0
  %787 = vmatpush1.bf16.msra.mxu0 0
  %788 = vmatprep.subr.bf16.mxu0 0
  %789 = vmatpush1.bf16.msra.mxu0 0
  %790 = vmatprep.subr.bf16.mxu0 0
  %791 = vmatpush1.bf16.msra.mxu0 0
  %792 = vmatprep.subr.bf16.mxu0 0
  %793 = vmatpush1.bf16.msra.mxu0 0
  %794 = vmatprep.subr.bf16.mxu0 0
  %795 = vmatpush1.bf16.msra.mxu0 0
  %796 = vmatprep.mubr.bf16.mxu0 0
  %797 = vmatmul.mubr.bf16.gmra.mrb[0].mxu0 %v762
  %v798 = vpop.f32.mrb[0].mxu0
  %v799 = vadd.f32 %v74, %v798
  %v800 = vpop.f32.mrb[0].mxu0
  %v801 = vpop.f32.mrb[0].mxu0
  %v802 = vpop.f32.mrb[0].mxu0
  %803 = vdwg.mxu0
  %v804 = vmul.f32 %v799, 0.5
  %v805 = vtanh.pop %v804
  %v806 = vmul.f32 %v805, 0.5
  %v807 = vadd.f32 %v806, 0.5
  %v808 = vtanh.pop %v799
  %v809 = vmul.f32 %v807, %v672
  %811 = vrot.lane.b32.xlu0 %v808, 64
  %v812 = vpop.permute.xlu0 %811
  %v814 = vmul.f32 %v807, %v812
  %816 = vrot.lane.b32.xlu0 %v814, 32
  %v817 = vpop.permute.xlu0 %816
  %v819 = vadd.f32 %v809, %v817
  %v820 = vtanh.pop %v819
  %822 = vrot.lane.b32.xlu0 %v820, 64
  %v823 = vpop.permute.xlu0 %822
  %v825 = vmul.f32 %v807, %v823
  %s826 = scalar_lea.vmem [#allocation2], 32
  %v827 = vld [vmem:[%s826] sm:$0xff]
  %v828 = vpack.c.bf16 %v750, %v750
  %830 = vrot.lane.b32.xlu0 %v828, 32
  %v831 = vpop.permute.xlu0 %830
  %v833 = vsel %vm222, %v831, 0
  %835 = vmatprep.subr.bf16.mxu0 0
  %836 = vmatpush1.bf16.msra.mxu0 %v218
  %837 = vmatprep.subr.bf16.mxu0 0
  %838 = vmatpush1.bf16.msra.mxu0 %v219
  %839 = vmatprep.subr.bf16.mxu0 0
  %840 = vmatpush1.bf16.msra.mxu0 0
  %841 = vmatprep.subr.bf16.mxu0 0
  %842 = vmatpush1.bf16.msra.mxu0 0
  %843 = vmatprep.subr.bf16.mxu0 0
  %844 = vmatpush1.bf16.msra.mxu0 0
  %845 = vmatprep.subr.bf16.mxu0 0
  %846 = vmatpush1.bf16.msra.mxu0 0
  %847 = vmatprep.subr.bf16.mxu0 0
  %848 = vmatpush1.bf16.msra.mxu0 0
  %849 = vmatprep.subr.bf16.mxu0 0
  %850 = vmatpush1.bf16.msra.mxu0 0
  %851 = vmatprep.subr.bf16.mxu0 0
  %852 = vmatpush1.bf16.msra.mxu0 0
  %853 = vmatprep.subr.bf16.mxu0 0
  %854 = vmatpush1.bf16.msra.mxu0 0
  %855 = vmatprep.subr.bf16.mxu0 0
  %856 = vmatpush1.bf16.msra.mxu0 0
  %857 = vmatprep.subr.bf16.mxu0 0
  %858 = vmatpush1.bf16.msra.mxu0 0
  %859 = vmatprep.subr.bf16.mxu0 0
  %860 = vmatpush1.bf16.msra.mxu0 0
  %861 = vmatprep.subr.bf16.mxu0 0
  %862 = vmatpush1.bf16.msra.mxu0 0
  %863 = vmatprep.subr.bf16.mxu0 0
  %864 = vmatpush1.bf16.msra.mxu0 0
  %865 = vmatprep.subr.bf16.mxu0 0
  %866 = vmatpush1.bf16.msra.mxu0 0
  %867 = vmatprep.mubr.bf16.mxu0 0
  %868 = vmatmul.mubr.bf16.gmra.mrb[0].mxu0 %v833
  %v869 = vpop.f32.mrb[0].mxu0
  %v870 = vadd.f32 0.0, %v869
  %v871 = vpop.f32.mrb[0].mxu0
  %v872 = vpop.f32.mrb[0].mxu0
  %v873 = vpop.f32.mrb[0].mxu0
  %874 = vdwg.mxu0
  %v875 = vadd.f32 %v827, %v870
  %v876 = vmul.f32 %v875, 0.5
  %v877 = vtanh.pop %v876
  %v878 = vmul.f32 %v877, 0.5
  %v879 = vadd.f32 %v878, 0.5
  %v880 = vtanh.pop %v875
  %v881 = vmul.f32 %v879, %v744
  %883 = vrot.lane.b32.xlu0 %v880, 64
  %v884 = vpop.permute.xlu0 %883
  %v886 = vmul.f32 %v879, %v884
  %888 = vrot.lane.b32.xlu0 %v886, 32
  %v889 = vpop.permute.xlu0 %888
  %v891 = vadd.f32 %v881, %v889
  %v892 = vtanh.pop %v891
  %894 = vrot.lane.b32.xlu0 %v892, 64
  %v895 = vpop.permute.xlu0 %894
  %v897 = vmul.f32 %v879, %v895
  %899 = vrot.lane.b32.xlu0 %v897, 32
  %v900 = vpop.permute.xlu0 %899
  %903 = vrot.lane.b32.xlu0 %v825, 64
  %v904 = vpop.permute.xlu0 %903
  %v906 = vsel %vm222, %v900, %v904
  %v907 = vpack.c.bf16 %v906, %v906
  %v909 = vsel %vm319, %v907, 0
  %911 = vmatprep.subr.bf16.mxu0 0
  %912 = vmatpush1.bf16.msra.mxu0 %v311
  %913 = vmatprep.subr.bf16.mxu0 0
  %914 = vmatpush1.bf16.msra.mxu0 %v312
  %915 = vmatprep.subr.bf16.mxu0 0
  %916 = vmatpush1.bf16.msra.mxu0 %v313
  %917 = vmatprep.subr.bf16.mxu0 0
  %918 = vmatpush1.bf16.msra.mxu0 %v314
  %919 = vmatprep.subr.bf16.mxu0 0
  %920 = vmatpush1.bf16.msra.mxu0 0
  %921 = vmatprep.subr.bf16.mxu0 0
  %922 = vmatpush1.bf16.msra.mxu0 0
  %923 = vmatprep.subr.bf16.mxu0 0
  %924 = vmatpush1.bf16.msra.mxu0 0
  %925 = vmatprep.subr.bf16.mxu0 0
  %926 = vmatpush1.bf16.msra.mxu0 0
  %927 = vmatprep.subr.bf16.mxu0 0
  %928 = vmatpush1.bf16.msra.mxu0 0
  %929 = vmatprep.subr.bf16.mxu0 0
  %930 = vmatpush1.bf16.msra.mxu0 0
  %931 = vmatprep.subr.bf16.mxu0 0
  %932 = vmatpush1.bf16.msra.mxu0 0
  %933 = vmatprep.subr.bf16.mxu0 0
  %934 = vmatpush1.bf16.msra.mxu0 0
  %935 = vmatprep.subr.bf16.mxu0 0
  %936 = vmatpush1.bf16.msra.mxu0 0
  %937 = vmatprep.subr.bf16.mxu0 0
  %938 = vmatpush1.bf16.msra.mxu0 0
  %939 = vmatprep.subr.bf16.mxu0 0
  %940 = vmatpush1.bf16.msra.mxu0 0
  %941 = vmatprep.subr.bf16.mxu0 0
  %942 = vmatpush1.bf16.msra.mxu0 0
  %943 = vmatprep.mubr.bf16.mxu0 0
  %944 = vmatmul.mubr.bf16.gmra.mrb[0].mxu0 %v909
  %v945 = vpop.f32.mrb[0].mxu0
  %v946 = vadd.f32 %v74, %v945
  %v947 = vpop.f32.mrb[0].mxu0
  %v948 = vpop.f32.mrb[0].mxu0
  %v949 = vpop.f32.mrb[0].mxu0
  %950 = vdwg.mxu0
  %v951 = vmul.f32 %v946, 0.5
  %v952 = vtanh.pop %v951
  %v953 = vmul.f32 %v952, 0.5
  %v954 = vadd.f32 %v953, 0.5
  %v955 = vtanh.pop %v946
  %v956 = vmul.f32 %v954, %v819
  %958 = vrot.lane.b32.xlu0 %v955, 64
  %v959 = vpop.permute.xlu0 %958
  %v961 = vmul.f32 %v954, %v959
  %963 = vrot.lane.b32.xlu0 %v961, 32
  %v964 = vpop.permute.xlu0 %963
  %v966 = vadd.f32 %v956, %v964
  %v967 = vtanh.pop %v966
  %969 = vrot.lane.b32.xlu0 %v967, 64
  %v970 = vpop.permute.xlu0 %969
  %v972 = vmul.f32 %v954, %v970
  %s973 = scalar_lea.vmem [#allocation2], 40
  %v974 = vld [vmem:[%s973] sm:$0xff]
  %v975 = vpack.c.bf16 %v897, %v897
  %977 = vrot.lane.b32.xlu0 %v975, 32
  %v978 = vpop.permute.xlu0 %977
  %v980 = vsel %vm222, %v978, 0
  %982 = vmatprep.subr.bf16.mxu0 0
  %983 = vmatpush1.bf16.msra.mxu0 %v218
  %984 = vmatprep.subr.bf16.mxu0 0
  %985 = vmatpush1.bf16.msra.mxu0 %v219
  %986 = vmatprep.subr.bf16.mxu0 0
  %987 = vmatpush1.bf16.msra.mxu0 0
  %988 = vmatprep.subr.bf16.mxu0 0
  %989 = vmatpush1.bf16.msra.mxu0 0
  %990 = vmatprep.subr.bf16.mxu0 0
  %991 = vmatpush1.bf16.msra.mxu0 0
  %992 = vmatprep.subr.bf16.mxu0 0
  %993 = vmatpush1.bf16.msra.mxu0 0
  %994 = vmatprep.subr.bf16.mxu0 0
  %995 = vmatpush1.bf16.msra.mxu0 0
  %996 = vmatprep.subr.bf16.mxu0 0
  %997 = vmatpush1.bf16.msra.mxu0 0
  %998 = vmatprep.subr.bf16.mxu0 0
  %999 = vmatpush1.bf16.msra.mxu0 0
  %1000 = vmatprep.subr.bf16.mxu0 0
  %1001 = vmatpush1.bf16.msra.mxu0 0
  %1002 = vmatprep.subr.bf16.mxu0 0
  %1003 = vmatpush1.bf16.msra.mxu0 0
  %1004 = vmatprep.subr.bf16.mxu0 0
  %1005 = vmatpush1.bf16.msra.mxu0 0
  %1006 = vmatprep.subr.bf16.mxu0 0
  %1007 = vmatpush1.bf16.msra.mxu0 0
  %1008 = vmatprep.subr.bf16.mxu0 0
  %1009 = vmatpush1.bf16.msra.mxu0 0
  %1010 = vmatprep.subr.bf16.mxu0 0
  %1011 = vmatpush1.bf16.msra.mxu0 0
  %1012 = vmatprep.subr.bf16.mxu0 0
  %1013 = vmatpush1.bf16.msra.mxu0 0
  %1014 = vmatprep.mubr.bf16.mxu0 0
  %1015 = vmatmul.mubr.bf16.gmra.mrb[0].mxu0 %v980
  %v1016 = vpop.f32.mrb[0].mxu0
  %v1017 = vadd.f32 0.0, %v1016
  %v1018 = vpop.f32.mrb[0].mxu0
  %v1019 = vpop.f32.mrb[0].mxu0
  %v1020 = vpop.f32.mrb[0].mxu0
  %1021 = vdwg.mxu0
  %v1022 = vadd.f32 %v974, %v1017
  %v1023 = vmul.f32 %v1022, 0.5
  %v1024 = vtanh.pop %v1023
  %v1025 = vmul.f32 %v1024, 0.5
  %v1026 = vadd.f32 %v1025, 0.5
  %v1027 = vtanh.pop %v1022
  %v1028 = vmul.f32 %v1026, %v891
  %1030 = vrot.lane.b32.xlu0 %v1027, 64
  %v1031 = vpop.permute.xlu0 %1030
  %v1033 = vmul.f32 %v1026, %v1031
  %1035 = vrot.lane.b32.xlu0 %v1033, 32
  %v1036 = vpop.permute.xlu0 %1035
  %v1038 = vadd.f32 %v1028, %v1036
  %v1039 = vtanh.pop %v1038
  %1041 = vrot.lane.b32.xlu0 %v1039, 64
  %v1042 = vpop.permute.xlu0 %1041
  %v1044 = vmul.f32 %v1026, %v1042
  %1046 = vrot.lane.b32.xlu0 %v1044, 32
  %v1047 = vpop.permute.xlu0 %1046
  %1050 = vrot.lane.b32.xlu0 %v972, 64
  %v1051 = vpop.permute.xlu0 %1050
  %v1053 = vsel %vm222, %v1047, %v1051
  %v1054 = vpack.c.bf16 %v1053, %v1053
  %v1056 = vsel %vm319, %v1054, 0
  %1058 = vmatprep.subr.bf16.mxu0 0
  %1059 = vmatpush1.bf16.msra.mxu0 %v311
  %1060 = vmatprep.subr.bf16.mxu0 0
  %1061 = vmatpush1.bf16.msra.mxu0 %v312
  %1062 = vmatprep.subr.bf16.mxu0 0
  %1063 = vmatpush1.bf16.msra.mxu0 %v313
  %1064 = vmatprep.subr.bf16.mxu0 0
  %1065 = vmatpush1.bf16.msra.mxu0 %v314
  %1066 = vmatprep.subr.bf16.mxu0 0
  %1067 = vmatpush1.bf16.msra.mxu0 0
  %1068 = vmatprep.subr.bf16.mxu0 0
  %1069 = vmatpush1.bf16.msra.mxu0 0
  %1070 = vmatprep.subr.bf16.mxu0 0
  %1071 = vmatpush1.bf16.msra.mxu0 0
  %1072 = vmatprep.subr.bf16.mxu0 0
  %1073 = vmatpush1.bf16.msra.mxu0 0
  %1074 = vmatprep.subr.bf16.mxu0 0
  %1075 = vmatpush1.bf16.msra.mxu0 0
  %1076 = vmatprep.subr.bf16.mxu0 0
  %1077 = vmatpush1.bf16.msra.mxu0 0
  %1078 = vmatprep.subr.bf16.mxu0 0
  %1079 = vmatpush1.bf16.msra.mxu0 0
  %1080 = vmatprep.subr.bf16.mxu0 0
  %1081 = vmatpush1.bf16.msra.mxu0 0
  %1082 = vmatprep.subr.bf16.mxu0 0
  %1083 = vmatpush1.bf16.msra.mxu0 0
  %1084 = vmatprep.subr.bf16.mxu0 0
  %1085 = vmatpush1.bf16.msra.mxu0 0
  %1086 = vmatprep.subr.bf16.mxu0 0
  %1087 = vmatpush1.bf16.msra.mxu0 0
  %1088 = vmatprep.subr.bf16.mxu0 0
  %1089 = vmatpush1.bf16.msra.mxu0 0
  %1090 = vmatprep.mubr.bf16.mxu0 0
  %1091 = vmatmul.mubr.bf16.gmra.mrb[0].mxu0 %v1056
  %v1092 = vpop.f32.mrb[0].mxu0
  %v1093 = vadd.f32 %v74, %v1092
  %v1094 = vpop.f32.mrb[0].mxu0
  %v1095 = vpop.f32.mrb[0].mxu0
  %v1096 = vpop.f32.mrb[0].mxu0
  %1097 = vdwg.mxu0
  %v1098 = vmul.f32 %v1093, 0.5
  %v1099 = vtanh.pop %v1098
  %v1100 = vmul.f32 %v1099, 0.5
  %v1101 = vadd.f32 %v1100, 0.5
  %v1102 = vtanh.pop %v1093
  %v1103 = vmul.f32 %v1101, %v966
  %1105 = vrot.lane.b32.xlu0 %v1102, 64
  %v1106 = vpop.permute.xlu0 %1105
  %v1108 = vmul.f32 %v1101, %v1106
  %1110 = vrot.lane.b32.xlu0 %v1108, 32
  %v1111 = vpop.permute.xlu0 %1110
  %v1113 = vadd.f32 %v1103, %v1111
  %v1114 = vtanh.pop %v1113
  %1116 = vrot.lane.b32.xlu0 %v1114, 64
  %v1117 = vpop.permute.xlu0 %1116
  %v1119 = vmul.f32 %v1101, %v1117
  %s1120 = scalar_lea.vmem [#allocation2], 48
  %v1121 = vld [vmem:[%s1120] sm:$0xff]
  %v1122 = vpack.c.bf16 %v1044, %v1044
  %1124 = vrot.lane.b32.xlu0 %v1122, 32
  %v1125 = vpop.permute.xlu0 %1124
  %v1127 = vsel %vm222, %v1125, 0
  %1129 = vmatprep.subr.bf16.mxu0 0
  %1130 = vmatpush1.bf16.msra.mxu0 %v218
  %1131 = vmatprep.subr.bf16.mxu0 0
  %1132 = vmatpush1.bf16.msra.mxu0 %v219
  %1133 = vmatprep.subr.bf16.mxu0 0
  %1134 = vmatpush1.bf16.msra.mxu0 0
  %1135 = vmatprep.subr.bf16.mxu0 0
  %1136 = vmatpush1.bf16.msra.mxu0 0
  %1137 = vmatprep.subr.bf16.mxu0 0
  %1138 = vmatpush1.bf16.msra.mxu0 0
  %1139 = vmatprep.subr.bf16.mxu0 0
  %1140 = vmatpush1.bf16.msra.mxu0 0
  %1141 = vmatprep.subr.bf16.mxu0 0
  %1142 = vmatpush1.bf16.msra.mxu0 0
  %1143 = vmatprep.subr.bf16.mxu0 0
  %1144 = vmatpush1.bf16.msra.mxu0 0
  %1145 = vmatprep.subr.bf16.mxu0 0
  %1146 = vmatpush1.bf16.msra.mxu0 0
  %1147 = vmatprep.subr.bf16.mxu0 0
  %1148 = vmatpush1.bf16.msra.mxu0 0
  %1149 = vmatprep.subr.bf16.mxu0 0
  %1150 = vmatpush1.bf16.msra.mxu0 0
  %1151 = vmatprep.subr.bf16.mxu0 0
  %1152 = vmatpush1.bf16.msra.mxu0 0
  %1153 = vmatprep.subr.bf16.mxu0 0
  %1154 = vmatpush1.bf16.msra.mxu0 0
  %1155 = vmatprep.subr.bf16.mxu0 0
  %1156 = vmatpush1.bf16.msra.mxu0 0
  %1157 = vmatprep.subr.bf16.mxu0 0
  %1158 = vmatpush1.bf16.msra.mxu0 0
  %1159 = vmatprep.subr.bf16.mxu0 0
  %1160 = vmatpush1.bf16.msra.mxu0 0
  %1161 = vmatprep.mubr.bf16.mxu0 0
  %1162 = vmatmul.mubr.bf16.gmra.mrb[0].mxu0 %v1127
  %v1163 = vpop.f32.mrb[0].mxu0
  %v1164 = vadd.f32 0.0, %v1163
  %v1165 = vpop.f32.mrb[0].mxu0
  %v1166 = vpop.f32.mrb[0].mxu0
  %v1167 = vpop.f32.mrb[0].mxu0
  %1168 = vdwg.mxu0
  %v1169 = vadd.f32 %v1121, %v1164
  %v1170 = vmul.f32 %v1169, 0.5
  %v1171 = vtanh.pop %v1170
  %v1172 = vmul.f32 %v1171, 0.5
  %v1173 = vadd.f32 %v1172, 0.5
  %v1174 = vtanh.pop %v1169
  %v1175 = vmul.f32 %v1173, %v1038
  %1177 = vrot.lane.b32.xlu0 %v1174, 64
  %v1178 = vpop.permute.xlu0 %1177
  %v1180 = vmul.f32 %v1173, %v1178
  %1182 = vrot.lane.b32.xlu0 %v1180, 32
  %v1183 = vpop.permute.xlu0 %1182
  %v1185 = vadd.f32 %v1175, %v1183
  %v1186 = vtanh.pop %v1185
  %1188 = vrot.lane.b32.xlu0 %v1186, 64
  %v1189 = vpop.permute.xlu0 %1188
  %v1191 = vmul.f32 %v1173, %v1189
  %1193 = vrot.lane.b32.xlu0 %v1191, 32
  %v1194 = vpop.permute.xlu0 %1193
  %1197 = vrot.lane.b32.xlu0 %v1119, 64
  %v1198 = vpop.permute.xlu0 %1197
  %v1200 = vsel %vm222, %v1194, %v1198
  %v1201 = vpack.c.bf16 %v1200, %v1200
  %v1203 = vsel %vm319, %v1201, 0
  %1205 = vmatprep.subr.bf16.mxu0 0
  %1206 = vmatpush1.bf16.msra.mxu0 %v311
  %1207 = vmatprep.subr.bf16.mxu0 0
  %1208 = vmatpush1.bf16.msra.mxu0 %v312
  %1209 = vmatprep.subr.bf16.mxu0 0
  %1210 = vmatpush1.bf16.msra.mxu0 %v313
  %1211 = vmatprep.subr.bf16.mxu0 0
  %1212 = vmatpush1.bf16.msra.mxu0 %v314
  %1213 = vmatprep.subr.bf16.mxu0 0
  %1214 = vmatpush1.bf16.msra.mxu0 0
  %1215 = vmatprep.subr.bf16.mxu0 0
  %1216 = vmatpush1.bf16.msra.mxu0 0
  %1217 = vmatprep.subr.bf16.mxu0 0
  %1218 = vmatpush1.bf16.msra.mxu0 0
  %1219 = vmatprep.subr.bf16.mxu0 0
  %1220 = vmatpush1.bf16.msra.mxu0 0
  %1221 = vmatprep.subr.bf16.mxu0 0
  %1222 = vmatpush1.bf16.msra.mxu0 0
  %1223 = vmatprep.subr.bf16.mxu0 0
  %1224 = vmatpush1.bf16.msra.mxu0 0
  %1225 = vmatprep.subr.bf16.mxu0 0
  %1226 = vmatpush1.bf16.msra.mxu0 0
  %1227 = vmatprep.subr.bf16.mxu0 0
  %1228 = vmatpush1.bf16.msra.mxu0 0
  %1229 = vmatprep.subr.bf16.mxu0 0
  %1230 = vmatpush1.bf16.msra.mxu0 0
  %1231 = vmatprep.subr.bf16.mxu0 0
  %1232 = vmatpush1.bf16.msra.mxu0 0
  %1233 = vmatprep.subr.bf16.mxu0 0
  %1234 = vmatpush1.bf16.msra.mxu0 0
  %1235 = vmatprep.subr.bf16.mxu0 0
  %1236 = vmatpush1.bf16.msra.mxu0 0
  %1237 = vmatprep.mubr.bf16.mxu0 0
  %1238 = vmatmul.mubr.bf16.gmra.mrb[0].mxu0 %v1203
  %v1239 = vpop.f32.mrb[0].mxu0
  %v1240 = vadd.f32 %v74, %v1239
  %v1241 = vpop.f32.mrb[0].mxu0
  %v1242 = vpop.f32.mrb[0].mxu0
  %v1243 = vpop.f32.mrb[0].mxu0
  %1244 = vdwg.mxu0
  %v1245 = vmul.f32 %v1240, 0.5
  %v1246 = vtanh.pop %v1245
  %v1247 = vmul.f32 %v1246, 0.5
  %v1248 = vadd.f32 %v1247, 0.5
  %v1249 = vtanh.pop %v1240
  %v1250 = vmul.f32 %v1248, %v1113
  %1252 = vrot.lane.b32.xlu0 %v1249, 64
  %v1253 = vpop.permute.xlu0 %1252
  %v1255 = vmul.f32 %v1248, %v1253
  %1257 = vrot.lane.b32.xlu0 %v1255, 32
  %v1258 = vpop.permute.xlu0 %1257
  %v1260 = vadd.f32 %v1250, %v1258
  %v1261 = vtanh.pop %v1260
  %1263 = vrot.lane.b32.xlu0 %v1261, 64
  %v1264 = vpop.permute.xlu0 %1263
  %v1266 = vmul.f32 %v1248, %v1264
  %s1267 = scalar_lea.vmem [#allocation2], 56
  %v1268 = vld [vmem:[%s1267] sm:$0xff]
  %v1269 = vpack.c.bf16 %v1191, %v1191
  %1271 = vrot.lane.b32.xlu0 %v1269, 32
  %v1272 = vpop.permute.xlu0 %1271
  %v1274 = vsel %vm222, %v1272, 0
  %1276 = vmatprep.subr.bf16.mxu0 0
  %1277 = vmatpush1.bf16.msra.mxu0 %v218
  %1278 = vmatprep.subr.bf16.mxu0 0
  %1279 = vmatpush1.bf16.msra.mxu0 %v219
  %1280 = vmatprep.subr.bf16.mxu0 0
  %1281 = vmatpush1.bf16.msra.mxu0 0
  %1282 = vmatprep.subr.bf16.mxu0 0
  %1283 = vmatpush1.bf16.msra.mxu0 0
  %1284 = vmatprep.subr.bf16.mxu0 0
  %1285 = vmatpush1.bf16.msra.mxu0 0
  %1286 = vmatprep.subr.bf16.mxu0 0
  %1287 = vmatpush1.bf16.msra.mxu0 0
  %1288 = vmatprep.subr.bf16.mxu0 0
  %1289 = vmatpush1.bf16.msra.mxu0 0
  %1290 = vmatprep.subr.bf16.mxu0 0
  %1291 = vmatpush1.bf16.msra.mxu0 0
  %1292 = vmatprep.subr.bf16.mxu0 0
  %1293 = vmatpush1.bf16.msra.mxu0 0
  %1294 = vmatprep.subr.bf16.mxu0 0
  %1295 = vmatpush1.bf16.msra.mxu0 0
  %1296 = vmatprep.subr.bf16.mxu0 0
  %1297 = vmatpush1.bf16.msra.mxu0 0
  %1298 = vmatprep.subr.bf16.mxu0 0
  %1299 = vmatpush1.bf16.msra.mxu0 0
  %1300 = vmatprep.subr.bf16.mxu0 0
  %1301 = vmatpush1.bf16.msra.mxu0 0
  %1302 = vmatprep.subr.bf16.mxu0 0
  %1303 = vmatpush1.bf16.msra.mxu0 0
  %1304 = vmatprep.subr.bf16.mxu0 0
  %1305 = vmatpush1.bf16.msra.mxu0 0
  %1306 = vmatprep.subr.bf16.mxu0 0
  %1307 = vmatpush1.bf16.msra.mxu0 0
  %1308 = vmatprep.mubr.bf16.mxu0 0
  %1309 = vmatmul.mubr.bf16.gmra.mrb[0].mxu0 %v1274
  %v1310 = vpop.f32.mrb[0].mxu0
  %v1311 = vadd.f32 0.0, %v1310
  %v1312 = vpop.f32.mrb[0].mxu0
  %v1313 = vpop.f32.mrb[0].mxu0
  %v1314 = vpop.f32.mrb[0].mxu0
  %1315 = vdwg.mxu0
  %v1316 = vadd.f32 %v1268, %v1311
  %v1317 = vmul.f32 %v1316, 0.5
  %v1318 = vtanh.pop %v1317
  %v1319 = vmul.f32 %v1318, 0.5
  %v1320 = vadd.f32 %v1319, 0.5
  %v1321 = vtanh.pop %v1316
  %v1322 = vmul.f32 %v1320, %v1185
  %1324 = vrot.lane.b32.xlu0 %v1321, 64
  %v1325 = vpop.permute.xlu0 %1324
  %v1327 = vmul.f32 %v1320, %v1325
  %1329 = vrot.lane.b32.xlu0 %v1327, 32
  %v1330 = vpop.permute.xlu0 %1329
  %v1332 = vadd.f32 %v1322, %v1330
  %v1333 = vtanh.pop %v1332
  %1335 = vrot.lane.b32.xlu0 %v1333, 64
  %v1336 = vpop.permute.xlu0 %1335
  %v1338 = vmul.f32 %v1320, %v1336
  %1340 = vrot.lane.b32.xlu0 %v1338, 32
  %v1341 = vpop.permute.xlu0 %1340
  %1344 = vrot.lane.b32.xlu0 %v1266, 64
  %v1345 = vpop.permute.xlu0 %1344
  %v1347 = vsel %vm222, %v1341, %v1345
  %v1348 = vpack.c.bf16 %v1347, %v1347
  %v1350 = vsel %vm319, %v1348, 0
  %1352 = vmatprep.subr.bf16.mxu0 0
  %1353 = vmatpush1.bf16.msra.mxu0 %v311
  %1354 = vmatprep.subr.bf16.mxu0 0
  %1355 = vmatpush1.bf16.msra.mxu0 %v312
  %1356 = vmatprep.subr.bf16.mxu0 0
  %1357 = vmatpush1.bf16.msra.mxu0 %v313
  %1358 = vmatprep.subr.bf16.mxu0 0
  %1359 = vmatpush1.bf16.msra.mxu0 %v314
  %1360 = vmatprep.subr.bf16.mxu0 0
  %1361 = vmatpush1.bf16.msra.mxu0 0
  %1362 = vmatprep.subr.bf16.mxu0 0
  %1363 = vmatpush1.bf16.msra.mxu0 0
  %1364 = vmatprep.subr.bf16.mxu0 0
  %1365 = vmatpush1.bf16.msra.mxu0 0
  %1366 = vmatprep.subr.bf16.mxu0 0
  %1367 = vmatpush1.bf16.msra.mxu0 0
  %1368 = vmatprep.subr.bf16.mxu0 0
  %1369 = vmatpush1.bf16.msra.mxu0 0
  %1370 = vmatprep.subr.bf16.mxu0 0
  %1371 = vmatpush1.bf16.msra.mxu0 0
  %1372 = vmatprep.subr.bf16.mxu0 0
  %1373 = vmatpush1.bf16.msra.mxu0 0
  %1374 = vmatprep.subr.bf16.mxu0 0
  %1375 = vmatpush1.bf16.msra.mxu0 0
  %1376 = vmatprep.subr.bf16.mxu0 0
  %1377 = vmatpush1.bf16.msra.mxu0 0
  %1378 = vmatprep.subr.bf16.mxu0 0
  %1379 = vmatpush1.bf16.msra.mxu0 0
  %1380 = vmatprep.subr.bf16.mxu0 0
  %1381 = vmatpush1.bf16.msra.mxu0 0
  %1382 = vmatprep.subr.bf16.mxu0 0
  %1383 = vmatpush1.bf16.msra.mxu0 0
  %1384 = vmatprep.mubr.bf16.mxu0 0
  %1385 = vmatmul.mubr.bf16.gmra.mrb[0].mxu0 %v1350
  %v1386 = vpop.f32.mrb[0].mxu0
  %v1387 = vadd.f32 %v74, %v1386
  %v1388 = vpop.f32.mrb[0].mxu0
  %v1389 = vpop.f32.mrb[0].mxu0
  %v1390 = vpop.f32.mrb[0].mxu0
  %1391 = vdwg.mxu0
  %v1392 = vmul.f32 %v1387, 0.5
  %v1393 = vtanh.pop %v1392
  %v1394 = vmul.f32 %v1393, 0.5
  %v1395 = vadd.f32 %v1394, 0.5
  %v1396 = vtanh.pop %v1387
  %v1397 = vmul.f32 %v1395, %v1260
  %1399 = vrot.lane.b32.xlu0 %v1396, 64
  %v1400 = vpop.permute.xlu0 %1399
  %v1402 = vmul.f32 %v1395, %v1400
  %1404 = vrot.lane.b32.xlu0 %v1402, 32
  %v1405 = vpop.permute.xlu0 %1404
  %v1407 = vadd.f32 %v1397, %v1405
  %v1408 = vtanh.pop %v1407
  %1410 = vrot.lane.b32.xlu0 %v1408, 64
  %v1411 = vpop.permute.xlu0 %1410
  %v1413 = vmul.f32 %v1395, %v1411
  %v1414 = vpack.c.bf16 %v1413, %v1413
  %v1415 = vld [vmem:[%s6] sm:$0xf]
  %v1416 = vld [vmem:[%s6 + $0x4] sm:$0xf]
  %v1417 = vld [vmem:[%s6 + $0x8] sm:$0xf]
  %v1418 = vld [vmem:[%s6 + $0xc] sm:$0xf]
  %v1419 = vld [vmem:[%s8] sm:$0x1]
  %v1421 = vlaneseq
  %v1422 = vshrl.u32 %v1421, 7
  %v1423 = vsub.s32 0, %v1422
  %v1424 = vrot.slane %v1419, %v1423
  %1427 = vrot.lane.b32.xlu0 %v1414, 32
  %v1428 = vpop.permute.xlu0 %1427
  %v1433 = vunpack.c.l.b16 %v1415
  %v1434 = vunpack.c.l.b16 %v1416
  %v1435 = vunpack.c.l.b16 %v1417
  %v1436 = vunpack.c.l.b16 %v1418
  %v1437 = vpack.c.b16 %v1434, %v1433
  %v1438 = vpack.c.b16 %v1436, %v1435
  %v1442 = vsel %vm222, %v1428, 0
  %1444 = vmatprep.subr.bf16.mxu0 0
  %1445 = vmatpush1.bf16.msra.mxu0 %v1437
  %1446 = vmatprep.subr.bf16.mxu0 0
  %1447 = vmatpush1.bf16.msra.mxu0 %v1438
  %1448 = vmatprep.subr.bf16.mxu0 0
  %1449 = vmatpush1.bf16.msra.mxu0 0
  %1450 = vmatprep.subr.bf16.mxu0 0
  %1451 = vmatpush1.bf16.msra.mxu0 0
  %1452 = vmatprep.subr.bf16.mxu0 0
  %1453 = vmatpush1.bf16.msra.mxu0 0
  %1454 = vmatprep.subr.bf16.mxu0 0
  %1455 = vmatpush1.bf16.msra.mxu0 0
  %1456 = vmatprep.subr.bf16.mxu0 0
  %1457 = vmatpush1.bf16.msra.mxu0 0
  %1458 = vmatprep.subr.bf16.mxu0 0
  %1459 = vmatpush1.bf16.msra.mxu0 0
  %1460 = vmatprep.subr.bf16.mxu0 0
  %1461 = vmatpush1.bf16.msra.mxu0 0
  %1462 = vmatprep.subr.bf16.mxu0 0
  %1463 = vmatpush1.bf16.msra.mxu0 0
  %1464 = vmatprep.subr.bf16.mxu0 0
  %1465 = vmatpush1.bf16.msra.mxu0 0
  %1466 = vmatprep.subr.bf16.mxu0 0
  %1467 = vmatpush1.bf16.msra.mxu0 0
  %1468 = vmatprep.subr.bf16.mxu0 0
  %1469 = vmatpush1.bf16.msra.mxu0 0
  %1470 = vmatprep.subr.bf16.mxu0 0
  %1471 = vmatpush1.bf16.msra.mxu0 0
  %1472 = vmatprep.subr.bf16.mxu0 0
  %1473 = vmatpush1.bf16.msra.mxu0 0
  %1474 = vmatprep.subr.bf16.mxu0 0
  %1475 = vmatpush1.bf16.msra.mxu0 0
  %1476 = vmatprep.mubr.bf16.mxu0 0
  %1477 = vmatmul.mubr.bf16.gmra.mrb[0].mxu0 %v1442
  %v1478 = vpop.f32.mrb[0].mxu0
  %v1479 = vadd.f32 %v1424, %v1478
  %v1480 = vpop.f32.mrb[0].mxu0
  %v1481 = vpop.f32.mrb[0].mxu0
  %v1482 = vpop.f32.mrb[0].mxu0
  %1483 = vdwg.mxu0
  %v1488 = vunpack.c.l.b16 %v57
  %v1489 = vunpack.c.l.b16 %v58
  %v1490 = vunpack.c.l.b16 %v59
  %v1491 = vunpack.c.l.b16 %v60
  %v1492 = vpack.c.b16 %v1489, %v1488
  %v1493 = vpack.c.b16 %v1491, %v1490
  %1496 = vmatprep.subr.bf16.mxu0 0
  %1497 = vmatpush1.bf16.msra.mxu0 %v1492
  %1498 = vmatprep.subr.bf16.mxu0 0
  %1499 = vmatpush1.bf16.msra.mxu0 %v1493
  %1500 = vmatprep.subr.bf16.mxu0 0
  %1501 = vmatpush1.bf16.msra.mxu0 0
  %1502 = vmatprep.subr.bf16.mxu0 0
  %1503 = vmatpush1.bf16.msra.mxu0 0
  %1504 = vmatprep.subr.bf16.mxu0 0
  %1505 = vmatpush1.bf16.msra.mxu0 0
  %1506 = vmatprep.subr.bf16.mxu0 0
  %1507 = vmatpush1.bf16.msra.mxu0 0
  %1508 = vmatprep.subr.bf16.mxu0 0
  %1509 = vmatpush1.bf16.msra.mxu0 0
  %1510 = vmatprep.subr.bf16.mxu0 0
  %1511 = vmatpush1.bf16.msra.mxu0 0
  %1512 = vmatprep.subr.bf16.mxu0 0
  %1513 = vmatpush1.bf16.msra.mxu0 0
  %1514 = vmatprep.subr.bf16.mxu0 0
  %1515 = vmatpush1.bf16.msra.mxu0 0
  %1516 = vmatprep.subr.bf16.mxu0 0
  %1517 = vmatpush1.bf16.msra.mxu0 0
  %1518 = vmatprep.subr.bf16.mxu0 0
  %1519 = vmatpush1.bf16.msra.mxu0 0
  %1520 = vmatprep.subr.bf16.mxu0 0
  %1521 = vmatpush1.bf16.msra.mxu0 0
  %1522 = vmatprep.subr.bf16.mxu0 0
  %1523 = vmatpush1.bf16.msra.mxu0 0
  %1524 = vmatprep.subr.bf16.mxu0 0
  %1525 = vmatpush1.bf16.msra.mxu0 0
  %1526 = vmatprep.subr.bf16.mxu0 0
  %1527 = vmatpush1.bf16.msra.mxu0 0
  %1528 = vmatprep.mubr.bf16.mxu0 0
  %1529 = vmatmul.mubr.bf16.gmra.mrb[0].mxu0 %v224
  %v1530 = vpop.f32.mrb[0].mxu0
  %v1531 = vadd.f32 0.0, %v1530
  %v1532 = vpop.f32.mrb[0].mxu0
  %v1533 = vpop.f32.mrb[0].mxu0
  %v1534 = vpop.f32.mrb[0].mxu0
  %1535 = vdwg.mxu0
  %v1536 = vadd.f32 %v1479, %v1531
  %v1537 = vmul.f32 %v1536, 0.5
  %v1538 = vtanh.pop %v1537
  %v1539 = vmul.f32 %v1538, 0.5
  %v1540 = vadd.f32 %v1539, 0.5
  %v1541 = vtanh.pop %v1536
  %v1542 = vmul.f32 %v1540, 0.0
  %1544 = vrot.lane.b32.xlu0 %v1541, 64
  %v1545 = vpop.permute.xlu0 %1544
  %v1547 = vmul.f32 %v1540, %v1545
  %1549 = vrot.lane.b32.xlu0 %v1547, 32
  %v1550 = vpop.permute.xlu0 %1549
  %v1552 = vadd.f32 %v1542, %v1550
  %v1553 = vtanh.pop %v1552
  %1555 = vrot.lane.b32.xlu0 %v1553, 64
  %v1556 = vpop.permute.xlu0 %1555
  %v1558 = vmul.f32 %v1540, %v1556
  %1560 = vrot.lane.b32.xlu0 %v1558, 32
  %v1561 = vpop.permute.xlu0 %1560
  %v1563 = vsel %vm222, %v1561, 0.0
  %v1564 = vpack.c.bf16 %v1563, %v1563
  %v1573 = vunpack.c.l.b16 %v61
  %v1574 = vunpack.c.l.b16 %v62
  %v1575 = vunpack.c.l.b16 %v63
  %v1576 = vunpack.c.l.b16 %v64
  %v1577 = vunpack.c.l.b16 %v65
  %v1578 = vunpack.c.l.b16 %v66
  %v1579 = vunpack.c.l.b16 %v67
  %v1580 = vunpack.c.l.b16 %v68
  %v1581 = vpack.c.b16 %v1574, %v1573
  %v1582 = vpack.c.b16 %v1576, %v1575
  %v1583 = vpack.c.b16 %v1578, %v1577
  %v1584 = vpack.c.b16 %v1580, %v1579
  %v1590 = vsel %vm319, %v1564, 0
  %1592 = vmatprep.subr.bf16.mxu0 0
  %1593 = vmatpush1.bf16.msra.mxu0 %v1581
  %1594 = vmatprep.subr.bf16.mxu0 0
  %1595 = vmatpush1.bf16.msra.mxu0 %v1582
  %1596 = vmatprep.subr.bf16.mxu0 0
  %1597 = vmatpush1.bf16.msra.mxu0 %v1583
  %1598 = vmatprep.subr.bf16.mxu0 0
  %1599 = vmatpush1.bf16.msra.mxu0 %v1584
  %1600 = vmatprep.subr.bf16.mxu0 0
  %1601 = vmatpush1.bf16.msra.mxu0 0
  %1602 = vmatprep.subr.bf16.mxu0 0
  %1603 = vmatpush1.bf16.msra.mxu0 0
  %1604 = vmatprep.subr.bf16.mxu0 0
  %1605 = vmatpush1.bf16.msra.mxu0 0
  %1606 = vmatprep.subr.bf16.mxu0 0
  %1607 = vmatpush1.bf16.msra.mxu0 0
  %1608 = vmatprep.subr.bf16.mxu0 0
  %1609 = vmatpush1.bf16.msra.mxu0 0
  %1610 = vmatprep.subr.bf16.mxu0 0
  %1611 = vmatpush1.bf16.msra.mxu0 0
  %1612 = vmatprep.subr.bf16.mxu0 0
  %1613 = vmatpush1.bf16.msra.mxu0 0
  %1614 = vmatprep.subr.bf16.mxu0 0
  %1615 = vmatpush1.bf16.msra.mxu0 0
  %1616 = vmatprep.subr.bf16.mxu0 0
  %1617 = vmatpush1.bf16.msra.mxu0 0
  %1618 = vmatprep.subr.bf16.mxu0 0
  %1619 = vmatpush1.bf16.msra.mxu0 0
  %1620 = vmatprep.subr.bf16.mxu0 0
  %1621 = vmatpush1.bf16.msra.mxu0 0
  %1622 = vmatprep.subr.bf16.mxu0 0
  %1623 = vmatpush1.bf16.msra.mxu0 0
  %1624 = vmatprep.mubr.bf16.mxu0 0
  %1625 = vmatmul.mubr.bf16.gmra.mrb[0].mxu0 %v1590
  %v1626 = vpop.f32.mrb[0].mxu0
  %v1627 = vadd.f32 %v81, %v1626
  %v1628 = vpop.f32.mrb[0].mxu0
  %v1629 = vpop.f32.mrb[0].mxu0
  %v1630 = vpop.f32.mrb[0].mxu0
  %1631 = vdwg.mxu0
  %v1632 = vmul.f32 %v1627, 0.5
  %v1633 = vtanh.pop %v1632
  %v1634 = vmul.f32 %v1633, 0.5
  %v1635 = vadd.f32 %v1634, 0.5
  %v1636 = vtanh.pop %v1627
  %v1637 = vmul.f32 %v1635, 0.0
  %1639 = vrot.lane.b32.xlu0 %v1636, 64
  %v1640 = vpop.permute.xlu0 %1639
  %v1642 = vmul.f32 %v1635, %v1640
  %1644 = vrot.lane.b32.xlu0 %v1642, 32
  %v1645 = vpop.permute.xlu0 %1644
  %v1647 = vadd.f32 %v1637, %v1645
  %v1648 = vtanh.pop %v1647
  %1650 = vrot.lane.b32.xlu0 %v1648, 64
  %v1651 = vpop.permute.xlu0 %1650
  %v1653 = vmul.f32 %v1635, %v1651
  %1655 = vrot.lane.b32.xlu0 %v1653, 32
  %v1656 = vpop.permute.xlu0 %1655
  %1658 = vst.msk [vmem:[#allocation3] sm:$0xff] %vm222, %v1656
  %v1659 = vpack.c.bf16 %v1558, %v1558
  %1661 = vrot.lane.b32.xlu0 %v1659, 32
  %v1662 = vpop.permute.xlu0 %1661
  %v1664 = vsel %vm222, %v1662, 0
  %1666 = vmatprep.subr.bf16.mxu0 0
  %1667 = vmatpush1.bf16.msra.mxu0 %v1492
  %1668 = vmatprep.subr.bf16.mxu0 0
  %1669 = vmatpush1.bf16.msra.mxu0 %v1493
  %1670 = vmatprep.subr.bf16.mxu0 0
  %1671 = vmatpush1.bf16.msra.mxu0 0
  %1672 = vmatprep.subr.bf16.mxu0 0
  %1673 = vmatpush1.bf16.msra.mxu0 0
  %1674 = vmatprep.subr.bf16.mxu0 0
  %1675 = vmatpush1.bf16.msra.mxu0 0
  %1676 = vmatprep.subr.bf16.mxu0 0
  %1677 = vmatpush1.bf16.msra.mxu0 0
  %1678 = vmatprep.subr.bf16.mxu0 0
  %1679 = vmatpush1.bf16.msra.mxu0 0
  %1680 = vmatprep.subr.bf16.mxu0 0
  %1681 = vmatpush1.bf16.msra.mxu0 0
  %1682 = vmatprep.subr.bf16.mxu0 0
  %1683 = vmatpush1.bf16.msra.mxu0 0
  %1684 = vmatprep.subr.bf16.mxu0 0
  %1685 = vmatpush1.bf16.msra.mxu0 0
  %1686 = vmatprep.subr.bf16.mxu0 0
  %1687 = vmatpush1.bf16.msra.mxu0 0
  %1688 = vmatprep.subr.bf16.mxu0 0
  %1689 = vmatpush1.bf16.msra.mxu0 0
  %1690 = vmatprep.subr.bf16.mxu0 0
  %1691 = vmatpush1.bf16.msra.mxu0 0
  %1692 = vmatprep.subr.bf16.mxu0 0
  %1693 = vmatpush1.bf16.msra.mxu0 0
  %1694 = vmatprep.subr.bf16.mxu0 0
  %1695 = vmatpush1.bf16.msra.mxu0 0
  %1696 = vmatprep.subr.bf16.mxu0 0
  %1697 = vmatpush1.bf16.msra.mxu0 0
  %1698 = vmatprep.mubr.bf16.mxu0 0
  %1699 = vmatmul.mubr.bf16.gmra.mrb[0].mxu0 %v1664
  %v1700 = vpop.f32.mrb[0].mxu0
  %v1701 = vadd.f32 0.0, %v1700
  %v1702 = vpop.f32.mrb[0].mxu0
  %v1703 = vpop.f32.mrb[0].mxu0
  %v1704 = vpop.f32.mrb[0].mxu0
  %1705 = vdwg.mxu0
  %v1706 = vadd.f32 %v1479, %v1701
  %v1707 = vmul.f32 %v1706, 0.5
  %v1708 = vtanh.pop %v1707
  %v1709 = vmul.f32 %v1708, 0.5
  %v1710 = vadd.f32 %v1709, 0.5
  %v1711 = vtanh.pop %v1706
  %v1712 = vmul.f32 %v1710, %v1552
  %1714 = vrot.lane.b32.xlu0 %v1711, 64
  %v1715 = vpop.permute.xlu0 %1714
  %v1717 = vmul.f32 %v1710, %v1715
  %1719 = vrot.lane.b32.xlu0 %v1717, 32
  %v1720 = vpop.permute.xlu0 %1719
  %v1722 = vadd.f32 %v1712, %v1720
  %v1723 = vtanh.pop %v1722
  %1725 = vrot.lane.b32.xlu0 %v1723, 64
  %v1726 = vpop.permute.xlu0 %1725
  %v1728 = vmul.f32 %v1710, %v1726
  %1730 = vrot.lane.b32.xlu0 %v1728, 32
  %v1731 = vpop.permute.xlu0 %1730
  %1733 = vrot.lane.b32.xlu0 %v1653, 64
  %v1734 = vpop.permute.xlu0 %1733
  %v1736 = vsel %vm222, %v1731, %v1734
  %v1737 = vpack.c.bf16 %v1736, %v1736
  %v1739 = vsel %vm319, %v1737, 0
  %1741 = vmatprep.subr.bf16.mxu0 0
  %1742 = vmatpush1.bf16.msra.mxu0 %v1581
  %1743 = vmatprep.subr.bf16.mxu0 0
  %1744 = vmatpush1.bf16.msra.mxu0 %v1582
  %1745 = vmatprep.subr.bf16.mxu0 0
  %1746 = vmatpush1.bf16.msra.mxu0 %v1583
  %1747 = vmatprep.subr.bf16.mxu0 0
  %1748 = vmatpush1.bf16.msra.mxu0 %v1584
  %1749 = vmatprep.subr.bf16.mxu0 0
  %1750 = vmatpush1.bf16.msra.mxu0 0
  %1751 = vmatprep.subr.bf16.mxu0 0
  %1752 = vmatpush1.bf16.msra.mxu0 0
  %1753 = vmatprep.subr.bf16.mxu0 0
  %1754 = vmatpush1.bf16.msra.mxu0 0
  %1755 = vmatprep.subr.bf16.mxu0 0
  %1756 = vmatpush1.bf16.msra.mxu0 0
  %1757 = vmatprep.subr.bf16.mxu0 0
  %1758 = vmatpush1.bf16.msra.mxu0 0
  %1759 = vmatprep.subr.bf16.mxu0 0
  %1760 = vmatpush1.bf16.msra.mxu0 0
  %1761 = vmatprep.subr.bf16.mxu0 0
  %1762 = vmatpush1.bf16.msra.mxu0 0
  %1763 = vmatprep.subr.bf16.mxu0 0
  %1764 = vmatpush1.bf16.msra.mxu0 0
  %1765 = vmatprep.subr.bf16.mxu0 0
  %1766 = vmatpush1.bf16.msra.mxu0 0
  %1767 = vmatprep.subr.bf16.mxu0 0
  %1768 = vmatpush1.bf16.msra.mxu0 0
  %1769 = vmatprep.subr.bf16.mxu0 0
  %1770 = vmatpush1.bf16.msra.mxu0 0
  %1771 = vmatprep.subr.bf16.mxu0 0
  %1772 = vmatpush1.bf16.msra.mxu0 0
  %1773 = vmatprep.mubr.bf16.mxu0 0
  %1774 = vmatmul.mubr.bf16.gmra.mrb[0].mxu0 %v1739
  %v1775 = vpop.f32.mrb[0].mxu0
  %v1776 = vadd.f32 %v81, %v1775
  %v1777 = vpop.f32.mrb[0].mxu0
  %v1778 = vpop.f32.mrb[0].mxu0
  %v1779 = vpop.f32.mrb[0].mxu0
  %1780 = vdwg.mxu0
  %v1781 = vmul.f32 %v1776, 0.5
  %v1782 = vtanh.pop %v1781
  %v1783 = vmul.f32 %v1782, 0.5
  %v1784 = vadd.f32 %v1783, 0.5
  %v1785 = vtanh.pop %v1776
  %v1786 = vmul.f32 %v1784, %v1647
  %1788 = vrot.lane.b32.xlu0 %v1785, 64
  %v1789 = vpop.permute.xlu0 %1788
  %v1791 = vmul.f32 %v1784, %v1789
  %1793 = vrot.lane.b32.xlu0 %v1791, 32
  %v1794 = vpop.permute.xlu0 %1793
  %v1796 = vadd.f32 %v1786, %v1794
  %v1797 = vtanh.pop %v1796
  %1799 = vrot.lane.b32.xlu0 %v1797, 64
  %v1800 = vpop.permute.xlu0 %1799
  %v1802 = vmul.f32 %v1784, %v1800
  %1804 = vrot.lane.b32.xlu0 %v1802, 32
  %v1805 = vpop.permute.xlu0 %1804
  %s1807 = scalar_lea.vmem [#allocation3], 8
  %1808 = vst.msk [vmem:[%s1807] sm:$0xff] %vm222, %v1805
  %v1809 = vpack.c.bf16 %v1728, %v1728
  %1811 = vrot.lane.b32.xlu0 %v1809, 32
  %v1812 = vpop.permute.xlu0 %1811
  %v1814 = vsel %vm222, %v1812, 0
  %1816 = vmatprep.subr.bf16.mxu0 0
  %1817 = vmatpush1.bf16.msra.mxu0 %v1492
  %1818 = vmatprep.subr.bf16.mxu0 0
  %1819 = vmatpush1.bf16.msra.mxu0 %v1493
  %1820 = vmatprep.subr.bf16.mxu0 0
  %1821 = vmatpush1.bf16.msra.mxu0 0
  %1822 = vmatprep.subr.bf16.mxu0 0
  %1823 = vmatpush1.bf16.msra.mxu0 0
  %1824 = vmatprep.subr.bf16.mxu0 0
  %1825 = vmatpush1.bf16.msra.mxu0 0
  %1826 = vmatprep.subr.bf16.mxu0 0
  %1827 = vmatpush1.bf16.msra.mxu0 0
  %1828 = vmatprep.subr.bf16.mxu0 0
  %1829 = vmatpush1.bf16.msra.mxu0 0
  %1830 = vmatprep.subr.bf16.mxu0 0
  %1831 = vmatpush1.bf16.msra.mxu0 0
  %1832 = vmatprep.subr.bf16.mxu0 0
  %1833 = vmatpush1.bf16.msra.mxu0 0
  %1834 = vmatprep.subr.bf16.mxu0 0
  %1835 = vmatpush1.bf16.msra.mxu0 0
  %1836 = vmatprep.subr.bf16.mxu0 0
  %1837 = vmatpush1.bf16.msra.mxu0 0
  %1838 = vmatprep.subr.bf16.mxu0 0
  %1839 = vmatpush1.bf16.msra.mxu0 0
  %1840 = vmatprep.subr.bf16.mxu0 0
  %1841 = vmatpush1.bf16.msra.mxu0 0
  %1842 = vmatprep.subr.bf16.mxu0 0
  %1843 = vmatpush1.bf16.msra.mxu0 0
  %1844 = vmatprep.subr.bf16.mxu0 0
  %1845 = vmatpush1.bf16.msra.mxu0 0
  %1846 = vmatprep.subr.bf16.mxu0 0
  %1847 = vmatpush1.bf16.msra.mxu0 0
  %1848 = vmatprep.mubr.bf16.mxu0 0
  %1849 = vmatmul.mubr.bf16.gmra.mrb[0].mxu0 %v1814
  %v1850 = vpop.f32.mrb[0].mxu0
  %v1851 = vadd.f32 0.0, %v1850
  %v1852 = vpop.f32.mrb[0].mxu0
  %v1853 = vpop.f32.mrb[0].mxu0
  %v1854 = vpop.f32.mrb[0].mxu0
  %1855 = vdwg.mxu0
  %v1856 = vadd.f32 %v1479, %v1851
  %v1857 = vmul.f32 %v1856, 0.5
  %v1858 = vtanh.pop %v1857
  %v1859 = vmul.f32 %v1858, 0.5
  %v1860 = vadd.f32 %v1859, 0.5
  %v1861 = vtanh.pop %v1856
  %v1862 = vmul.f32 %v1860, %v1722
  %1864 = vrot.lane.b32.xlu0 %v1861, 64
  %v1865 = vpop.permute.xlu0 %1864
  %v1867 = vmul.f32 %v1860, %v1865
  %1869 = vrot.lane.b32.xlu0 %v1867, 32
  %v1870 = vpop.permute.xlu0 %1869
  %v1872 = vadd.f32 %v1862, %v1870
  %v1873 = vtanh.pop %v1872
  %1875 = vrot.lane.b32.xlu0 %v1873, 64
  %v1876 = vpop.permute.xlu0 %1875
  %v1878 = vmul.f32 %v1860, %v1876
  %1880 = vrot.lane.b32.xlu0 %v1878, 32
  %v1881 = vpop.permute.xlu0 %1880
  %1883 = vrot.lane.b32.xlu0 %v1802, 64
  %v1884 = vpop.permute.xlu0 %1883
  %v1886 = vsel %vm222, %v1881, %v1884
  %v1887 = vpack.c.bf16 %v1886, %v1886
  %v1889 = vsel %vm319, %v1887, 0
  %1891 = vmatprep.subr.bf16.mxu0 0
  %1892 = vmatpush1.bf16.msra.mxu0 %v1581
  %1893 = vmatprep.subr.bf16.mxu0 0
  %1894 = vmatpush1.bf16.msra.mxu0 %v1582
  %1895 = vmatprep.subr.bf16.mxu0 0
  %1896 = vmatpush1.bf16.msra.mxu0 %v1583
  %1897 = vmatprep.subr.bf16.mxu0 0
  %1898 = vmatpush1.bf16.msra.mxu0 %v1584
  %1899 = vmatprep.subr.bf16.mxu0 0
  %1900 = vmatpush1.bf16.msra.mxu0 0
  %1901 = vmatprep.subr.bf16.mxu0 0
  %1902 = vmatpush1.bf16.msra.mxu0 0
  %1903 = vmatprep.subr.bf16.mxu0 0
  %1904 = vmatpush1.bf16.msra.mxu0 0
  %1905 = vmatprep.subr.bf16.mxu0 0
  %1906 = vmatpush1.bf16.msra.mxu0 0
  %1907 = vmatprep.subr.bf16.mxu0 0
  %1908 = vmatpush1.bf16.msra.mxu0 0
  %1909 = vmatprep.subr.bf16.mxu0 0
  %1910 = vmatpush1.bf16.msra.mxu0 0
  %1911 = vmatprep.subr.bf16.mxu0 0
  %1912 = vmatpush1.bf16.msra.mxu0 0
  %1913 = vmatprep.subr.bf16.mxu0 0
  %1914 = vmatpush1.bf16.msra.mxu0 0
  %1915 = vmatprep.subr.bf16.mxu0 0
  %1916 = vmatpush1.bf16.msra.mxu0 0
  %1917 = vmatprep.subr.bf16.mxu0 0
  %1918 = vmatpush1.bf16.msra.mxu0 0
  %1919 = vmatprep.subr.bf16.mxu0 0
  %1920 = vmatpush1.bf16.msra.mxu0 0
  %1921 = vmatprep.subr.bf16.mxu0 0
  %1922 = vmatpush1.bf16.msra.mxu0 0
  %1923 = vmatprep.mubr.bf16.mxu0 0
  %1924 = vmatmul.mubr.bf16.gmra.mrb[0].mxu0 %v1889
  %v1925 = vpop.f32.mrb[0].mxu0
  %v1926 = vadd.f32 %v81, %v1925
  %v1927 = vpop.f32.mrb[0].mxu0
  %v1928 = vpop.f32.mrb[0].mxu0
  %v1929 = vpop.f32.mrb[0].mxu0
  %1930 = vdwg.mxu0
  %v1931 = vmul.f32 %v1926, 0.5
  %v1932 = vtanh.pop %v1931
  %v1933 = vmul.f32 %v1932, 0.5
  %v1934 = vadd.f32 %v1933, 0.5
  %v1935 = vtanh.pop %v1926
  %v1936 = vmul.f32 %v1934, %v1796
  %1938 = vrot.lane.b32.xlu0 %v1935, 64
  %v1939 = vpop.permute.xlu0 %1938
  %v1941 = vmul.f32 %v1934, %v1939
  %1943 = vrot.lane.b32.xlu0 %v1941, 32
  %v1944 = vpop.permute.xlu0 %1943
  %v1946 = vadd.f32 %v1936, %v1944
  %v1947 = vtanh.pop %v1946
  %1949 = vrot.lane.b32.xlu0 %v1947, 64
  %v1950 = vpop.permute.xlu0 %1949
  %v1952 = vmul.f32 %v1934, %v1950
  %1954 = vrot.lane.b32.xlu0 %v1952, 32
  %v1955 = vpop.permute.xlu0 %1954
  %s1957 = scalar_lea.vmem [#allocation3], 16
  %1958 = vst.msk [vmem:[%s1957] sm:$0xff] %vm222, %v1955
  %v1959 = vpack.c.bf16 %v1878, %v1878
  %1961 = vrot.lane.b32.xlu0 %v1959, 32
  %v1962 = vpop.permute.xlu0 %1961
  %v1964 = vsel %vm222, %v1962, 0
  %1966 = vmatprep.subr.bf16.mxu0 0
  %1967 = vmatpush1.bf16.msra.mxu0 %v1492
  %1968 = vmatprep.subr.bf16.mxu0 0
  %1969 = vmatpush1.bf16.msra.mxu0 %v1493
  %1970 = vmatprep.subr.bf16.mxu0 0
  %1971 = vmatpush1.bf16.msra.mxu0 0
  %1972 = vmatprep.subr.bf16.mxu0 0
  %1973 = vmatpush1.bf16.msra.mxu0 0
  %1974 = vmatprep.subr.bf16.mxu0 0
  %1975 = vmatpush1.bf16.msra.mxu0 0
  %1976 = vmatprep.subr.bf16.mxu0 0
  %1977 = vmatpush1.bf16.msra.mxu0 0
  %1978 = vmatprep.subr.bf16.mxu0 0
  %1979 = vmatpush1.bf16.msra.mxu0 0
  %1980 = vmatprep.subr.bf16.mxu0 0
  %1981 = vmatpush1.bf16.msra.mxu0 0
  %1982 = vmatprep.subr.bf16.mxu0 0
  %1983 = vmatpush1.bf16.msra.mxu0 0
  %1984 = vmatprep.subr.bf16.mxu0 0
  %1985 = vmatpush1.bf16.msra.mxu0 0
  %1986 = vmatprep.subr.bf16.mxu0 0
  %1987 = vmatpush1.bf16.msra.mxu0 0
  %1988 = vmatprep.subr.bf16.mxu0 0
  %1989 = vmatpush1.bf16.msra.mxu0 0
  %1990 = vmatprep.subr.bf16.mxu0 0
  %1991 = vmatpush1.bf16.msra.mxu0 0
  %1992 = vmatprep.subr.bf16.mxu0 0
  %1993 = vmatpush1.bf16.msra.mxu0 0
  %1994 = vmatprep.subr.bf16.mxu0 0
  %1995 = vmatpush1.bf16.msra.mxu0 0
  %1996 = vmatprep.subr.bf16.mxu0 0
  %1997 = vmatpush1.bf16.msra.mxu0 0
  %1998 = vmatprep.mubr.bf16.mxu0 0
  %1999 = vmatmul.mubr.bf16.gmra.mrb[0].mxu0 %v1964
  %v2000 = vpop.f32.mrb[0].mxu0
  %v2001 = vadd.f32 0.0, %v2000
  %v2002 = vpop.f32.mrb[0].mxu0
  %v2003 = vpop.f32.mrb[0].mxu0
  %v2004 = vpop.f32.mrb[0].mxu0
  %2005 = vdwg.mxu0
  %v2006 = vadd.f32 %v1479, %v2001
  %v2007 = vmul.f32 %v2006, 0.5
  %v2008 = vtanh.pop %v2007
  %v2009 = vmul.f32 %v2008, 0.5
  %v2010 = vadd.f32 %v2009, 0.5
  %v2011 = vtanh.pop %v2006
  %v2012 = vmul.f32 %v2010, %v1872
  %2014 = vrot.lane.b32.xlu0 %v2011, 64
  %v2015 = vpop.permute.xlu0 %2014
  %v2017 = vmul.f32 %v2010, %v2015
  %2019 = vrot.lane.b32.xlu0 %v2017, 32
  %v2020 = vpop.permute.xlu0 %2019
  %v2022 = vadd.f32 %v2012, %v2020
  %v2023 = vtanh.pop %v2022
  %2025 = vrot.lane.b32.xlu0 %v2023, 64
  %v2026 = vpop.permute.xlu0 %2025
  %v2028 = vmul.f32 %v2010, %v2026
  %2030 = vrot.lane.b32.xlu0 %v2028, 32
  %v2031 = vpop.permute.xlu0 %2030
  %2033 = vrot.lane.b32.xlu0 %v1952, 64
  %v2034 = vpop.permute.xlu0 %2033
  %v2036 = vsel %vm222, %v2031, %v2034
  %v2037 = vpack.c.bf16 %v2036, %v2036
  %v2039 = vsel %vm319, %v2037, 0
  %2041 = vmatprep.subr.bf16.mxu0 0
  %2042 = vmatpush1.bf16.msra.mxu0 %v1581
  %2043 = vmatprep.subr.bf16.mxu0 0
  %2044 = vmatpush1.bf16.msra.mxu0 %v1582
  %2045 = vmatprep.subr.bf16.mxu0 0
  %2046 = vmatpush1.bf16.msra.mxu0 %v1583
  %2047 = vmatprep.subr.bf16.mxu0 0
  %2048 = vmatpush1.bf16.msra.mxu0 %v1584
  %2049 = vmatprep.subr.bf16.mxu0 0
  %2050 = vmatpush1.bf16.msra.mxu0 0
  %2051 = vmatprep.subr.bf16.mxu0 0
  %2052 = vmatpush1.bf16.msra.mxu0 0
  %2053 = vmatprep.subr.bf16.mxu0 0
  %2054 = vmatpush1.bf16.msra.mxu0 0
  %2055 = vmatprep.subr.bf16.mxu0 0
  %2056 = vmatpush1.bf16.msra.mxu0 0
  %2057 = vmatprep.subr.bf16.mxu0 0
  %2058 = vmatpush1.bf16.msra.mxu0 0
  %2059 = vmatprep.subr.bf16.mxu0 0
  %2060 = vmatpush1.bf16.msra.mxu0 0
  %2061 = vmatprep.subr.bf16.mxu0 0
  %2062 = vmatpush1.bf16.msra.mxu0 0
  %2063 = vmatprep.subr.bf16.mxu0 0
  %2064 = vmatpush1.bf16.msra.mxu0 0
  %2065 = vmatprep.subr.bf16.mxu0 0
  %2066 = vmatpush1.bf16.msra.mxu0 0
  %2067 = vmatprep.subr.bf16.mxu0 0
  %2068 = vmatpush1.bf16.msra.mxu0 0
  %2069 = vmatprep.subr.bf16.mxu0 0
  %2070 = vmatpush1.bf16.msra.mxu0 0
  %2071 = vmatprep.subr.bf16.mxu0 0
  %2072 = vmatpush1.bf16.msra.mxu0 0
  %2073 = vmatprep.mubr.bf16.mxu0 0
  %2074 = vmatmul.mubr.bf16.gmra.mrb[0].mxu0 %v2039
  %v2075 = vpop.f32.mrb[0].mxu0
  %v2076 = vadd.f32 %v81, %v2075
  %v2077 = vpop.f32.mrb[0].mxu0
  %v2078 = vpop.f32.mrb[0].mxu0
  %v2079 = vpop.f32.mrb[0].mxu0
  %2080 = vdwg.mxu0
  %v2081 = vmul.f32 %v2076, 0.5
  %v2082 = vtanh.pop %v2081
  %v2083 = vmul.f32 %v2082, 0.5
  %v2084 = vadd.f32 %v2083, 0.5
  %v2085 = vtanh.pop %v2076
  %v2086 = vmul.f32 %v2084, %v1946
  %2088 = vrot.lane.b32.xlu0 %v2085, 64
  %v2089 = vpop.permute.xlu0 %2088
  %v2091 = vmul.f32 %v2084, %v2089
  %2093 = vrot.lane.b32.xlu0 %v2091, 32
  %v2094 = vpop.permute.xlu0 %2093
  %v2096 = vadd.f32 %v2086, %v2094
  %v2097 = vtanh.pop %v2096
  %2099 = vrot.lane.b32.xlu0 %v2097, 64
  %v2100 = vpop.permute.xlu0 %2099
  %v2102 = vmul.f32 %v2084, %v2100
  %2104 = vrot.lane.b32.xlu0 %v2102, 32
  %v2105 = vpop.permute.xlu0 %2104
  %s2107 = scalar_lea.vmem [#allocation3], 24
  %2108 = vst.msk [vmem:[%s2107] sm:$0xff] %vm222, %v2105
  %v2109 = vpack.c.bf16 %v2028, %v2028
  %2111 = vrot.lane.b32.xlu0 %v2109, 32
  %v2112 = vpop.permute.xlu0 %2111
  %v2114 = vsel %vm222, %v2112, 0
  %2116 = vmatprep.subr.bf16.mxu0 0
  %2117 = vmatpush1.bf16.msra.mxu0 %v1492
  %2118 = vmatprep.subr.bf16.mxu0 0
  %2119 = vmatpush1.bf16.msra.mxu0 %v1493
  %2120 = vmatprep.subr.bf16.mxu0 0
  %2121 = vmatpush1.bf16.msra.mxu0 0
  %2122 = vmatprep.subr.bf16.mxu0 0
  %2123 = vmatpush1.bf16.msra.mxu0 0
  %2124 = vmatprep.subr.bf16.mxu0 0
  %2125 = vmatpush1.bf16.msra.mxu0 0
  %2126 = vmatprep.subr.bf16.mxu0 0
  %2127 = vmatpush1.bf16.msra.mxu0 0
  %2128 = vmatprep.subr.bf16.mxu0 0
  %2129 = vmatpush1.bf16.msra.mxu0 0
  %2130 = vmatprep.subr.bf16.mxu0 0
  %2131 = vmatpush1.bf16.msra.mxu0 0
  %2132 = vmatprep.subr.bf16.mxu0 0
  %2133 = vmatpush1.bf16.msra.mxu0 0
  %2134 = vmatprep.subr.bf16.mxu0 0
  %2135 = vmatpush1.bf16.msra.mxu0 0
  %2136 = vmatprep.subr.bf16.mxu0 0
  %2137 = vmatpush1.bf16.msra.mxu0 0
  %2138 = vmatprep.subr.bf16.mxu0 0
  %2139 = vmatpush1.bf16.msra.mxu0 0
  %2140 = vmatprep.subr.bf16.mxu0 0
  %2141 = vmatpush1.bf16.msra.mxu0 0
  %2142 = vmatprep.subr.bf16.mxu0 0
  %2143 = vmatpush1.bf16.msra.mxu0 0
  %2144 = vmatprep.subr.bf16.mxu0 0
  %2145 = vmatpush1.bf16.msra.mxu0 0
  %2146 = vmatprep.subr.bf16.mxu0 0
  %2147 = vmatpush1.bf16.msra.mxu0 0
  %2148 = vmatprep.mubr.bf16.mxu0 0
  %2149 = vmatmul.mubr.bf16.gmra.mrb[0].mxu0 %v2114
  %v2150 = vpop.f32.mrb[0].mxu0
  %v2151 = vadd.f32 0.0, %v2150
  %v2152 = vpop.f32.mrb[0].mxu0
  %v2153 = vpop.f32.mrb[0].mxu0
  %v2154 = vpop.f32.mrb[0].mxu0
  %2155 = vdwg.mxu0
  %v2156 = vadd.f32 %v1479, %v2151
  %v2157 = vmul.f32 %v2156, 0.5
  %v2158 = vtanh.pop %v2157
  %v2159 = vmul.f32 %v2158, 0.5
  %v2160 = vadd.f32 %v2159, 0.5
  %v2161 = vtanh.pop %v2156
  %v2162 = vmul.f32 %v2160, %v2022
  %2164 = vrot.lane.b32.xlu0 %v2161, 64
  %v2165 = vpop.permute.xlu0 %2164
  %v2167 = vmul.f32 %v2160, %v2165
  %2169 = vrot.lane.b32.xlu0 %v2167, 32
  %v2170 = vpop.permute.xlu0 %2169
  %v2172 = vadd.f32 %v2162, %v2170
  %v2173 = vtanh.pop %v2172
  %2175 = vrot.lane.b32.xlu0 %v2173, 64
  %v2176 = vpop.permute.xlu0 %2175
  %v2178 = vmul.f32 %v2160, %v2176
  %2180 = vrot.lane.b32.xlu0 %v2178, 32
  %v2181 = vpop.permute.xlu0 %2180
  %2183 = vrot.lane.b32.xlu0 %v2102, 64
  %v2184 = vpop.permute.xlu0 %2183
  %v2186 = vsel %vm222, %v2181, %v2184
  %v2187 = vpack.c.bf16 %v2186, %v2186
  %v2189 = vsel %vm319, %v2187, 0
  %2191 = vmatprep.subr.bf16.mxu0 0
  %2192 = vmatpush1.bf16.msra.mxu0 %v1581
  %2193 = vmatprep.subr.bf16.mxu0 0
  %2194 = vmatpush1.bf16.msra.mxu0 %v1582
  %2195 = vmatprep.subr.bf16.mxu0 0
  %2196 = vmatpush1.bf16.msra.mxu0 %v1583
  %2197 = vmatprep.subr.bf16.mxu0 0
  %2198 = vmatpush1.bf16.msra.mxu0 %v1584
  %2199 = vmatprep.subr.bf16.mxu0 0
  %2200 = vmatpush1.bf16.msra.mxu0 0
  %2201 = vmatprep.subr.bf16.mxu0 0
  %2202 = vmatpush1.bf16.msra.mxu0 0
  %2203 = vmatprep.subr.bf16.mxu0 0
  %2204 = vmatpush1.bf16.msra.mxu0 0
  %2205 = vmatprep.subr.bf16.mxu0 0
  %2206 = vmatpush1.bf16.msra.mxu0 0
  %2207 = vmatprep.subr.bf16.mxu0 0
  %2208 = vmatpush1.bf16.msra.mxu0 0
  %2209 = vmatprep.subr.bf16.mxu0 0
  %2210 = vmatpush1.bf16.msra.mxu0 0
  %2211 = vmatprep.subr.bf16.mxu0 0
  %2212 = vmatpush1.bf16.msra.mxu0 0
  %2213 = vmatprep.subr.bf16.mxu0 0
  %2214 = vmatpush1.bf16.msra.mxu0 0
  %2215 = vmatprep.subr.bf16.mxu0 0
  %2216 = vmatpush1.bf16.msra.mxu0 0
  %2217 = vmatprep.subr.bf16.mxu0 0
  %2218 = vmatpush1.bf16.msra.mxu0 0
  %2219 = vmatprep.subr.bf16.mxu0 0
  %2220 = vmatpush1.bf16.msra.mxu0 0
  %2221 = vmatprep.subr.bf16.mxu0 0
  %2222 = vmatpush1.bf16.msra.mxu0 0
  %2223 = vmatprep.mubr.bf16.mxu0 0
  %2224 = vmatmul.mubr.bf16.gmra.mrb[0].mxu0 %v2189
  %v2225 = vpop.f32.mrb[0].mxu0
  %v2226 = vadd.f32 %v81, %v2225
  %v2227 = vpop.f32.mrb[0].mxu0
  %v2228 = vpop.f32.mrb[0].mxu0
  %v2229 = vpop.f32.mrb[0].mxu0
  %2230 = vdwg.mxu0
  %v2231 = vmul.f32 %v2226, 0.5
  %v2232 = vtanh.pop %v2231
  %v2233 = vmul.f32 %v2232, 0.5
  %v2234 = vadd.f32 %v2233, 0.5
  %v2235 = vtanh.pop %v2226
  %v2236 = vmul.f32 %v2234, %v2096
  %2238 = vrot.lane.b32.xlu0 %v2235, 64
  %v2239 = vpop.permute.xlu0 %2238
  %v2241 = vmul.f32 %v2234, %v2239
  %2243 = vrot.lane.b32.xlu0 %v2241, 32
  %v2244 = vpop.permute.xlu0 %2243
  %v2246 = vadd.f32 %v2236, %v2244
  %v2247 = vtanh.pop %v2246
  %2249 = vrot.lane.b32.xlu0 %v2247, 64
  %v2250 = vpop.permute.xlu0 %2249
  %v2252 = vmul.f32 %v2234, %v2250
  %2254 = vrot.lane.b32.xlu0 %v2252, 32
  %v2255 = vpop.permute.xlu0 %2254
  %s2257 = scalar_lea.vmem [#allocation3], 32
  %2258 = vst.msk [vmem:[%s2257] sm:$0xff] %vm222, %v2255
  %v2259 = vpack.c.bf16 %v2178, %v2178
  %2261 = vrot.lane.b32.xlu0 %v2259, 32
  %v2262 = vpop.permute.xlu0 %2261
  %v2264 = vsel %vm222, %v2262, 0
  %2266 = vmatprep.subr.bf16.mxu0 0
  %2267 = vmatpush1.bf16.msra.mxu0 %v1492
  %2268 = vmatprep.subr.bf16.mxu0 0
  %2269 = vmatpush1.bf16.msra.mxu0 %v1493
  %2270 = vmatprep.subr.bf16.mxu0 0
  %2271 = vmatpush1.bf16.msra.mxu0 0
  %2272 = vmatprep.subr.bf16.mxu0 0
  %2273 = vmatpush1.bf16.msra.mxu0 0
  %2274 = vmatprep.subr.bf16.mxu0 0
  %2275 = vmatpush1.bf16.msra.mxu0 0
  %2276 = vmatprep.subr.bf16.mxu0 0
  %2277 = vmatpush1.bf16.msra.mxu0 0
  %2278 = vmatprep.subr.bf16.mxu0 0
  %2279 = vmatpush1.bf16.msra.mxu0 0
  %2280 = vmatprep.subr.bf16.mxu0 0
  %2281 = vmatpush1.bf16.msra.mxu0 0
  %2282 = vmatprep.subr.bf16.mxu0 0
  %2283 = vmatpush1.bf16.msra.mxu0 0
  %2284 = vmatprep.subr.bf16.mxu0 0
  %2285 = vmatpush1.bf16.msra.mxu0 0
  %2286 = vmatprep.subr.bf16.mxu0 0
  %2287 = vmatpush1.bf16.msra.mxu0 0
  %2288 = vmatprep.subr.bf16.mxu0 0
  %2289 = vmatpush1.bf16.msra.mxu0 0
  %2290 = vmatprep.subr.bf16.mxu0 0
  %2291 = vmatpush1.bf16.msra.mxu0 0
  %2292 = vmatprep.subr.bf16.mxu0 0
  %2293 = vmatpush1.bf16.msra.mxu0 0
  %2294 = vmatprep.subr.bf16.mxu0 0
  %2295 = vmatpush1.bf16.msra.mxu0 0
  %2296 = vmatprep.subr.bf16.mxu0 0
  %2297 = vmatpush1.bf16.msra.mxu0 0
  %2298 = vmatprep.mubr.bf16.mxu0 0
  %2299 = vmatmul.mubr.bf16.gmra.mrb[0].mxu0 %v2264
  %v2300 = vpop.f32.mrb[0].mxu0
  %v2301 = vadd.f32 0.0, %v2300
  %v2302 = vpop.f32.mrb[0].mxu0
  %v2303 = vpop.f32.mrb[0].mxu0
  %v2304 = vpop.f32.mrb[0].mxu0
  %2305 = vdwg.mxu0
  %v2306 = vadd.f32 %v1479, %v2301
  %v2307 = vmul.f32 %v2306, 0.5
  %v2308 = vtanh.pop %v2307
  %v2309 = vmul.f32 %v2308, 0.5
  %v2310 = vadd.f32 %v2309, 0.5
  %v2311 = vtanh.pop %v2306
  %v2312 = vmul.f32 %v2310, %v2172
  %2314 = vrot.lane.b32.xlu0 %v2311, 64
  %v2315 = vpop.permute.xlu0 %2314
  %v2317 = vmul.f32 %v2310, %v2315
  %2319 = vrot.lane.b32.xlu0 %v2317, 32
  %v2320 = vpop.permute.xlu0 %2319
  %v2322 = vadd.f32 %v2312, %v2320
  %v2323 = vtanh.pop %v2322
  %2325 = vrot.lane.b32.xlu0 %v2323, 64
  %v2326 = vpop.permute.xlu0 %2325
  %v2328 = vmul.f32 %v2310, %v2326
  %2330 = vrot.lane.b32.xlu0 %v2328, 32
  %v2331 = vpop.permute.xlu0 %2330
  %2333 = vrot.lane.b32.xlu0 %v2252, 64
  %v2334 = vpop.permute.xlu0 %2333
  %v2336 = vsel %vm222, %v2331, %v2334
  %v2337 = vpack.c.bf16 %v2336, %v2336
  %v2339 = vsel %vm319, %v2337, 0
  %2341 = vmatprep.subr.bf16.mxu0 0
  %2342 = vmatpush1.bf16.msra.mxu0 %v1581
  %2343 = vmatprep.subr.bf16.mxu0 0
  %2344 = vmatpush1.bf16.msra.mxu0 %v1582
  %2345 = vmatprep.subr.bf16.mxu0 0
  %2346 = vmatpush1.bf16.msra.mxu0 %v1583
  %2347 = vmatprep.subr.bf16.mxu0 0
  %2348 = vmatpush1.bf16.msra.mxu0 %v1584
  %2349 = vmatprep.subr.bf16.mxu0 0
  %2350 = vmatpush1.bf16.msra.mxu0 0
  %2351 = vmatprep.subr.bf16.mxu0 0
  %2352 = vmatpush1.bf16.msra.mxu0 0
  %2353 = vmatprep.subr.bf16.mxu0 0
  %2354 = vmatpush1.bf16.msra.mxu0 0
  %2355 = vmatprep.subr.bf16.mxu0 0
  %2356 = vmatpush1.bf16.msra.mxu0 0
  %2357 = vmatprep.subr.bf16.mxu0 0
  %2358 = vmatpush1.bf16.msra.mxu0 0
  %2359 = vmatprep.subr.bf16.mxu0 0
  %2360 = vmatpush1.bf16.msra.mxu0 0
  %2361 = vmatprep.subr.bf16.mxu0 0
  %2362 = vmatpush1.bf16.msra.mxu0 0
  %2363 = vmatprep.subr.bf16.mxu0 0
  %2364 = vmatpush1.bf16.msra.mxu0 0
  %2365 = vmatprep.subr.bf16.mxu0 0
  %2366 = vmatpush1.bf16.msra.mxu0 0
  %2367 = vmatprep.subr.bf16.mxu0 0
  %2368 = vmatpush1.bf16.msra.mxu0 0
  %2369 = vmatprep.subr.bf16.mxu0 0
  %2370 = vmatpush1.bf16.msra.mxu0 0
  %2371 = vmatprep.subr.bf16.mxu0 0
  %2372 = vmatpush1.bf16.msra.mxu0 0
  %2373 = vmatprep.mubr.bf16.mxu0 0
  %2374 = vmatmul.mubr.bf16.gmra.mrb[0].mxu0 %v2339
  %v2375 = vpop.f32.mrb[0].mxu0
  %v2376 = vadd.f32 %v81, %v2375
  %v2377 = vpop.f32.mrb[0].mxu0
  %v2378 = vpop.f32.mrb[0].mxu0
  %v2379 = vpop.f32.mrb[0].mxu0
  %2380 = vdwg.mxu0
  %v2381 = vmul.f32 %v2376, 0.5
  %v2382 = vtanh.pop %v2381
  %v2383 = vmul.f32 %v2382, 0.5
  %v2384 = vadd.f32 %v2383, 0.5
  %v2385 = vtanh.pop %v2376
  %v2386 = vmul.f32 %v2384, %v2246
  %2388 = vrot.lane.b32.xlu0 %v2385, 64
  %v2389 = vpop.permute.xlu0 %2388
  %v2391 = vmul.f32 %v2384, %v2389
  %2393 = vrot.lane.b32.xlu0 %v2391, 32
  %v2394 = vpop.permute.xlu0 %2393
  %v2396 = vadd.f32 %v2386, %v2394
  %v2397 = vtanh.pop %v2396
  %2399 = vrot.lane.b32.xlu0 %v2397, 64
  %v2400 = vpop.permute.xlu0 %2399
  %v2402 = vmul.f32 %v2384, %v2400
  %2404 = vrot.lane.b32.xlu0 %v2402, 32
  %v2405 = vpop.permute.xlu0 %2404
  %s2407 = scalar_lea.vmem [#allocation3], 40
  %2408 = vst.msk [vmem:[%s2407] sm:$0xff] %vm222, %v2405
  %v2409 = vpack.c.bf16 %v2328, %v2328
  %2411 = vrot.lane.b32.xlu0 %v2409, 32
  %v2412 = vpop.permute.xlu0 %2411
  %v2414 = vsel %vm222, %v2412, 0
  %2416 = vmatprep.subr.bf16.mxu0 0
  %2417 = vmatpush1.bf16.msra.mxu0 %v1492
  %2418 = vmatprep.subr.bf16.mxu0 0
  %2419 = vmatpush1.bf16.msra.mxu0 %v1493
  %2420 = vmatprep.subr.bf16.mxu0 0
  %2421 = vmatpush1.bf16.msra.mxu0 0
  %2422 = vmatprep.subr.bf16.mxu0 0
  %2423 = vmatpush1.bf16.msra.mxu0 0
  %2424 = vmatprep.subr.bf16.mxu0 0
  %2425 = vmatpush1.bf16.msra.mxu0 0
  %2426 = vmatprep.subr.bf16.mxu0 0
  %2427 = vmatpush1.bf16.msra.mxu0 0
  %2428 = vmatprep.subr.bf16.mxu0 0
  %2429 = vmatpush1.bf16.msra.mxu0 0
  %2430 = vmatprep.subr.bf16.mxu0 0
  %2431 = vmatpush1.bf16.msra.mxu0 0
  %2432 = vmatprep.subr.bf16.mxu0 0
  %2433 = vmatpush1.bf16.msra.mxu0 0
  %2434 = vmatprep.subr.bf16.mxu0 0
  %2435 = vmatpush1.bf16.msra.mxu0 0
  %2436 = vmatprep.subr.bf16.mxu0 0
  %2437 = vmatpush1.bf16.msra.mxu0 0
  %2438 = vmatprep.subr.bf16.mxu0 0
  %2439 = vmatpush1.bf16.msra.mxu0 0
  %2440 = vmatprep.subr.bf16.mxu0 0
  %2441 = vmatpush1.bf16.msra.mxu0 0
  %2442 = vmatprep.subr.bf16.mxu0 0
  %2443 = vmatpush1.bf16.msra.mxu0 0
  %2444 = vmatprep.subr.bf16.mxu0 0
  %2445 = vmatpush1.bf16.msra.mxu0 0
  %2446 = vmatprep.subr.bf16.mxu0 0
  %2447 = vmatpush1.bf16.msra.mxu0 0
  %2448 = vmatprep.mubr.bf16.mxu0 0
  %2449 = vmatmul.mubr.bf16.gmra.mrb[0].mxu0 %v2414
  %v2450 = vpop.f32.mrb[0].mxu0
  %v2451 = vadd.f32 0.0, %v2450
  %v2452 = vpop.f32.mrb[0].mxu0
  %v2453 = vpop.f32.mrb[0].mxu0
  %v2454 = vpop.f32.mrb[0].mxu0
  %2455 = vdwg.mxu0
  %v2456 = vadd.f32 %v1479, %v2451
  %v2457 = vmul.f32 %v2456, 0.5
  %v2458 = vtanh.pop %v2457
  %v2459 = vmul.f32 %v2458, 0.5
  %v2460 = vadd.f32 %v2459, 0.5
  %v2461 = vtanh.pop %v2456
  %v2462 = vmul.f32 %v2460, %v2322
  %2464 = vrot.lane.b32.xlu0 %v2461, 64
  %v2465 = vpop.permute.xlu0 %2464
  %v2467 = vmul.f32 %v2460, %v2465
  %2469 = vrot.lane.b32.xlu0 %v2467, 32
  %v2470 = vpop.permute.xlu0 %2469
  %v2472 = vadd.f32 %v2462, %v2470
  %v2473 = vtanh.pop %v2472
  %2475 = vrot.lane.b32.xlu0 %v2473, 64
  %v2476 = vpop.permute.xlu0 %2475
  %v2478 = vmul.f32 %v2460, %v2476
  %2480 = vrot.lane.b32.xlu0 %v2478, 32
  %v2481 = vpop.permute.xlu0 %2480
  %2483 = vrot.lane.b32.xlu0 %v2402, 64
  %v2484 = vpop.permute.xlu0 %2483
  %v2486 = vsel %vm222, %v2481, %v2484
  %v2487 = vpack.c.bf16 %v2486, %v2486
  %v2489 = vsel %vm319, %v2487, 0
  %2491 = vmatprep.subr.bf16.mxu0 0
  %2492 = vmatpush1.bf16.msra.mxu0 %v1581
  %2493 = vmatprep.subr.bf16.mxu0 0
  %2494 = vmatpush1.bf16.msra.mxu0 %v1582
  %2495 = vmatprep.subr.bf16.mxu0 0
  %2496 = vmatpush1.bf16.msra.mxu0 %v1583
  %2497 = vmatprep.subr.bf16.mxu0 0
  %2498 = vmatpush1.bf16.msra.mxu0 %v1584
  %2499 = vmatprep.subr.bf16.mxu0 0
  %2500 = vmatpush1.bf16.msra.mxu0 0
  %2501 = vmatprep.subr.bf16.mxu0 0
  %2502 = vmatpush1.bf16.msra.mxu0 0
  %2503 = vmatprep.subr.bf16.mxu0 0
  %2504 = vmatpush1.bf16.msra.mxu0 0
  %2505 = vmatprep.subr.bf16.mxu0 0
  %2506 = vmatpush1.bf16.msra.mxu0 0
  %2507 = vmatprep.subr.bf16.mxu0 0
  %2508 = vmatpush1.bf16.msra.mxu0 0
  %2509 = vmatprep.subr.bf16.mxu0 0
  %2510 = vmatpush1.bf16.msra.mxu0 0
  %2511 = vmatprep.subr.bf16.mxu0 0
  %2512 = vmatpush1.bf16.msra.mxu0 0
  %2513 = vmatprep.subr.bf16.mxu0 0
  %2514 = vmatpush1.bf16.msra.mxu0 0
  %2515 = vmatprep.subr.bf16.mxu0 0
  %2516 = vmatpush1.bf16.msra.mxu0 0
  %2517 = vmatprep.subr.bf16.mxu0 0
  %2518 = vmatpush1.bf16.msra.mxu0 0
  %2519 = vmatprep.subr.bf16.mxu0 0
  %2520 = vmatpush1.bf16.msra.mxu0 0
  %2521 = vmatprep.subr.bf16.mxu0 0
  %2522 = vmatpush1.bf16.msra.mxu0 0
  %2523 = vmatprep.mubr.bf16.mxu0 0
  %2524 = vmatmul.mubr.bf16.gmra.mrb[0].mxu0 %v2489
  %v2525 = vpop.f32.mrb[0].mxu0
  %v2526 = vadd.f32 %v81, %v2525
  %v2527 = vpop.f32.mrb[0].mxu0
  %v2528 = vpop.f32.mrb[0].mxu0
  %v2529 = vpop.f32.mrb[0].mxu0
  %2530 = vdwg.mxu0
  %v2531 = vmul.f32 %v2526, 0.5
  %v2532 = vtanh.pop %v2531
  %v2533 = vmul.f32 %v2532, 0.5
  %v2534 = vadd.f32 %v2533, 0.5
  %v2535 = vtanh.pop %v2526
  %v2536 = vmul.f32 %v2534, %v2396
  %2538 = vrot.lane.b32.xlu0 %v2535, 64
  %v2539 = vpop.permute.xlu0 %2538
  %v2541 = vmul.f32 %v2534, %v2539
  %2543 = vrot.lane.b32.xlu0 %v2541, 32
  %v2544 = vpop.permute.xlu0 %2543
  %v2546 = vadd.f32 %v2536, %v2544
  %v2547 = vtanh.pop %v2546
  %2549 = vrot.lane.b32.xlu0 %v2547, 64
  %v2550 = vpop.permute.xlu0 %2549
  %v2552 = vmul.f32 %v2534, %v2550
  %2554 = vrot.lane.b32.xlu0 %v2552, 32
  %v2555 = vpop.permute.xlu0 %2554
  %s2557 = scalar_lea.vmem [#allocation3], 48
  %2558 = vst.msk [vmem:[%s2557] sm:$0xff] %vm222, %v2555
  %v2559 = vpack.c.bf16 %v2478, %v2478
  %2561 = vrot.lane.b32.xlu0 %v2559, 32
  %v2562 = vpop.permute.xlu0 %2561
  %v2564 = vsel %vm222, %v2562, 0
  %2566 = vmatprep.subr.bf16.mxu0 0
  %2567 = vmatpush1.bf16.msra.mxu0 %v1492
  %2568 = vmatprep.subr.bf16.mxu0 0
  %2569 = vmatpush1.bf16.msra.mxu0 %v1493
  %2570 = vmatprep.subr.bf16.mxu0 0
  %2571 = vmatpush1.bf16.msra.mxu0 0
  %2572 = vmatprep.subr.bf16.mxu0 0
  %2573 = vmatpush1.bf16.msra.mxu0 0
  %2574 = vmatprep.subr.bf16.mxu0 0
  %2575 = vmatpush1.bf16.msra.mxu0 0
  %2576 = vmatprep.subr.bf16.mxu0 0
  %2577 = vmatpush1.bf16.msra.mxu0 0
  %2578 = vmatprep.subr.bf16.mxu0 0
  %2579 = vmatpush1.bf16.msra.mxu0 0
  %2580 = vmatprep.subr.bf16.mxu0 0
  %2581 = vmatpush1.bf16.msra.mxu0 0
  %2582 = vmatprep.subr.bf16.mxu0 0
  %2583 = vmatpush1.bf16.msra.mxu0 0
  %2584 = vmatprep.subr.bf16.mxu0 0
  %2585 = vmatpush1.bf16.msra.mxu0 0
  %2586 = vmatprep.subr.bf16.mxu0 0
  %2587 = vmatpush1.bf16.msra.mxu0 0
  %2588 = vmatprep.subr.bf16.mxu0 0
  %2589 = vmatpush1.bf16.msra.mxu0 0
  %2590 = vmatprep.subr.bf16.mxu0 0
  %2591 = vmatpush1.bf16.msra.mxu0 0
  %2592 = vmatprep.subr.bf16.mxu0 0
  %2593 = vmatpush1.bf16.msra.mxu0 0
  %2594 = vmatprep.subr.bf16.mxu0 0
  %2595 = vmatpush1.bf16.msra.mxu0 0
  %2596 = vmatprep.subr.bf16.mxu0 0
  %2597 = vmatpush1.bf16.msra.mxu0 0
  %2598 = vmatprep.mubr.bf16.mxu0 0
  %2599 = vmatmul.mubr.bf16.gmra.mrb[0].mxu0 %v2564
  %v2600 = vpop.f32.mrb[0].mxu0
  %v2601 = vadd.f32 0.0, %v2600
  %v2602 = vpop.f32.mrb[0].mxu0
  %v2603 = vpop.f32.mrb[0].mxu0
  %v2604 = vpop.f32.mrb[0].mxu0
  %2605 = vdwg.mxu0
  %v2606 = vadd.f32 %v1479, %v2601
  %v2607 = vmul.f32 %v2606, 0.5
  %v2608 = vtanh.pop %v2607
  %v2609 = vmul.f32 %v2608, 0.5
  %v2610 = vadd.f32 %v2609, 0.5
  %v2611 = vtanh.pop %v2606
  %v2612 = vmul.f32 %v2610, %v2472
  %2614 = vrot.lane.b32.xlu0 %v2611, 64
  %v2615 = vpop.permute.xlu0 %2614
  %v2617 = vmul.f32 %v2610, %v2615
  %2619 = vrot.lane.b32.xlu0 %v2617, 32
  %v2620 = vpop.permute.xlu0 %2619
  %v2622 = vadd.f32 %v2612, %v2620
  %v2623 = vtanh.pop %v2622
  %2625 = vrot.lane.b32.xlu0 %v2623, 64
  %v2626 = vpop.permute.xlu0 %2625
  %v2628 = vmul.f32 %v2610, %v2626
  %2630 = vrot.lane.b32.xlu0 %v2628, 32
  %v2631 = vpop.permute.xlu0 %2630
  %2633 = vrot.lane.b32.xlu0 %v2552, 64
  %v2634 = vpop.permute.xlu0 %2633
  %v2636 = vsel %vm222, %v2631, %v2634
  %v2637 = vpack.c.bf16 %v2636, %v2636
  %v2639 = vsel %vm319, %v2637, 0
  %2641 = vmatprep.subr.bf16.mxu0 0
  %2642 = vmatpush1.bf16.msra.mxu0 %v1581
  %2643 = vmatprep.subr.bf16.mxu0 0
  %2644 = vmatpush1.bf16.msra.mxu0 %v1582
  %2645 = vmatprep.subr.bf16.mxu0 0
  %2646 = vmatpush1.bf16.msra.mxu0 %v1583
  %2647 = vmatprep.subr.bf16.mxu0 0
  %2648 = vmatpush1.bf16.msra.mxu0 %v1584
  %2649 = vmatprep.subr.bf16.mxu0 0
  %2650 = vmatpush1.bf16.msra.mxu0 0
  %2651 = vmatprep.subr.bf16.mxu0 0
  %2652 = vmatpush1.bf16.msra.mxu0 0
  %2653 = vmatprep.subr.bf16.mxu0 0
  %2654 = vmatpush1.bf16.msra.mxu0 0
  %2655 = vmatprep.subr.bf16.mxu0 0
  %2656 = vmatpush1.bf16.msra.mxu0 0
  %2657 = vmatprep.subr.bf16.mxu0 0
  %2658 = vmatpush1.bf16.msra.mxu0 0
  %2659 = vmatprep.subr.bf16.mxu0 0
  %2660 = vmatpush1.bf16.msra.mxu0 0
  %2661 = vmatprep.subr.bf16.mxu0 0
  %2662 = vmatpush1.bf16.msra.mxu0 0
  %2663 = vmatprep.subr.bf16.mxu0 0
  %2664 = vmatpush1.bf16.msra.mxu0 0
  %2665 = vmatprep.subr.bf16.mxu0 0
  %2666 = vmatpush1.bf16.msra.mxu0 0
  %2667 = vmatprep.subr.bf16.mxu0 0
  %2668 = vmatpush1.bf16.msra.mxu0 0
  %2669 = vmatprep.subr.bf16.mxu0 0
  %2670 = vmatpush1.bf16.msra.mxu0 0
  %2671 = vmatprep.subr.bf16.mxu0 0
  %2672 = vmatpush1.bf16.msra.mxu0 0
  %2673 = vmatprep.mubr.bf16.mxu0 0
  %2674 = vmatmul.mubr.bf16.gmra.mrb[0].mxu0 %v2639
  %v2675 = vpop.f32.mrb[0].mxu0
  %v2676 = vadd.f32 %v81, %v2675
  %v2677 = vpop.f32.mrb[0].mxu0
  %v2678 = vpop.f32.mrb[0].mxu0
  %v2679 = vpop.f32.mrb[0].mxu0
  %2680 = vdwg.mxu0
  %v2681 = vmul.f32 %v2676, 0.5
  %v2682 = vtanh.pop %v2681
  %v2683 = vmul.f32 %v2682, 0.5
  %v2684 = vadd.f32 %v2683, 0.5
  %v2685 = vtanh.pop %v2676
  %v2686 = vmul.f32 %v2684, %v2546
  %2688 = vrot.lane.b32.xlu0 %v2685, 64
  %v2689 = vpop.permute.xlu0 %2688
  %v2691 = vmul.f32 %v2684, %v2689
  %2693 = vrot.lane.b32.xlu0 %v2691, 32
  %v2694 = vpop.permute.xlu0 %2693
  %v2696 = vadd.f32 %v2686, %v2694
  %v2697 = vtanh.pop %v2696
  %2699 = vrot.lane.b32.xlu0 %v2697, 64
  %v2700 = vpop.permute.xlu0 %2699
  %v2702 = vmul.f32 %v2684, %v2700
  %2704 = vrot.lane.b32.xlu0 %v2702, 32
  %v2705 = vpop.permute.xlu0 %2704
  %s2707 = scalar_lea.vmem [#allocation3], 56
  %2708 = vst.msk [vmem:[%s2707] sm:$0xff] %vm222, %v2705
  %v2709 = vld [vmem:[#allocation3] sm:$0xff]
  %v2710 = vld [vmem:[#allocation3 + $0x8] sm:$0xff]
  %v2711 = vld [vmem:[#allocation3 + $0x10] sm:$0xff]
  %v2712 = vld [vmem:[#allocation3 + $0x18] sm:$0xff]
  %v2713 = vld [vmem:[#allocation3 + $0x20] sm:$0xff]
  %v2714 = vld [vmem:[#allocation3 + $0x28] sm:$0xff]
  %v2715 = vld [vmem:[#allocation3 + $0x30] sm:$0xff]
  %v2716 = vld [vmem:[#allocation3 + $0x38] sm:$0xff]
  %v2717 = vpack.c.bf16 %v2710, %v2709
  %v2718 = vpack.c.bf16 %v2712, %v2711
  %v2719 = vpack.c.bf16 %v2714, %v2713
  %v2720 = vpack.c.bf16 %v2716, %v2715
  %v2721 = vld [vmem:[%s11] sm:$0xf]
  %v2722 = vld [vmem:[%s11 + $0x4] sm:$0xf]
  %v2723 = vld [vmem:[%s11 + $0x8] sm:$0xf]
  %v2724 = vld [vmem:[%s11 + $0xc] sm:$0xf]
  %v2725 = vld [vmem:[%s12] sm:$0x1]
  %v2727 = vlaneseq
  %v2728 = vshrl.u32 %v2727, 7
  %v2729 = vsub.s32 0, %v2728
  %v2730 = vrot.slane %v2725, %v2729
  %v2736 = vunpack.c.l.b16 %v2721
  %v2737 = vunpack.c.l.b16 %v2722
  %v2738 = vunpack.c.l.b16 %v2723
  %v2739 = vunpack.c.l.b16 %v2724
  %v2740 = vpack.c.b16 %v2737, %v2736
  %v2741 = vpack.c.b16 %v2739, %v2738
  %v2745 = vsel %vm222, %v2717, 0
  %v2748 = vsel %vm222, %v2718, 0
  %v2751 = vsel %vm222, %v2719, 0
  %v2754 = vsel %vm222, %v2720, 0
  %2756 = vmatprep.subr.bf16.mxu0 0
  %2757 = vmatpush1.bf16.msra.mxu0 %v2740
  %2758 = vmatprep.subr.bf16.mxu0 0
  %2759 = vmatpush1.bf16.msra.mxu0 %v2741
  %2760 = vmatprep.subr.bf16.mxu0 0
  %2761 = vmatpush1.bf16.msra.mxu0 0
  %2762 = vmatprep.subr.bf16.mxu0 0
  %2763 = vmatpush1.bf16.msra.mxu0 0
  %2764 = vmatprep.subr.bf16.mxu0 0
  %2765 = vmatpush1.bf16.msra.mxu0 0
  %2766 = vmatprep.subr.bf16.mxu0 0
  %2767 = vmatpush1.bf16.msra.mxu0 0
  %2768 = vmatprep.subr.bf16.mxu0 0
  %2769 = vmatpush1.bf16.msra.mxu0 0
  %2770 = vmatprep.subr.bf16.mxu0 0
  %2771 = vmatpush1.bf16.msra.mxu0 0
  %2772 = vmatprep.subr.bf16.mxu0 0
  %2773 = vmatpush1.bf16.msra.mxu0 0
  %2774 = vmatprep.subr.bf16.mxu0 0
  %2775 = vmatpush1.bf16.msra.mxu0 0
  %2776 = vmatprep.subr.bf16.mxu0 0
  %2777 = vmatpush1.bf16.msra.mxu0 0
  %2778 = vmatprep.subr.bf16.mxu0 0
  %2779 = vmatpush1.bf16.msra.mxu0 0
  %2780 = vmatprep.subr.bf16.mxu0 0
  %2781 = vmatpush1.bf16.msra.mxu0 0
  %2782 = vmatprep.subr.bf16.mxu0 0
  %2783 = vmatpush1.bf16.msra.mxu0 0
  %2784 = vmatprep.subr.bf16.mxu0 0
  %2785 = vmatpush1.bf16.msra.mxu0 0
  %2786 = vmatprep.subr.bf16.mxu0 0
  %2787 = vmatpush1.bf16.msra.mxu0 0
  %2788 = vmatprep.mubr.bf16.mxu0 0
  %2789 = vmatmul.mubr.bf16.gmra.mrb[0].mxu0 %v2745
  %v2790 = vpop.f32.mrb[0].mxu0
  %v2791 = vadd.f32 %v2730, %v2790
  %v2792 = vpop.f32.mrb[0].mxu0
  %v2793 = vpop.f32.mrb[0].mxu0
  %v2794 = vadd.f32 %v2730, %v2793
  %v2795 = vpop.f32.mrb[0].mxu0
  %2796 = vmatprep.mubr.bf16.mxu0 0
  %2797 = vmatmul.mubr.bf16.gmra.mrb[0].mxu0 %v2748
  %v2798 = vpop.f32.mrb[0].mxu0
  %v2799 = vadd.f32 %v2730, %v2798
  %v2800 = vpop.f32.mrb[0].mxu0
  %v2801 = vpop.f32.mrb[0].mxu0
  %v2802 = vadd.f32 %v2730, %v2801
  %v2803 = vpop.f32.mrb[0].mxu0
  %2804 = vmatprep.mubr.bf16.mxu0 0
  %2805 = vmatmul.mubr.bf16.gmra.mrb[0].mxu0 %v2751
  %v2806 = vpop.f32.mrb[0].mxu0
  %v2807 = vadd.f32 %v2730, %v2806
  %v2808 = vpop.f32.mrb[0].mxu0
  %v2809 = vpop.f32.mrb[0].mxu0
  %v2810 = vadd.f32 %v2730, %v2809
  %v2811 = vpop.f32.mrb[0].mxu0
  %2812 = vmatprep.mubr.bf16.mxu0 0
  %2813 = vmatmul.mubr.bf16.gmra.mrb[0].mxu0 %v2754
  %v2814 = vpop.f32.mrb[0].mxu0
  %v2815 = vadd.f32 %v2730, %v2814
  %v2816 = vpop.f32.mrb[0].mxu0
  %v2817 = vpop.f32.mrb[0].mxu0
  %v2818 = vadd.f32 %v2730, %v2817
  %v2819 = vpop.f32.mrb[0].mxu0
  %2820 = vdwg.mxu0
  %2821 = vst.msk [vmem:[%s13] sm:$0xff] %vm119, %v2791
  %2822 = vst.msk [vmem:[%s13 + $0x8] sm:$0xff] %vm119, %v2794
  %2823 = vst.msk [vmem:[%s13 + $0x10] sm:$0xff] %vm119, %v2799
  %2824 = vst.msk [vmem:[%s13 + $0x18] sm:$0xff] %vm119, %v2802
  %2825 = vst.msk [vmem:[%s13 + $0x20] sm:$0xff] %vm119, %v2807
  %2826 = vst.msk [vmem:[%s13 + $0x28] sm:$0xff] %vm119, %v2810
  %2827 = vst.msk [vmem:[%s13 + $0x30] sm:$0xff] %vm119, %v2815
  %2828 = vst.msk [vmem:[%s13 + $0x38] sm:$0xff] %vm119, %v2818
  // Predicated region
  $region54: #{lstm_autoencoder.1} parent=0 // pred_check
    _
  $region55: #{lstm_autoencoder.1} parent=0 // pred_check_branch
    %2830 = sbr.rel (0) target = $region57
  $region56: #{lstm_autoencoder.1} parent=0 // pred_region
    _
  $region57: #{lstm_autoencoder.1} parent=0 // pred_fallthru
    _
  // Predicated region
  $region58: #{lstm_autoencoder.1} parent=0 // pred_check
    _
  $region59: #{lstm_autoencoder.1} parent=0 // pred_check_branch
    %2832 = sbr.rel (0) target = $region61
  $region60: #{lstm_autoencoder.1} parent=0 // pred_region
    _
  $region61: #{lstm_autoencoder.1} parent=0 // pred_fallthru
    _

</llo_original>
